<compile_context>
chip_gen: v5e
topology: v5e:2x2
jax: 0.10.0
libtpu: 0.0.40
codegen_flags: <defaults>
</compile_context>

<pallas_src>
import functools

import jax
import jax.numpy as jnp
from jax.experimental import pallas as pl
from jax.experimental.pallas import tpu as pltpu

_BN_EPS = 1e-5
_VMEM_LIMIT = 32 * 1024 * 1024  # safe on v5e/v6e/v7x


def _cparams(dims):
    return pltpu.CompilerParams(dimension_semantics=dims,
                                vmem_limit_bytes=_VMEM_LIMIT)


# --------------------------------------------------------------------------
# Fused 3x3 conv (stride 1, pad 1, no bias):
#   optional per-partition BN affine + ReLU on load, in-VMEM im2col,
#   BatchNorm sum / sum-of-squares epilogue.
# --------------------------------------------------------------------------
def _make_conv3x3_kernel(H, W, cins, norm, tn):
    n_parts = len(cins)

    def kernel(*refs):
        # unpack: per partition (x [, scale, shift], w) ; y, sum, ssq ; pads
        idx = 0
        xs, scs, shs, ws = [], [], [], []
        for p in range(n_parts):
            xs.append(refs[idx]); idx += 1
            if norm[p]:
                scs.append(refs[idx]); shs.append(refs[idx + 1]); idx += 2
            else:
                scs.append(None); shs.append(None)
            ws.append(refs[idx]); idx += 1
        y_ref, sum_ref, ssq_ref = refs[idx], refs[idx + 1], refs[idx + 2]
        pads = refs[idx + 3: idx + 3 + n_parts]

        # Stage (optionally BN-normalized + ReLU'd) activations into a
        # zero-padded bf16 VMEM buffer -> im2col never touches HBM.
        for p in range(n_parts):
            x = xs[p][0]                                   # (H, W, Cin_p) f32
            if norm[p]:
                x = jnp.maximum(x * scs[p][...] + shs[p][...], 0.0)
            pads[p][...] = jnp.zeros(pads[p].shape, pads[p].dtype)
            pads[p][1:H + 1, 1:W + 1, :] = x.astype(pads[p].dtype)

        # 9 shifted MXU matmuls, f32 accumulation.
        acc = jnp.zeros((H * W, tn), jnp.float32)
        for p in range(n_parts):
            cin = cins[p]
            for kh in range(3):
                for kw in range(3):
                    patch = pads[p][kh:kh + H, kw:kw + W, :].reshape(H * W, cin)
                    tap = kh * 3 + kw
                    wtap = ws[p][tap * cin:(tap + 1) * cin, :]
                    acc += jnp.dot(patch, wtap,
                                   preferred_element_type=jnp.float32)

        y_ref[0] = acc.reshape(H, W, tn).astype(y_ref.dtype)
        # BatchNorm statistics epilogue (per batch item; reduced in wrapper).
        sum_ref[0] = jnp.sum(acc, axis=0, keepdims=True)
        ssq_ref[0] = jnp.sum(acc * acc, axis=0, keepdims=True)

    return kernel


def conv3x3_bn_stats(parts, w_torch):
    """parts: list of (x_nhwc_f32, scale_or_None, shift_or_None); the partition
    channels concatenate (in order) to the conv input channels.
    Returns (raw conv output, per-channel sum, per-channel sum of squares)."""
    B, H, W, _ = parts[0][0].shape
    cins = tuple(p[0].shape[-1] for p in parts)
    norm = tuple(p[1] is not None for p in parts)
    Cout = w_torch.shape[0]
    tn = Cout if Cout <= 256 else 256          # N tiling for large channel counts
    assert Cout % tn == 0
    n_co = Cout // tn

    args, in_specs = [], []
    off = 0
    for (x, sc, sh), cin in zip(parts, cins):
        args.append(x)
        in_specs.append(pl.BlockSpec((1, H, W, cin), lambda co, b: (b, 0, 0, 0)))
        if sc is not None:
            args.append(sc.reshape(1, cin).astype(jnp.float32))
            args.append(sh.reshape(1, cin).astype(jnp.float32))
            in_specs.append(pl.BlockSpec((1, cin), lambda co, b: (0, 0)))
            in_specs.append(pl.BlockSpec((1, cin), lambda co, b: (0, 0)))
        wp = jnp.transpose(w_torch[:, off:off + cin], (2, 3, 1, 0))
        wp = wp.reshape(9 * cin, Cout).astype(jnp.bfloat16)
        args.append(wp)
        in_specs.append(pl.BlockSpec((9 * cin, tn), lambda co, b: (0, co)))
        off += cin

    out_shape = (jax.ShapeDtypeStruct((B, H, W, Cout), jnp.float32),
                 jax.ShapeDtypeStruct((B, 1, Cout), jnp.float32),
                 jax.ShapeDtypeStruct((B, 1, Cout), jnp.float32))
    out_specs = (pl.BlockSpec((1, H, W, tn), lambda co, b: (b, 0, 0, co)),
                 pl.BlockSpec((1, 1, tn), lambda co, b: (b, 0, co)),
                 pl.BlockSpec((1, 1, tn), lambda co, b: (b, 0, co)))
    scratch = [pltpu.VMEM((H + 2, W + 2, cin), jnp.bfloat16) for cin in cins]

    y, s1, s2 = pl.pallas_call(
        _make_conv3x3_kernel(H, W, cins, norm, tn),
        out_shape=out_shape, grid=(n_co, B),
        in_specs=in_specs, out_specs=out_specs, scratch_shapes=scratch,
        compiler_params=_cparams(("parallel", "parallel")),
    )(*args)
    return y, jnp.sum(s1, axis=(0, 1)), jnp.sum(s2, axis=(0, 1))


def bn_scale_shift(ch_sum, ch_ssq, count, gamma, beta, eps=_BN_EPS):
    """Training-mode BatchNorm folded into a per-channel affine (scale, shift)."""
    mean = ch_sum / count
    var = jnp.maximum(ch_ssq / count - mean * mean, 0.0)   # biased variance
    scale = gamma * jax.lax.rsqrt(var + eps)
    shift = beta - mean * scale
    return scale, shift


# --------------------------------------------------------------------------
# 2x2 / stride-2 max pool fused with the pending BN affine + ReLU.
# --------------------------------------------------------------------------
def _make_pool_kernel(tr, W, C):
    def kernel(x_ref, sc_ref, sh_ref, o_ref):
        x = jnp.maximum(x_ref[0] * sc_ref[...] + sh_ref[...], 0.0)   # (2tr, W, C)
        x = jnp.max(x.reshape(tr, 2, W, C), axis=1)                  # row pairs
        x = jnp.max(x.reshape(tr, W // 2, 2, C), axis=2)             # col pairs
        o_ref[0] = x
    return kernel


def maxpool2x2_bn_relu(x, scale, shift):
    B, H, W, C = x.shape
    Ho, Wo = H // 2, W // 2
    tr = 8 if Ho % 8 == 0 else Ho
    out = pl.pallas_call(
        _make_pool_kernel(tr, W, C),
        out_shape=jax.ShapeDtypeStruct((B, Ho, Wo, C), jnp.float32),
        grid=(B, Ho // tr),
        in_specs=[pl.BlockSpec((1, 2 * tr, W, C), lambda b, i: (b, i, 0, 0)),
                  pl.BlockSpec((1, C), lambda b, i: (0, 0)),
                  pl.BlockSpec((1, C), lambda b, i: (0, 0))],
        out_specs=pl.BlockSpec((1, tr, Wo, C), lambda b, i: (b, i, 0, 0)),
        compiler_params=_cparams(("parallel", "parallel")),
    )(x, scale.reshape(1, C).astype(jnp.float32),
      shift.reshape(1, C).astype(jnp.float32))
    return out


# --------------------------------------------------------------------------
# ConvTranspose2d(k=2, s=2, bias) fused with the pending BN affine + ReLU.
# Output layout (B, H, 2, W, 2*Cout) makes the pixel shuffle a free reshape.
# --------------------------------------------------------------------------
def _make_convT_kernel(H, W, Cin, Cout):
    def kernel(x_ref, sc_ref, sh_ref, w_ref, b_ref, o_ref):
        x = x_ref[0].reshape(H * W, Cin)
        xn = jnp.maximum(x * sc_ref[...] + sh_ref[...], 0.0).astype(jnp.bfloat16)
        y = jnp.dot(xn, w_ref[0], preferred_element_type=jnp.float32) + b_ref[...]
        o_ref[0] = y.reshape(H, 1, W, 2 * Cout)
    return kernel


def conv_transpose2x2_bn_relu(x, scale, shift, w_torch, bias):
    """w_torch: (Cin, Cout, 2, 2), bias: (Cout,); input gets BN affine + ReLU."""
    B, H, W, Cin = x.shape
    Cout = w_torch.shape[1]
    # wm[r, cin, s*Cout + co] = w_torch[cin, co, r, s]
    wm = jnp.transpose(w_torch, (2, 0, 3, 1)).reshape(2, Cin, 2 * Cout)
    wm = wm.astype(jnp.bfloat16)
    b2 = jnp.tile(bias.astype(jnp.float32), 2).reshape(1, 2 * Cout)
    out = pl.pallas_call(
        _make_convT_kernel(H, W, Cin, Cout),
        out_shape=jax.ShapeDtypeStruct((B, H, 2, W, 2 * Cout), jnp.float32),
        grid=(B, 2),
        in_specs=[pl.BlockSpec((1, H, W, Cin), lambda b, r: (b, 0, 0, 0)),
                  pl.BlockSpec((1, Cin), lambda b, r: (0, 0)),
                  pl.BlockSpec((1, Cin), lambda b, r: (0, 0)),
                  pl.BlockSpec((1, Cin, 2 * Cout), lambda b, r: (r, 0, 0)),
                  pl.BlockSpec((1, 2 * Cout), lambda b, r: (0, 0))],
        out_specs=pl.BlockSpec((1, H, 1, W, 2 * Cout),
                               lambda b, r: (b, 0, r, 0, 0)),
        compiler_params=_cparams(("parallel", "parallel")),
    )(x, scale.reshape(1, Cin).astype(jnp.float32),
      shift.reshape(1, Cin).astype(jnp.float32), wm, b2)
    # pixel shuffle: pure reshape, no HBM transpose
    return out.reshape(B, 2 * H, 2 * W, Cout)


# --------------------------------------------------------------------------
# Final 1x1 conv (with bias) fused with the pending BN affine + ReLU.
# --------------------------------------------------------------------------
def _make_final_kernel(H, W, Cin, Cout):
    def kernel(x_ref, sc_ref, sh_ref, w_ref, b_ref, o_ref):
        x = x_ref[0].reshape(H * W, Cin)
        xn = jnp.maximum(x * sc_ref[...] + sh_ref[...], 0.0).astype(jnp.bfloat16)
        y = jnp.dot(xn, w_ref[...], preferred_element_type=jnp.float32) + b_ref[...]
        o_ref[0] = y.reshape(H, W, Cout)
    return kernel


def final_conv1x1_bn_relu(x, scale, shift, w_torch, bias):
    # TODO(synk): Cout=1 output is lane-sparse (masked stores); padding the lane
    # dim to 128 only pays off at much larger output channel counts.
    B, H, W, Cin = x.shape
    Cout = w_torch.shape[0]
    wm = w_torch.reshape(Cout, Cin).T.astype(jnp.bfloat16)
    out = pl.pallas_call(
        _make_final_kernel(H, W, Cin, Cout),
        out_shape=jax.ShapeDtypeStruct((B, H, W, Cout), jnp.float32),
        grid=(B,),
        in_specs=[pl.BlockSpec((1, H, W, Cin), lambda b: (b, 0, 0, 0)),
                  pl.BlockSpec((1, Cin), lambda b: (0, 0)),
                  pl.BlockSpec((1, Cin), lambda b: (0, 0)),
                  pl.BlockSpec((Cin, Cout), lambda b: (0, 0)),
                  pl.BlockSpec((1, Cout), lambda b: (0, 0))],
        out_specs=pl.BlockSpec((1, H, W, Cout), lambda b: (b, 0, 0, 0)),
        compiler_params=_cparams(("parallel",)),
    )(x, scale.reshape(1, Cin).astype(jnp.float32),
      shift.reshape(1, Cin).astype(jnp.float32), wm,
      bias.reshape(1, Cout).astype(jnp.float32))
    return out


# -------------------------------------------------------------------- UNET ---
def unet_forward(x_nchw, params):
    x = jnp.transpose(x_nchw, (0, 2, 3, 1)).astype(jnp.float32)   # NCHW -> NHWC

    def double_conv(parts, p):
        """(conv3x3 -> BN -> ReLU) x 2 with BN stats fused into the conv
        epilogue; returns raw conv2 output plus its pending BN affine."""
        w1, g1, b1, w2, g2, b2 = p
        B_, H_, W_, _ = parts[0][0].shape
        cnt = B_ * H_ * W_
        y1, s1, q1 = conv3x3_bn_stats(parts, w1)
        sc1, sh1 = bn_scale_shift(s1, q1, cnt, g1, b1)
        y2, s2, q2 = conv3x3_bn_stats([(y1, sc1, sh1)], w2)
        sc2, sh2 = bn_scale_shift(s2, q2, cnt, g2, b2)
        return y2, sc2, sh2

    skips = []
    cur = [(x, None, None)]
    for p in params["downs"]:
        y, sc, sh = double_conv(cur, p)
        skips.append((y, sc, sh))                      # deferred BN+ReLU skip
        pooled = maxpool2x2_bn_relu(y, sc, sh)
        cur = [(pooled, None, None)]

    y, sc, sh = double_conv(cur, params["bottleneck"])

    skips = skips[::-1]
    for (sk_y, sk_sc, sk_sh), (wt, bt), dcp in zip(skips, params["ups_t"],
                                                   params["ups_dc"]):
        up = conv_transpose2x2_bn_relu(y, sc, sh, wt, bt)
        # torch.cat((skip, x), dim=1) -> two K-partitions, no HBM concat.
        y, sc, sh = double_conv([(sk_y, sk_sc, sk_sh), (up, None, None)], dcp)

    wf, bf = params["final"]
    out = final_conv1x1_bn_relu(y, sc, sh, wf, bf)
    return jnp.transpose(out, (0, 3, 1, 2))            # NHWC -> NCHW


# --------------------------------------------------------------- init params ---
def init_params(key, in_channels, out_channels, features):
    keys = iter(jax.random.split(key, 64))

    def conv_w(cout, cin, k):
        return jax.random.normal(next(keys), (cout, cin, k, k), jnp.float32) * 0.1

    def dc(cin, cout):
        return (conv_w(cout, cin, 3),
                jnp.ones((cout,), jnp.float32), jnp.zeros((cout,), jnp.float32),
                conv_w(cout, cout, 3),
                jnp.ones((cout,), jnp.float32), jnp.zeros((cout,), jnp.float32))

    params = {"downs": [], "ups_t": [], "ups_dc": []}
    cin = in_channels
    for f in features:
        params["downs"].append(dc(cin, f))
        cin = f
    params["bottleneck"] = dc(features[-1], features[-1] * 2)
    for f in reversed(features):
        wt = jax.random.normal(next(keys), (f * 2, f, 2, 2), jnp.float32) * 0.1
        bt = jax.random.normal(next(keys), (f,), jnp.float32) * 0.1
        params["ups_t"].append((wt, bt))
        params["ups_dc"].append(dc(f * 2, f))
    wf = jax.random.normal(next(keys), (out_channels, features[0], 1, 1),
                           jnp.float32) * 0.1
    bf = jax.random.normal(next(keys), (out_channels,), jnp.float32) * 0.1
    params["final"] = (wf, bf)
    return params


if __name__ == "__main__":
    in_channels, out_channels, features = 3, 1, [8, 16]
    B, H, W = 2, 16, 16

    params = init_params(jax.random.PRNGKey(42), in_channels, out_channels,
                         features)
    x = jax.random.normal(jax.random.PRNGKey(0), (B, in_channels, H, W),
                          jnp.float32)

    out = unet_forward(x, params)
    out = jax.block_until_ready(out)
    assert out.shape == (B, out_channels, H, W), out.shape
    assert bool(jnp.all(jnp.isfinite(out)))
    print("KERNEL_OK")
</pallas_src>

<mosaic_0001>
module attributes {stable_mosaic.version = 11 : i64} {
  func.func @kernel(%arg0: i32, %arg1: i32, %arg2: memref<1x16x16x3xf32, #tpu.memory_space<vmem>>, %arg3: memref<27x8xbf16, #tpu.memory_space<vmem>>, %arg4: memref<1x16x16x8xf32, #tpu.memory_space<vmem>>, %arg5: memref<1x1x8xf32, #tpu.memory_space<vmem>>, %arg6: memref<1x1x8xf32, #tpu.memory_space<vmem>>, %arg7: memref<18x18x3xbf16, #tpu.memory_space<vmem>>) attributes {dimension_semantics = [#tpu.dimension_semantics<parallel>, #tpu.dimension_semantics<parallel>], iteration_bounds = array<i64: 1, 2>, scalar_prefetch = 0 : i64, scratch_operands = 1 : i64, tpu.core_type = #tpu.core_type<tc>, window_params = [{transform_indices = @transform_0, window_bounds = array<i64: 1, 16, 16, 3>}, {transform_indices = @transform_1, window_bounds = array<i64: 27, 8>}, {transform_indices = @transform_2, window_bounds = array<i64: 1, 16, 16, 8>}, {transform_indices = @transform_3, window_bounds = array<i64: 1, 1, 8>}, {transform_indices = @transform_4, window_bounds = array<i64: 1, 1, 8>}]} {
    %c0 = arith.constant 0 : index
    %c0_0 = arith.constant 0 : index
    %c0_1 = arith.constant 0 : index
    %c0_2 = arith.constant 0 : index
    %0 = vector.load %arg2[%c0, %c0_0, %c0_1, %c0_2] : memref<1x16x16x3xf32, #tpu.memory_space<vmem>>, vector<1x16x16x3xf32>
    %1 = vector.shape_cast %0 : vector<1x16x16x3xf32> to vector<16x16x3xf32>
    %cst = arith.constant 0.000000e+00 : bf16
    %2 = vector.broadcast %cst : bf16 to vector<18x18x3xbf16>
    %c0_3 = arith.constant 0 : index
    %c0_4 = arith.constant 0 : index
    %c0_5 = arith.constant 0 : index
    %3 = vector.load %arg7[%c0_3, %c0_4, %c0_5] : memref<18x18x3xbf16, #tpu.memory_space<vmem>>, vector<18x18x3xbf16>
    tpu.vector_store %arg7[%c0_3, %c0_4, %c0_5], %2 {strides = array<i32>} : memref<18x18x3xbf16, #tpu.memory_space<vmem>>, vector<18x18x3xbf16>,
    %4 = arith.truncf %1 : vector<16x16x3xf32> to vector<16x16x3xbf16>
    %c1 = arith.constant 1 : index
    %c1_6 = arith.constant 1 : index
    %c0_7 = arith.constant 0 : index
    %5 = vector.load %arg7[%c1, %c1_6, %c0_7] : memref<18x18x3xbf16, #tpu.memory_space<vmem>>, vector<16x16x3xbf16>
    tpu.vector_store %arg7[%c1, %c1_6, %c0_7], %4 {strides = array<i32>} : memref<18x18x3xbf16, #tpu.memory_space<vmem>>, vector<16x16x3xbf16>,
    %cst_8 = arith.constant 0.000000e+00 : f32
    %6 = vector.broadcast %cst_8 : f32 to vector<256x8xf32>
    %c0_9 = arith.constant 0 : index
    %c0_10 = arith.constant 0 : index
    %c0_11 = arith.constant 0 : index
    %7 = vector.load %arg7[%c0_9, %c0_10, %c0_11] : memref<18x18x3xbf16, #tpu.memory_space<vmem>>, vector<16x16x3xbf16>
    %8 = vector.shape_cast %7 : vector<16x16x3xbf16> to vector<256x3xbf16>
    %c0_12 = arith.constant 0 : index
    %c0_13 = arith.constant 0 : index
    %9 = vector.load %arg3[%c0_12, %c0_13] : memref<27x8xbf16, #tpu.memory_space<vmem>>, vector<3x8xbf16>
    %cst_14 = arith.constant dense<0.000000e+00> : vector<256x8xf32>
    %10 = tpu.matmul %8, %9, %cst_14 {dimension_numbers = #tpu.dot_dimension_numbers<[1], [0], [0], [1], [0, 0, 1, 1], [], []>} : vector<256x3xbf16>, vector<3x8xbf16>, vector<256x8xf32> -> vector<256x8xf32>
    %11 = arith.addf %6, %10 : vector<256x8xf32>
    %c0_15 = arith.constant 0 : index
    %c1_16 = arith.constant 1 : index
    %c0_17 = arith.constant 0 : index
    %12 = vector.load %arg7[%c0_15, %c1_16, %c0_17] : memref<18x18x3xbf16, #tpu.memory_space<vmem>>, vector<16x16x3xbf16>
    %13 = vector.shape_cast %12 : vector<16x16x3xbf16> to vector<256x3xbf16>
    %c3 = arith.constant 3 : index
    %c0_18 = arith.constant 0 : index
    %14 = vector.load %arg3[%c3, %c0_18] : memref<27x8xbf16, #tpu.memory_space<vmem>>, vector<3x8xbf16>
    %cst_19 = arith.constant dense<0.000000e+00> : vector<256x8xf32>
    %15 = tpu.matmul %13, %14, %cst_19 {dimension_numbers = #tpu.dot_dimension_numbers<[1], [0], [0], [1], [0, 0, 1, 1], [], []>} : vector<256x3xbf16>, vector<3x8xbf16>, vector<256x8xf32> -> vector<256x8xf32>
    %16 = arith.addf %11, %15 : vector<256x8xf32>
    %c0_20 = arith.constant 0 : index
    %c2 = arith.constant 2 : index
    %c0_21 = arith.constant 0 : index
    %17 = vector.load %arg7[%c0_20, %c2, %c0_21] : memref<18x18x3xbf16, #tpu.memory_space<vmem>>, vector<16x16x3xbf16>
    %18 = vector.shape_cast %17 : vector<16x16x3xbf16> to vector<256x3xbf16>
    %c6 = arith.constant 6 : index
    %c0_22 = arith.constant 0 : index
    %19 = vector.load %arg3[%c6, %c0_22] : memref<27x8xbf16, #tpu.memory_space<vmem>>, vector<3x8xbf16>
    %cst_23 = arith.constant dense<0.000000e+00> : vector<256x8xf32>
    %20 = tpu.matmul %18, %19, %cst_23 {dimension_numbers = #tpu.dot_dimension_numbers<[1], [0], [0], [1], [0, 0, 1, 1], [], []>} : vector<256x3xbf16>, vector<3x8xbf16>, vector<256x8xf32> -> vector<256x8xf32>
    %21 = arith.addf %16, %20 : vector<256x8xf32>
    %c1_24 = arith.constant 1 : index
    %c0_25 = arith.constant 0 : index
    %c0_26 = arith.constant 0 : index
    %22 = vector.load %arg7[%c1_24, %c0_25, %c0_26] : memref<18x18x3xbf16, #tpu.memory_space<vmem>>, vector<16x16x3xbf16>
    %23 = vector.shape_cast %22 : vector<16x16x3xbf16> to vector<256x3xbf16>
    %c9 = arith.constant 9 : index
    %c0_27 = arith.constant 0 : index
    %24 = vector.load %arg3[%c9, %c0_27] : memref<27x8xbf16, #tpu.memory_space<vmem>>, vector<3x8xbf16>
    %cst_28 = arith.constant dense<0.000000e+00> : vector<256x8xf32>
    %25 = tpu.matmul %23, %24, %cst_28 {dimension_numbers = #tpu.dot_dimension_numbers<[1], [0], [0], [1], [0, 0, 1, 1], [], []>} : vector<256x3xbf16>, vector<3x8xbf16>, vector<256x8xf32> -> vector<256x8xf32>
    %26 = arith.addf %21, %25 : vector<256x8xf32>
    %c1_29 = arith.constant 1 : index
    %c1_30 = arith.constant 1 : index
    %c0_31 = arith.constant 0 : index
    %27 = vector.load %arg7[%c1_29, %c1_30, %c0_31] : memref<18x18x3xbf16, #tpu.memory_space<vmem>>, vector<16x16x3xbf16>
    %28 = vector.shape_cast %27 : vector<16x16x3xbf16> to vector<256x3xbf16>
    %c12 = arith.constant 12 : index
    %c0_32 = arith.constant 0 : index
    %29 = vector.load %arg3[%c12, %c0_32] : memref<27x8xbf16, #tpu.memory_space<vmem>>, vector<3x8xbf16>
    %cst_33 = arith.constant dense<0.000000e+00> : vector<256x8xf32>
    %30 = tpu.matmul %28, %29, %cst_33 {dimension_numbers = #tpu.dot_dimension_numbers<[1], [0], [0], [1], [0, 0, 1, 1], [], []>} : vector<256x3xbf16>, vector<3x8xbf16>, vector<256x8xf32> -> vector<256x8xf32>
    %31 = arith.addf %26, %30 : vector<256x8xf32>
    %c1_34 = arith.constant 1 : index
    %c2_35 = arith.constant 2 : index
    %c0_36 = arith.constant 0 : index
    %32 = vector.load %arg7[%c1_34, %c2_35, %c0_36] : memref<18x18x3xbf16, #tpu.memory_space<vmem>>, vector<16x16x3xbf16>
    %33 = vector.shape_cast %32 : vector<16x16x3xbf16> to vector<256x3xbf16>
    %c15 = arith.constant 15 : index
    %c0_37 = arith.constant 0 : index
    %34 = vector.load %arg3[%c15, %c0_37] : memref<27x8xbf16, #tpu.memory_space<vmem>>, vector<3x8xbf16>
    %cst_38 = arith.constant dense<0.000000e+00> : vector<256x8xf32>
    %35 = tpu.matmul %33, %34, %cst_38 {dimension_numbers = #tpu.dot_dimension_numbers<[1], [0], [0], [1], [0, 0, 1, 1], [], []>} : vector<256x3xbf16>, vector<3x8xbf16>, vector<256x8xf32> -> vector<256x8xf32>
    %36 = arith.addf %31, %35 : vector<256x8xf32>
    %c2_39 = arith.constant 2 : index
    %c0_40 = arith.constant 0 : index
    %c0_41 = arith.constant 0 : index
    %37 = vector.load %arg7[%c2_39, %c0_40, %c0_41] : memref<18x18x3xbf16, #tpu.memory_space<vmem>>, vector<16x16x3xbf16>
    %38 = vector.shape_cast %37 : vector<16x16x3xbf16> to vector<256x3xbf16>
    %c18 = arith.constant 18 : index
    %c0_42 = arith.constant 0 : index
    %39 = vector.load %arg3[%c18, %c0_42] : memref<27x8xbf16, #tpu.memory_space<vmem>>, vector<3x8xbf16>
    %cst_43 = arith.constant dense<0.000000e+00> : vector<256x8xf32>
    %40 = tpu.matmul %38, %39, %cst_43 {dimension_numbers = #tpu.dot_dimension_numbers<[1], [0], [0], [1], [0, 0, 1, 1], [], []>} : vector<256x3xbf16>, vector<3x8xbf16>, vector<256x8xf32> -> vector<256x8xf32>
    %41 = arith.addf %36, %40 : vector<256x8xf32>
    %c2_44 = arith.constant 2 : index
    %c1_45 = arith.constant 1 : index
    %c0_46 = arith.constant 0 : index
    %42 = vector.load %arg7[%c2_44, %c1_45, %c0_46] : memref<18x18x3xbf16, #tpu.memory_space<vmem>>, vector<16x16x3xbf16>
    %43 = vector.shape_cast %42 : vector<16x16x3xbf16> to vector<256x3xbf16>
    %c21 = arith.constant 21 : index
    %c0_47 = arith.constant 0 : index
    %44 = vector.load %arg3[%c21, %c0_47] : memref<27x8xbf16, #tpu.memory_space<vmem>>, vector<3x8xbf16>
    %cst_48 = arith.constant dense<0.000000e+00> : vector<256x8xf32>
    %45 = tpu.matmul %43, %44, %cst_48 {dimension_numbers = #tpu.dot_dimension_numbers<[1], [0], [0], [1], [0, 0, 1, 1], [], []>} : vector<256x3xbf16>, vector<3x8xbf16>, vector<256x8xf32> -> vector<256x8xf32>
    %46 = arith.addf %41, %45 : vector<256x8xf32>
    %c2_49 = arith.constant 2 : index
    %c2_50 = arith.constant 2 : index
    %c0_51 = arith.constant 0 : index
    %47 = vector.load %arg7[%c2_49, %c2_50, %c0_51] : memref<18x18x3xbf16, #tpu.memory_space<vmem>>, vector<16x16x3xbf16>
    %48 = vector.shape_cast %47 : vector<16x16x3xbf16> to vector<256x3xbf16>
    %c24 = arith.constant 24 : index
    %c0_52 = arith.constant 0 : index
    %49 = vector.load %arg3[%c24, %c0_52] : memref<27x8xbf16, #tpu.memory_space<vmem>>, vector<3x8xbf16>
    %cst_53 = arith.constant dense<0.000000e+00> : vector<256x8xf32>
    %50 = tpu.matmul %48, %49, %cst_53 {dimension_numbers = #tpu.dot_dimension_numbers<[1], [0], [0], [1], [0, 0, 1, 1], [], []>} : vector<256x3xbf16>, vector<3x8xbf16>, vector<256x8xf32> -> vector<256x8xf32>
    %51 = arith.addf %46, %50 : vector<256x8xf32>
    %52 = vector.shape_cast %51 : vector<256x8xf32> to vector<16x16x8xf32>
    %c0_54 = arith.constant 0 : index
    %c0_55 = arith.constant 0 : index
    %c0_56 = arith.constant 0 : index
    %c0_57 = arith.constant 0 : index
    %53 = vector.load %arg4[%c0_54, %c0_55, %c0_56, %c0_57] : memref<1x16x16x8xf32, #tpu.memory_space<vmem>>, vector<1x16x16x8xf32>
    %54 = vector.shape_cast %53 : vector<1x16x16x8xf32> to vector<16x16x8xf32>
    %55 = vector.shape_cast %52 : vector<16x16x8xf32> to vector<1x16x16x8xf32>
    tpu.vector_store %arg4[%c0_54, %c0_55, %c0_56, %c0_57], %55 {strides = array<i32>} : memref<1x16x16x8xf32, #tpu.memory_space<vmem>>, vector<1x16x16x8xf32>,
    %cst_58 = arith.constant dense<0.000000e+00> : vector<8xf32>
    %56 = vector.multi_reduction <add>, %51, %cst_58 [0] : vector<256x8xf32> to vector<8xf32>
    %57 = vector.shape_cast %56 : vector<8xf32> to vector<1x8xf32>
    %c0_59 = arith.constant 0 : index
    %c0_60 = arith.constant 0 : index
    %c0_61 = arith.constant 0 : index
    %58 = vector.load %arg5[%c0_59, %c0_60, %c0_61] : memref<1x1x8xf32, #tpu.memory_space<vmem>>, vector<1x1x8xf32>
    %59 = vector.shape_cast %58 : vector<1x1x8xf32> to vector<1x8xf32>
    %60 = vector.shape_cast %57 : vector<1x8xf32> to vector<1x1x8xf32>
    tpu.vector_store %arg5[%c0_59, %c0_60, %c0_61], %60 {strides = array<i32>} : memref<1x1x8xf32, #tpu.memory_space<vmem>>, vector<1x1x8xf32>,
    %61 = arith.mulf %51, %51 : vector<256x8xf32>
    %cst_62 = arith.constant dense<0.000000e+00> : vector<8xf32>
    %62 = vector.multi_reduction <add>, %61, %cst_62 [0] : vector<256x8xf32> to vector<8xf32>
    %63 = vector.shape_cast %62 : vector<8xf32> to vector<1x8xf32>
    %c0_63 = arith.constant 0 : index
    %c0_64 = arith.constant 0 : index
    %c0_65 = arith.constant 0 : index
    %64 = vector.load %arg6[%c0_63, %c0_64, %c0_65] : memref<1x1x8xf32, #tpu.memory_space<vmem>>, vector<1x1x8xf32>
    %65 = vector.shape_cast %64 : vector<1x1x8xf32> to vector<1x8xf32>
    %66 = vector.shape_cast %63 : vector<1x8xf32> to vector<1x1x8xf32>
    tpu.vector_store %arg6[%c0_63, %c0_64, %c0_65], %66 {strides = array<i32>} : memref<1x1x8xf32, #tpu.memory_space<vmem>>, vector<1x1x8xf32>,
    return
  }
  func.func @transform_0(%arg0: i32, %arg1: i32) -> (i32, i32, i32, i32) {
    %c0_i32 = arith.constant 0 : i32
    %c0_i32_0 = arith.constant 0 : i32
    %c0_i32_1 = arith.constant 0 : i32
    %c0_i32_2 = arith.constant 0 : i32
    return %arg1, %c0_i32, %c0_i32_0, %c0_i32_1 : i32, i32, i32, i32
  }
  func.func @transform_1(%arg0: i32, %arg1: i32) -> (i32, i32) {
    %c0_i32 = arith.constant 0 : i32
    %c0_i32_0 = arith.constant 0 : i32
    return %c0_i32, %arg0 : i32, i32
  }
  func.func @transform_2(%arg0: i32, %arg1: i32) -> (i32, i32, i32, i32) {
    %c0_i32 = arith.constant 0 : i32
    %c0_i32_0 = arith.constant 0 : i32
    %c0_i32_1 = arith.constant 0 : i32
    return %arg1, %c0_i32, %c0_i32_0, %arg0 : i32, i32, i32, i32
  }
  func.func @transform_3(%arg0: i32, %arg1: i32) -> (i32, i32, i32) {
    %c0_i32 = arith.constant 0 : i32
    %c0_i32_0 = arith.constant 0 : i32
    return %arg1, %c0_i32, %arg0 : i32, i32, i32
  }
  func.func @transform_4(%arg0: i32, %arg1: i32) -> (i32, i32, i32) {
    %c0_i32 = arith.constant 0 : i32
    %c0_i32_0 = arith.constant 0 : i32
    return %arg1, %c0_i32, %arg0 : i32, i32, i32
  }
}

</mosaic_0001>

<llo_original>
// kernel: tpu_custom_call.1
$region0: #{tpu_custom_call.1}
  #allocation0 [shape = 'u32[]', space=smem, size = 0x4, offset = 0x4, fixed_abs, tag = 'smem constant byte address 0x4 - core index']
  #allocation1 [shape = 'u32[72,128]{1,0:T(1,128)}', space=vmem, size = 0x9000, scoped, tag = 'internal scratch']
  #allocation2 [shape = 'bf16[18,18,3]{2,1,0:T(8,128)(2,1)}', space=vmem, size = 0x1b000, scoped, tag = 'scratch operand']
  %s0 = inlined_call_operand.vmem [shape: f32[2,16,16,3], index: 0, kind: input, shape index: {}]
  %s1 = inlined_call_operand.vmem [shape: bf16[27,8], index: 1, kind: input, shape index: {}]
  %s2 = inlined_call_operand.vmem [shape: f32[2,16,16,8], index: 2, kind: output, shape index: {0}]
  %s3 = inlined_call_operand.hbm [shape: f32[2,1,8], index: 3, kind: output, shape index: {1}]
  %s4 = inlined_call_operand.hbm [shape: f32[2,1,8], index: 4, kind: output, shape index: {2}]
  %5 = xla_tuple %s2, %s3, %s4
  %s6 = sld [smem:[#allocation0]]
  $region57: #{tpu_custom_call.1} parent=0
    _
  %s8 = ssub.s32 1, %s6
  %s9 = scalar_select 0, %s8, %s6
  $region1: #{tpu_custom_call.1} parent=0
    #allocation3 [shape = 'u8[1024]{0}', space=vmem, size = 0x400, scoped, tag = 'output window, operand 1']
    #allocation4 [shape = 's32[2]{0}', space=sflag, size = 0x8, scoped, tag = 'scoped memory for tpu_custom_call.1']
    #allocation5 [shape = 'u8[1024]{0}', space=vmem, size = 0x400, scoped, tag = 'output window, operand 2']
    #allocation6 [shape = 's32[2]{0}', space=sflag, size = 0x8, scoped, tag = 'scoped memory for tpu_custom_call.1']
    %10 = vsyncpa [#allocation4], 0
    %s11 = scalar_lea.sflag [#allocation4], 1
    %12 = vsyncpa %s11, 0
    %13 = vsyncpa [#allocation6], 0
    %s14 = scalar_lea.sflag [#allocation6], 1
    %15 = vsyncpa %s14, 0
    loop: start=0, step=1, limit=4
    $region2: #{tpu_custom_call.1} parent=1 // loop_pre_header
      _
    $region3: #{tpu_custom_call.1} parent=1 // loop_header
      %s17 = sphi 0, %s21
      %p18 = scmp.ge.s32.totalorder %s17, 4
      %s24 = sphi 0, %s36
      %s25 = sphi 0, %s32
      %s26 = sphi 0, %s24
      %s27 = sphi 0, %s25
      %s28 = sphi 0, %s26
      %s29 = sphi 0, %s27
      %s39 = sphi 0, %s41
      %s42 = sphi 0, %s39
      %s43 = sphi 0, %s42
      %s59 = sphi 0, %s43
      %s65 = sphi 0, %s67
      %s68 = sphi 0, %s65
      %s69 = sphi 0, %s68
      %s85 = sphi 0, %s69
      %s93 = sphi 0, %s95
      %s96 = sphi 0, %s93
      %s97 = sphi 0, %s96
      %s113 = sphi 0, %s97
      %s121 = sphi 0, %s123
      %s124 = sphi 0, %s121
      %s125 = sphi 0, %s124
      %s141 = sphi 0, %s125
      %s149 = sphi 0, %s151
      %s152 = sphi 0, %s149
      %s153 = sphi 0, %s152
      %s169 = sphi 0, %s153
    $region4: #{tpu_custom_call.1} parent=1 // loop_header_branch
      %20 = sbr.rel (%p18) target = $region8
    $region5: #{tpu_custom_call.1} parent=1 // loop_body
      %s22 = ssub.s32 %s17, 1
      %s23 = ssub.s32 %s17, 2
      %s30 = sadd.s32 1, %s25
      %p31 = scmp.ge.s32.totalorder %s30, 2
      %s32 = scalar_select %p31, 0, %s30
      %s33 = sadd.s32 1, %s24
      %s34 = scalar_select %p31, %s33, %s24
      %p35 = scmp.ge.s32.totalorder %s34, 1
      %s36 = scalar_select %p35, 0, %s34
      %s37 = ssub.s32 %s25, %s32
      %p38 = scmp.eq.s32.totalorder %s37, 0
      %s40 = sadd.s32 %s39, 1
      %s41 = scalar_select %p38, %s39, %s40
      %p44 = pneg %p38
      %p45 = scmp.eq.s32.totalorder %s17, 1
      %p46 = por %p44, %p45
      %p47 = scmp.ne.s32.totalorder %s39, %s42
      %p48 = scmp.eq.s32.totalorder %s17, 0
      %p49 = por %p47, %p48
      %p50 = scmp.ne.s32.totalorder %s39, %s42
      %p51 = scmp.eq.s32.totalorder %s22, 1
      %p52 = por %p50, %p51
      %p53 = scmp.ne.s32.totalorder %s42, %s43
      %p54 = scmp.eq.s32.totalorder %s22, 0
      %p55 = por %p53, %p54
      %p56 = scmp.ne.s32.totalorder %s42, %s43
      %p57 = scmp.eq.s32.totalorder %s23, 1
      %p58 = por %p56, %p57
      %p60 = scmp.ne.s32.totalorder %s43, %s59
      %p61 = scmp.eq.s32.totalorder %s23, 0
      %p62 = por %p60, %p61
      %s63 = ssub.s32 %s24, %s36
      %p64 = scmp.eq.s32.totalorder %s63, 0
      %s66 = sadd.s32 %s65, 1
      %s67 = scalar_select %p64, %s65, %s66
      %p70 = pneg %p64
      %p71 = scmp.eq.s32.totalorder %s17, 1
      %p72 = por %p70, %p71
      %p73 = scmp.ne.s32.totalorder %s65, %s68
      %p74 = scmp.eq.s32.totalorder %s17, 0
      %p75 = por %p73, %p74
      %p76 = scmp.ne.s32.totalorder %s65, %s68
      %p77 = scmp.eq.s32.totalorder %s22, 1
      %p78 = por %p76, %p77
      %p79 = scmp.ne.s32.totalorder %s68, %s69
      %p80 = scmp.eq.s32.totalorder %s22, 0
      %p81 = por %p79, %p80
      %p82 = scmp.ne.s32.totalorder %s68, %s69
      %p83 = scmp.eq.s32.totalorder %s23, 1
      %p84 = por %p82, %p83
      %p86 = scmp.ne.s32.totalorder %s69, %s85
      %p87 = scmp.eq.s32.totalorder %s23, 0
      %p88 = por %p86, %p87
      %s89 = ssub.s32 %s25, %s32
      %s90 = ssub.s32 %s24, %s36
      %s91 = sor.u32 %s89, %s90
      %p92 = scmp.eq.s32.totalorder %s91, 0
      %s94 = sadd.s32 %s93, 1
      %s95 = scalar_select %p92, %s93, %s94
      %p98 = pneg %p92
      %p99 = scmp.eq.s32.totalorder %s17, 1
      %p100 = por %p98, %p99
      %p101 = scmp.ne.s32.totalorder %s93, %s96
      %p102 = scmp.eq.s32.totalorder %s17, 0
      %p103 = por %p101, %p102
      %p104 = scmp.ne.s32.totalorder %s93, %s96
      %p105 = scmp.eq.s32.totalorder %s22, 1
      %p106 = por %p104, %p105
      %p107 = scmp.ne.s32.totalorder %s96, %s97
      %p108 = scmp.eq.s32.totalorder %s22, 0
      %p109 = por %p107, %p108
      %p110 = scmp.ne.s32.totalorder %s96, %s97
      %p111 = scmp.eq.s32.totalorder %s23, 1
      %p112 = por %p110, %p111
      %p114 = scmp.ne.s32.totalorder %s97, %s113
      %p115 = scmp.eq.s32.totalorder %s23, 0
      %p116 = por %p114, %p115
      %s117 = ssub.s32 %s25, %s32
      %s118 = ssub.s32 %s24, %s36
      %s119 = sor.u32 %s117, %s118
      %p120 = scmp.eq.s32.totalorder %s119, 0
      %s122 = sadd.s32 %s121, 1
      %s123 = scalar_select %p120, %s121, %s122
      %p126 = pneg %p120
      %p127 = scmp.eq.s32.totalorder %s17, 1
      %p128 = por %p126, %p127
      %p129 = scmp.ne.s32.totalorder %s121, %s124
      %p130 = scmp.eq.s32.totalorder %s17, 0
      %p131 = por %p129, %p130
      %p132 = scmp.ne.s32.totalorder %s121, %s124
      %p133 = scmp.eq.s32.totalorder %s22, 1
      %p134 = por %p132, %p133
      %p135 = scmp.ne.s32.totalorder %s124, %s125
      %p136 = scmp.eq.s32.totalorder %s22, 0
      %p137 = por %p135, %p136
      %p138 = scmp.ne.s32.totalorder %s124, %s125
      %p139 = scmp.eq.s32.totalorder %s23, 1
      %p140 = por %p138, %p139
      %p142 = scmp.ne.s32.totalorder %s125, %s141
      %p143 = scmp.eq.s32.totalorder %s23, 0
      %p144 = por %p142, %p143
      %s145 = ssub.s32 %s25, %s32
      %s146 = ssub.s32 %s24, %s36
      %s147 = sor.u32 %s145, %s146
      %p148 = scmp.eq.s32.totalorder %s147, 0
      %s150 = sadd.s32 %s149, 1
      %s151 = scalar_select %p148, %s149, %s150
      %p154 = pneg %p148
      %p155 = scmp.eq.s32.totalorder %s17, 1
      %p156 = por %p154, %p155
      %p157 = scmp.ne.s32.totalorder %s149, %s152
      %p158 = scmp.eq.s32.totalorder %s17, 0
      %p159 = por %p157, %p158
      %p160 = scmp.ne.s32.totalorder %s149, %s152
      %p161 = scmp.eq.s32.totalorder %s22, 1
      %p162 = por %p160, %p161
      %p163 = scmp.ne.s32.totalorder %s152, %s153
      %p164 = scmp.eq.s32.totalorder %s22, 0
      %p165 = por %p163, %p164
      %p166 = scmp.ne.s32.totalorder %s152, %s153
      %p167 = scmp.eq.s32.totalorder %s23, 1
      %p168 = por %p166, %p167
      %p170 = scmp.ne.s32.totalorder %s153, %s169
      %p171 = scmp.eq.s32.totalorder %s23, 0
      %p172 = por %p170, %p171
      %p173 = scmp.le.s32.totalorder 1, %s17
      %p174 = scmp.lt.s32.totalorder %s17, 3
      %p175 = pnand %p173, %p174
      %p176 = pneg %p175
      // Predicated region
      $region9: #{tpu_custom_call.1} parent=5 // pred_check
        _
      $region10: #{tpu_custom_call.1} parent=5 // pred_check_branch
        %178 = sbr.rel (%p175) target = $region12
      $region11: #{tpu_custom_call.1} parent=5 // pred_region
        %s179 = ssub.s32 %s17, 1
        // Predicated region
        $region13: #{tpu_custom_call.1} parent=11 // pred_check
          %p180 = pneg %p81
        $region14: #{tpu_custom_call.1} parent=11 // pred_check_branch
          %182 = sbr.rel (%p180) target = $region16
        $region15: #{tpu_custom_call.1} parent=11 // pred_region
          %p183 = scmp.lt.s32.totalorder %s26, 0
          %s184 = scalar_select %p183, %s26, 0
          %s185 = smul.addr %s184, 4
          %s186 = scalar_lea.vmem %s1, %s185
        $region16: #{tpu_custom_call.1} parent=11 // pred_fallthru
          _
      $region12: #{tpu_custom_call.1} parent=5 // pred_fallthru
        _
      %p187 = scmp.lt.s32.totalorder %s17, 2
      // Predicated region
      $region17: #{tpu_custom_call.1} parent=5 // pred_check
        %p188 = pneg %p187
      $region18: #{tpu_custom_call.1} parent=5 // pred_check_branch
        %190 = sbr.rel (%p188) target = $region20
      $region19: #{tpu_custom_call.1} parent=5 // pred_region
        // Predicated region
        $region21: #{tpu_custom_call.1} parent=19 // pred_check
          %p191 = pneg %p49
        $region22: #{tpu_custom_call.1} parent=19 // pred_check_branch
          %193 = sbr.rel (%p191) target = $region24
        $region23: #{tpu_custom_call.1} parent=19 // pred_region
          %p194 = scmp.lt.s32.totalorder %s25, 1
          %s195 = scalar_select %p194, %s25, 1
          %s196 = smul.addr %s195, 32
          %s197 = smul.addr %s196, 8
          %s198 = scalar_lea.vmem %s0, %s197
        $region24: #{tpu_custom_call.1} parent=19 // pred_fallthru
          _
      $region20: #{tpu_custom_call.1} parent=5 // pred_fallthru
        _
      %p199 = scmp.le.s32.totalorder 1, %s17
      %p200 = scmp.lt.s32.totalorder %s17, 3
      %p201 = pnand %p199, %p200
      %p202 = pneg %p201
      // Predicated region
      $region25: #{tpu_custom_call.1} parent=5 // pred_check
        _
      $region26: #{tpu_custom_call.1} parent=5 // pred_check_branch
        %204 = sbr.rel (%p201) target = $region28
      $region27: #{tpu_custom_call.1} parent=5 // pred_region
        %s205 = ssub.s32 %s17, 1
        %p206 = scmp.lt.s32.totalorder %s27, 1
        %s207 = scalar_select %p206, %s27, 1
        %s208 = smul.addr %s207, 32
        %s209 = smul.addr %s208, 8
        %s210 = scalar_lea.vmem %s0, %s209
        %p211 = pneg %p55
        %p212 = pneg %p52
        %p213 = scmp.lt.s32.totalorder %s26, 0
        %s214 = scalar_select %p213, %s26, 0
        %s215 = smul.addr %s214, 4
        %s216 = scalar_lea.vmem %s1, %s215
        %p217 = pneg %p81
        %p218 = pneg %p78
        %p219 = pneg %p109
        %p220 = pneg %p106
        %p221 = scmp.lt.s32.totalorder %s27, 1
        %s222 = scalar_select %p221, %s27, 1
        %p223 = scmp.lt.s32.totalorder %s26, 0
        %s224 = scalar_select %p223, %s26, 0
        %s225 = smul.addr %s222, 32
        %s226 = sadd.s32 %s224, %s225
        %s227 = smul.addr %s226, 8
        %s228 = scalar_lea.vmem %s2, %s227
        %p229 = pneg %p137
        %p230 = pneg %p134
        %s231 = sand.u32 %s124, 1
        %s232 = scalar_lea.sflag [#allocation4], %s231
        %s233 = sand.u32 %s124, 1
        %s234 = scalar_lea.vmem [#allocation3], %s233
        %p235 = pneg %p165
        %p236 = pneg %p162
        %s237 = sand.u32 %s152, 1
        %s238 = scalar_lea.sflag [#allocation6], %s237
        %s239 = sand.u32 %s152, 1
        %s240 = scalar_lea.vmem [#allocation5], %s239
        %p241 = scmp.lt.s32.totalorder %s27, 1
        %s242 = scalar_select %p241, %s27, 1
        %s243 = smul.addr %s242, 32
        %s244 = smul.addr %s243, 8
        %s245 = scalar_lea.vmem %s0, %s244
        %p246 = scmp.lt.s32.totalorder %s26, 0
        %s247 = scalar_select %p246, %s26, 0
        %s248 = smul.addr %s247, 4
        %s249 = scalar_lea.vmem %s1, %s248
        %p250 = scmp.lt.s32.totalorder %s27, 1
        %s251 = scalar_select %p250, %s27, 1
        %p252 = scmp.lt.s32.totalorder %s26, 0
        %s253 = scalar_select %p252, %s26, 0
        %s254 = smul.addr %s251, 32
        %s255 = sadd.s32 %s253, %s254
        %s256 = smul.addr %s255, 8
        %s257 = scalar_lea.vmem %s2, %s256
        %v259 = vld [vmem:[%s245] sm:$0xff]
        %v260 = vld [vmem:[%s245 + $0x8] sm:$0xff]
        %v261 = vld [vmem:[%s245 + $0x10] sm:$0xff]
        %v262 = vld [vmem:[%s245 + $0x18] sm:$0xff]
        %v263 = vld [vmem:[%s245 + $0x20] sm:$0xff]
        %v264 = vld [vmem:[%s245 + $0x28] sm:$0xff]
        %v265 = vld [vmem:[%s245 + $0x30] sm:$0xff]
        %v266 = vld [vmem:[%s245 + $0x38] sm:$0xff]
        %v267 = vld [vmem:[%s245 + $0x40] sm:$0xff]
        %v268 = vld [vmem:[%s245 + $0x48] sm:$0xff]
        %v269 = vld [vmem:[%s245 + $0x50] sm:$0xff]
        %v270 = vld [vmem:[%s245 + $0x58] sm:$0xff]
        %v271 = vld [vmem:[%s245 + $0x60] sm:$0xff]
        %v272 = vld [vmem:[%s245 + $0x68] sm:$0xff]
        %v273 = vld [vmem:[%s245 + $0x70] sm:$0xff]
        %v274 = vld [vmem:[%s245 + $0x78] sm:$0xff]
        %v275 = vld [vmem:[%s245 + $0x80] sm:$0xff]
        %v276 = vld [vmem:[%s245 + $0x88] sm:$0xff]
        %v277 = vld [vmem:[%s245 + $0x90] sm:$0xff]
        %v278 = vld [vmem:[%s245 + $0x98] sm:$0xff]
        %v279 = vld [vmem:[%s245 + $0xa0] sm:$0xff]
        %v280 = vld [vmem:[%s245 + $0xa8] sm:$0xff]
        %v281 = vld [vmem:[%s245 + $0xb0] sm:$0xff]
        %v282 = vld [vmem:[%s245 + $0xb8] sm:$0xff]
        %v283 = vld [vmem:[%s245 + $0xc0] sm:$0xff]
        %v284 = vld [vmem:[%s245 + $0xc8] sm:$0xff]
        %v285 = vld [vmem:[%s245 + $0xd0] sm:$0xff]
        %v286 = vld [vmem:[%s245 + $0xd8] sm:$0xff]
        %v287 = vld [vmem:[%s245 + $0xe0] sm:$0xff]
        %v288 = vld [vmem:[%s245 + $0xe8] sm:$0xff]
        %v289 = vld [vmem:[%s245 + $0xf0] sm:$0xff]
        %v290 = vld [vmem:[%s245 + $0xf8] sm:$0xff]
        %vm291 = vcmask 19456
        %292 = vst.msk [vmem:[#allocation2] sm:$0xf] %vm291, 0
        %293 = vst.msk [vmem:[#allocation2 + $0x4] sm:$0xf] %vm291, 0
        %vm294 = vcmask 16384
        %295 = vst.msk [vmem:[#allocation2 + $0x8] sm:$0x1] %vm294, 0
        %296 = vst.msk [vmem:[#allocation2 + $0xc] sm:$0xf] %vm291, 0
        %297 = vst.msk [vmem:[#allocation2 + $0x10] sm:$0xf] %vm291, 0
        %298 = vst.msk [vmem:[#allocation2 + $0x14] sm:$0x1] %vm294, 0
        %299 = vst.msk [vmem:[#allocation2 + $0x18] sm:$0xf] %vm291, 0
        %300 = vst.msk [vmem:[#allocation2 + $0x1c] sm:$0xf] %vm291, 0
        %301 = vst.msk [vmem:[#allocation2 + $0x20] sm:$0x1] %vm294, 0
        %302 = vst.msk [vmem:[#allocation2 + $0x24] sm:$0xf] %vm291, 0
        %303 = vst.msk [vmem:[#allocation2 + $0x28] sm:$0xf] %vm291, 0
        %304 = vst.msk [vmem:[#allocation2 + $0x2c] sm:$0x1] %vm294, 0
        %305 = vst.msk [vmem:[#allocation2 + $0x30] sm:$0xf] %vm291, 0
        %306 = vst.msk [vmem:[#allocation2 + $0x34] sm:$0xf] %vm291, 0
        %307 = vst.msk [vmem:[#allocation2 + $0x38] sm:$0x1] %vm294, 0
        %308 = vst.msk [vmem:[#allocation2 + $0x3c] sm:$0xf] %vm291, 0
        %309 = vst.msk [vmem:[#allocation2 + $0x40] sm:$0xf] %vm291, 0
        %310 = vst.msk [vmem:[#allocation2 + $0x44] sm:$0x1] %vm294, 0
        %311 = vst.msk [vmem:[#allocation2 + $0x48] sm:$0xf] %vm291, 0
        %312 = vst.msk [vmem:[#allocation2 + $0x4c] sm:$0xf] %vm291, 0
        %313 = vst.msk [vmem:[#allocation2 + $0x50] sm:$0x1] %vm294, 0
        %314 = vst.msk [vmem:[#allocation2 + $0x54] sm:$0xf] %vm291, 0
        %315 = vst.msk [vmem:[#allocation2 + $0x58] sm:$0xf] %vm291, 0
        %316 = vst.msk [vmem:[#allocation2 + $0x5c] sm:$0x1] %vm294, 0
        %317 = vst.msk [vmem:[#allocation2 + $0x60] sm:$0xf] %vm291, 0
        %318 = vst.msk [vmem:[#allocation2 + $0x64] sm:$0xf] %vm291, 0
        %319 = vst.msk [vmem:[#allocation2 + $0x68] sm:$0x1] %vm294, 0
        %320 = vst.msk [vmem:[#allocation2 + $0x6c] sm:$0xf] %vm291, 0
        %321 = vst.msk [vmem:[#allocation2 + $0x70] sm:$0xf] %vm291, 0
        %322 = vst.msk [vmem:[#allocation2 + $0x74] sm:$0x1] %vm294, 0
        %323 = vst.msk [vmem:[#allocation2 + $0x78] sm:$0xf] %vm291, 0
        %324 = vst.msk [vmem:[#allocation2 + $0x7c] sm:$0xf] %vm291, 0
        %325 = vst.msk [vmem:[#allocation2 + $0x80] sm:$0x1] %vm294, 0
        %326 = vst.msk [vmem:[#allocation2 + $0x84] sm:$0xf] %vm291, 0
        %327 = vst.msk [vmem:[#allocation2 + $0x88] sm:$0xf] %vm291, 0
        %328 = vst.msk [vmem:[#allocation2 + $0x8c] sm:$0x1] %vm294, 0
        %329 = vst.msk [vmem:[#allocation2 + $0x90] sm:$0xf] %vm291, 0
        %330 = vst.msk [vmem:[#allocation2 + $0x94] sm:$0xf] %vm291, 0
        %331 = vst.msk [vmem:[#allocation2 + $0x98] sm:$0x1] %vm294, 0
        %332 = vst.msk [vmem:[#allocation2 + $0x9c] sm:$0xf] %vm291, 0
        %333 = vst.msk [vmem:[#allocation2 + $0xa0] sm:$0xf] %vm291, 0
        %334 = vst.msk [vmem:[#allocation2 + $0xa4] sm:$0x1] %vm294, 0
        %335 = vst.msk [vmem:[#allocation2 + $0xa8] sm:$0xf] %vm291, 0
        %336 = vst.msk [vmem:[#allocation2 + $0xac] sm:$0xf] %vm291, 0
        %337 = vst.msk [vmem:[#allocation2 + $0xb0] sm:$0x1] %vm294, 0
        %338 = vst.msk [vmem:[#allocation2 + $0xb4] sm:$0xf] %vm291, 0
        %339 = vst.msk [vmem:[#allocation2 + $0xb8] sm:$0xf] %vm291, 0
        %340 = vst.msk [vmem:[#allocation2 + $0xbc] sm:$0x1] %vm294, 0
        %341 = vst.msk [vmem:[#allocation2 + $0xc0] sm:$0xf] %vm291, 0
        %342 = vst.msk [vmem:[#allocation2 + $0xc4] sm:$0xf] %vm291, 0
        %343 = vst.msk [vmem:[#allocation2 + $0xc8] sm:$0x1] %vm294, 0
        %344 = vst.msk [vmem:[#allocation2 + $0xcc] sm:$0xf] %vm291, 0
        %345 = vst.msk [vmem:[#allocation2 + $0xd0] sm:$0xf] %vm291, 0
        %346 = vst.msk [vmem:[#allocation2 + $0xd4] sm:$0x1] %vm294, 0
        %v347 = vpack.c.bf16 %v259, %v259
        %v348 = vpack.c.bf16 %v260, %v260
        %v349 = vpack.c.bf16 %v261, %v261
        %v350 = vpack.c.bf16 %v262, %v262
        %v351 = vpack.c.bf16 %v263, %v263
        %v352 = vpack.c.bf16 %v264, %v264
        %v353 = vpack.c.bf16 %v265, %v265
        %v354 = vpack.c.bf16 %v266, %v266
        %v355 = vpack.c.bf16 %v267, %v267
        %v356 = vpack.c.bf16 %v268, %v268
        %v357 = vpack.c.bf16 %v269, %v269
        %v358 = vpack.c.bf16 %v270, %v270
        %v359 = vpack.c.bf16 %v271, %v271
        %v360 = vpack.c.bf16 %v272, %v272
        %v361 = vpack.c.bf16 %v273, %v273
        %v362 = vpack.c.bf16 %v274, %v274
        %v363 = vpack.c.bf16 %v275, %v275
        %v364 = vpack.c.bf16 %v276, %v276
        %v365 = vpack.c.bf16 %v277, %v277
        %v366 = vpack.c.bf16 %v278, %v278
        %v367 = vpack.c.bf16 %v279, %v279
        %v368 = vpack.c.bf16 %v280, %v280
        %v369 = vpack.c.bf16 %v281, %v281
        %v370 = vpack.c.bf16 %v282, %v282
        %v371 = vpack.c.bf16 %v283, %v283
        %v372 = vpack.c.bf16 %v284, %v284
        %v373 = vpack.c.bf16 %v285, %v285
        %v374 = vpack.c.bf16 %v286, %v286
        %v375 = vpack.c.bf16 %v287, %v287
        %v376 = vpack.c.bf16 %v288, %v288
        %v377 = vpack.c.bf16 %v289, %v289
        %v378 = vpack.c.bf16 %v290, %v290
        %vm379 = vsmask.f32 256
        %vm380 = vsmask.f32 4368
        %vm381 = vmor %vm379, %vm380
        %v383 = vshrl.u32 %v347, 16
        %v385 = vrot.slane %v383, 7
        %v386 = vshll.u32 %v347, 16
        %v388 = vor.u32 %v385, %v386
        %v389 = vrot.slane %v385, 4
        %v391 = vshrl.u32 %v348, 16
        %v393 = vrot.slane %v391, 7
        %v394 = vshll.u32 %v348, 16
        %v396 = vor.u32 %v393, %v394
        %v397 = vsel %vm381, %v389, %v396
        %v398 = vrot.slane %v393, 4
        %v400 = vshrl.u32 %v349, 16
        %v402 = vrot.slane %v400, 7
        %v403 = vshll.u32 %v349, 16
        %v405 = vor.u32 %v402, %v403
        %v406 = vrot.slane %v402, 4
        %v408 = vshrl.u32 %v350, 16
        %v410 = vrot.slane %v408, 7
        %v411 = vshll.u32 %v350, 16
        %v413 = vor.u32 %v410, %v411
        %v414 = vsel %vm381, %v406, %v413
        %v415 = vrot.slane %v410, 4
        %v417 = vshrl.u32 %v351, 16
        %v419 = vrot.slane %v417, 7
        %v420 = vshll.u32 %v351, 16
        %v422 = vor.u32 %v419, %v420
        %v423 = vrot.slane %v419, 4
        %v425 = vshrl.u32 %v352, 16
        %v427 = vrot.slane %v425, 7
        %v428 = vshll.u32 %v352, 16
        %v430 = vor.u32 %v427, %v428
        %v431 = vsel %vm381, %v423, %v430
        %v432 = vrot.slane %v427, 4
        %v434 = vshrl.u32 %v353, 16
        %v436 = vrot.slane %v434, 7
        %v437 = vshll.u32 %v353, 16
        %v439 = vor.u32 %v436, %v437
        %v440 = vrot.slane %v436, 4
        %v442 = vshrl.u32 %v354, 16
        %v444 = vrot.slane %v442, 7
        %v445 = vshll.u32 %v354, 16
        %v447 = vor.u32 %v444, %v445
        %v448 = vsel %vm381, %v440, %v447
        %v449 = vrot.slane %v444, 4
        %v451 = vshrl.u32 %v355, 16
        %v453 = vrot.slane %v451, 7
        %v454 = vshll.u32 %v355, 16
        %v456 = vor.u32 %v453, %v454
        %v457 = vrot.slane %v453, 4
        %v459 = vshrl.u32 %v356, 16
        %v461 = vrot.slane %v459, 7
        %v462 = vshll.u32 %v356, 16
        %v464 = vor.u32 %v461, %v462
        %v465 = vsel %vm381, %v457, %v464
        %v466 = vrot.slane %v461, 4
        %v468 = vshrl.u32 %v357, 16
        %v470 = vrot.slane %v468, 7
        %v471 = vshll.u32 %v357, 16
        %v473 = vor.u32 %v470, %v471
        %v474 = vrot.slane %v470, 4
        %v476 = vshrl.u32 %v358, 16
        %v478 = vrot.slane %v476, 7
        %v479 = vshll.u32 %v358, 16
        %v481 = vor.u32 %v478, %v479
        %v482 = vsel %vm381, %v474, %v481
        %v483 = vrot.slane %v478, 4
        %v485 = vshrl.u32 %v359, 16
        %v487 = vrot.slane %v485, 7
        %v488 = vshll.u32 %v359, 16
        %v490 = vor.u32 %v487, %v488
        %v491 = vrot.slane %v487, 4
        %v493 = vshrl.u32 %v360, 16
        %v495 = vrot.slane %v493, 7
        %v496 = vshll.u32 %v360, 16
        %v498 = vor.u32 %v495, %v496
        %v499 = vsel %vm381, %v491, %v498
        %v500 = vrot.slane %v495, 4
        %v502 = vshrl.u32 %v361, 16
        %v504 = vrot.slane %v502, 7
        %v505 = vshll.u32 %v361, 16
        %v507 = vor.u32 %v504, %v505
        %v508 = vrot.slane %v504, 4
        %v510 = vshrl.u32 %v362, 16
        %v512 = vrot.slane %v510, 7
        %v513 = vshll.u32 %v362, 16
        %v515 = vor.u32 %v512, %v513
        %v516 = vsel %vm381, %v508, %v515
        %v517 = vrot.slane %v512, 4
        %v519 = vshrl.u32 %v363, 16
        %v521 = vrot.slane %v519, 7
        %v522 = vshll.u32 %v363, 16
        %v524 = vor.u32 %v521, %v522
        %v525 = vrot.slane %v521, 4
        %v527 = vshrl.u32 %v364, 16
        %v529 = vrot.slane %v527, 7
        %v530 = vshll.u32 %v364, 16
        %v532 = vor.u32 %v529, %v530
        %v533 = vsel %vm381, %v525, %v532
        %v534 = vrot.slane %v529, 4
        %v536 = vshrl.u32 %v365, 16
        %v538 = vrot.slane %v536, 7
        %v539 = vshll.u32 %v365, 16
        %v541 = vor.u32 %v538, %v539
        %v542 = vrot.slane %v538, 4
        %v544 = vshrl.u32 %v366, 16
        %v546 = vrot.slane %v544, 7
        %v547 = vshll.u32 %v366, 16
        %v549 = vor.u32 %v546, %v547
        %v550 = vsel %vm381, %v542, %v549
        %v551 = vrot.slane %v546, 4
        %v553 = vshrl.u32 %v367, 16
        %v555 = vrot.slane %v553, 7
        %v556 = vshll.u32 %v367, 16
        %v558 = vor.u32 %v555, %v556
        %v559 = vrot.slane %v555, 4
        %v561 = vshrl.u32 %v368, 16
        %v563 = vrot.slane %v561, 7
        %v564 = vshll.u32 %v368, 16
        %v566 = vor.u32 %v563, %v564
        %v567 = vsel %vm381, %v559, %v566
        %v568 = vrot.slane %v563, 4
        %v570 = vshrl.u32 %v369, 16
        %v572 = vrot.slane %v570, 7
        %v573 = vshll.u32 %v369, 16
        %v575 = vor.u32 %v572, %v573
        %v576 = vrot.slane %v572, 4
        %v578 = vshrl.u32 %v370, 16
        %v580 = vrot.slane %v578, 7
        %v581 = vshll.u32 %v370, 16
        %v583 = vor.u32 %v580, %v581
        %v584 = vsel %vm381, %v576, %v583
        %v585 = vrot.slane %v580, 4
        %v587 = vshrl.u32 %v371, 16
        %v589 = vrot.slane %v587, 7
        %v590 = vshll.u32 %v371, 16
        %v592 = vor.u32 %v589, %v590
        %v593 = vrot.slane %v589, 4
        %v595 = vshrl.u32 %v372, 16
        %v597 = vrot.slane %v595, 7
        %v598 = vshll.u32 %v372, 16
        %v600 = vor.u32 %v597, %v598
        %v601 = vsel %vm381, %v593, %v600
        %v602 = vrot.slane %v597, 4
        %v604 = vshrl.u32 %v373, 16
        %v606 = vrot.slane %v604, 7
        %v607 = vshll.u32 %v373, 16
        %v609 = vor.u32 %v606, %v607
        %v610 = vrot.slane %v606, 4
        %v612 = vshrl.u32 %v374, 16
        %v614 = vrot.slane %v612, 7
        %v615 = vshll.u32 %v374, 16
        %v617 = vor.u32 %v614, %v615
        %v618 = vsel %vm381, %v610, %v617
        %v619 = vrot.slane %v614, 4
        %v621 = vshrl.u32 %v375, 16
        %v623 = vrot.slane %v621, 7
        %v624 = vshll.u32 %v375, 16
        %v626 = vor.u32 %v623, %v624
        %v627 = vrot.slane %v623, 4
        %v629 = vshrl.u32 %v376, 16
        %v631 = vrot.slane %v629, 7
        %v632 = vshll.u32 %v376, 16
        %v634 = vor.u32 %v631, %v632
        %v635 = vsel %vm381, %v627, %v634
        %v636 = vrot.slane %v631, 4
        %v638 = vshrl.u32 %v377, 16
        %v640 = vrot.slane %v638, 7
        %v641 = vshll.u32 %v377, 16
        %v643 = vor.u32 %v640, %v641
        %v644 = vrot.slane %v640, 4
        %v646 = vshrl.u32 %v378, 16
        %v648 = vrot.slane %v646, 7
        %v649 = vshll.u32 %v378, 16
        %v651 = vor.u32 %v648, %v649
        %v652 = vsel %vm381, %v644, %v651
        %v653 = vrot.slane %v648, 4
        %s702 = scalar_lea.vmem [#allocation2], 12
        %vm703 = vcmask 19456
        %vm704 = vsmask.f32 7938
        %vm705 = vmand %vm703, %vm704
        %v706 = vld [vmem:[%s702] sm:$0xf]
        %v707 = vsel %vm705, %v388, %v706
        %708 = vst [vmem:[%s702] sm:$0xf] %v707
        %709 = vst.msk [vmem:[%s702 + $0x4] sm:$0xf] %vm291, %v397
        %vm710 = vcmask 16384
        %vm711 = vmand %vm710, %vm379
        %v712 = vld [vmem:[%s702 + $0x8] sm:$0x1]
        %v713 = vsel %vm711, %v398, %v712
        %714 = vst [vmem:[%s702 + $0x8] sm:$0x1] %v713
        %v715 = vld [vmem:[%s702 + $0xc] sm:$0xf]
        %v716 = vsel %vm705, %v405, %v715
        %717 = vst [vmem:[%s702 + $0xc] sm:$0xf] %v716
        %718 = vst.msk [vmem:[%s702 + $0x10] sm:$0xf] %vm291, %v414
        %v719 = vld [vmem:[%s702 + $0x14] sm:$0x1]
        %v720 = vsel %vm711, %v415, %v719
        %721 = vst [vmem:[%s702 + $0x14] sm:$0x1] %v720
        %v722 = vld [vmem:[%s702 + $0x18] sm:$0xf]
        %v723 = vsel %vm705, %v422, %v722
        %724 = vst [vmem:[%s702 + $0x18] sm:$0xf] %v723
        %725 = vst.msk [vmem:[%s702 + $0x1c] sm:$0xf] %vm291, %v431
        %v726 = vld [vmem:[%s702 + $0x20] sm:$0x1]
        %v727 = vsel %vm711, %v432, %v726
        %728 = vst [vmem:[%s702 + $0x20] sm:$0x1] %v727
        %v729 = vld [vmem:[%s702 + $0x24] sm:$0xf]
        %v730 = vsel %vm705, %v439, %v729
        %731 = vst [vmem:[%s702 + $0x24] sm:$0xf] %v730
        %732 = vst.msk [vmem:[%s702 + $0x28] sm:$0xf] %vm291, %v448
        %v733 = vld [vmem:[%s702 + $0x2c] sm:$0x1]
        %v734 = vsel %vm711, %v449, %v733
        %735 = vst [vmem:[%s702 + $0x2c] sm:$0x1] %v734
        %v736 = vld [vmem:[%s702 + $0x30] sm:$0xf]
        %v737 = vsel %vm705, %v456, %v736
        %738 = vst [vmem:[%s702 + $0x30] sm:$0xf] %v737
        %739 = vst.msk [vmem:[%s702 + $0x34] sm:$0xf] %vm291, %v465
        %v740 = vld [vmem:[%s702 + $0x38] sm:$0x1]
        %v741 = vsel %vm711, %v466, %v740
        %742 = vst [vmem:[%s702 + $0x38] sm:$0x1] %v741
        %v743 = vld [vmem:[%s702 + $0x3c] sm:$0xf]
        %v744 = vsel %vm705, %v473, %v743
        %745 = vst [vmem:[%s702 + $0x3c] sm:$0xf] %v744
        %746 = vst.msk [vmem:[%s702 + $0x40] sm:$0xf] %vm291, %v482
        %v747 = vld [vmem:[%s702 + $0x44] sm:$0x1]
        %v748 = vsel %vm711, %v483, %v747
        %749 = vst [vmem:[%s702 + $0x44] sm:$0x1] %v748
        %v750 = vld [vmem:[%s702 + $0x48] sm:$0xf]
        %v751 = vsel %vm705, %v490, %v750
        %752 = vst [vmem:[%s702 + $0x48] sm:$0xf] %v751
        %753 = vst.msk [vmem:[%s702 + $0x4c] sm:$0xf] %vm291, %v499
        %v754 = vld [vmem:[%s702 + $0x50] sm:$0x1]
        %v755 = vsel %vm711, %v500, %v754
        %756 = vst [vmem:[%s702 + $0x50] sm:$0x1] %v755
        %v757 = vld [vmem:[%s702 + $0x54] sm:$0xf]
        %v758 = vsel %vm705, %v507, %v757
        %759 = vst [vmem:[%s702 + $0x54] sm:$0xf] %v758
        %760 = vst.msk [vmem:[%s702 + $0x58] sm:$0xf] %vm291, %v516
        %v761 = vld [vmem:[%s702 + $0x5c] sm:$0x1]
        %v762 = vsel %vm711, %v517, %v761
        %763 = vst [vmem:[%s702 + $0x5c] sm:$0x1] %v762
        %v764 = vld [vmem:[%s702 + $0x60] sm:$0xf]
        %v765 = vsel %vm705, %v524, %v764
        %766 = vst [vmem:[%s702 + $0x60] sm:$0xf] %v765
        %767 = vst.msk [vmem:[%s702 + $0x64] sm:$0xf] %vm291, %v533
        %v768 = vld [vmem:[%s702 + $0x68] sm:$0x1]
        %v769 = vsel %vm711, %v534, %v768
        %770 = vst [vmem:[%s702 + $0x68] sm:$0x1] %v769
        %v771 = vld [vmem:[%s702 + $0x6c] sm:$0xf]
        %v772 = vsel %vm705, %v541, %v771
        %773 = vst [vmem:[%s702 + $0x6c] sm:$0xf] %v772
        %774 = vst.msk [vmem:[%s702 + $0x70] sm:$0xf] %vm291, %v550
        %v775 = vld [vmem:[%s702 + $0x74] sm:$0x1]
        %v776 = vsel %vm711, %v551, %v775
        %777 = vst [vmem:[%s702 + $0x74] sm:$0x1] %v776
        %v778 = vld [vmem:[%s702 + $0x78] sm:$0xf]
        %v779 = vsel %vm705, %v558, %v778
        %780 = vst [vmem:[%s702 + $0x78] sm:$0xf] %v779
        %781 = vst.msk [vmem:[%s702 + $0x7c] sm:$0xf] %vm291, %v567
        %v782 = vld [vmem:[%s702 + $0x80] sm:$0x1]
        %v783 = vsel %vm711, %v568, %v782
        %784 = vst [vmem:[%s702 + $0x80] sm:$0x1] %v783
        %v785 = vld [vmem:[%s702 + $0x84] sm:$0xf]
        %v786 = vsel %vm705, %v575, %v785
        %787 = vst [vmem:[%s702 + $0x84] sm:$0xf] %v786
        %788 = vst.msk [vmem:[%s702 + $0x88] sm:$0xf] %vm291, %v584
        %v789 = vld [vmem:[%s702 + $0x8c] sm:$0x1]
        %v790 = vsel %vm711, %v585, %v789
        %791 = vst [vmem:[%s702 + $0x8c] sm:$0x1] %v790
        %v792 = vld [vmem:[%s702 + $0x90] sm:$0xf]
        %v793 = vsel %vm705, %v592, %v792
        %794 = vst [vmem:[%s702 + $0x90] sm:$0xf] %v793
        %795 = vst.msk [vmem:[%s702 + $0x94] sm:$0xf] %vm291, %v601
        %v796 = vld [vmem:[%s702 + $0x98] sm:$0x1]
        %v797 = vsel %vm711, %v602, %v796
        %798 = vst [vmem:[%s702 + $0x98] sm:$0x1] %v797
        %v799 = vld [vmem:[%s702 + $0x9c] sm:$0xf]
        %v800 = vsel %vm705, %v609, %v799
        %801 = vst [vmem:[%s702 + $0x9c] sm:$0xf] %v800
        %802 = vst.msk [vmem:[%s702 + $0xa0] sm:$0xf] %vm291, %v618
        %v803 = vld [vmem:[%s702 + $0xa4] sm:$0x1]
        %v804 = vsel %vm711, %v619, %v803
        %805 = vst [vmem:[%s702 + $0xa4] sm:$0x1] %v804
        %v806 = vld [vmem:[%s702 + $0xa8] sm:$0xf]
        %v807 = vsel %vm705, %v626, %v806
        %808 = vst [vmem:[%s702 + $0xa8] sm:$0xf] %v807
        %809 = vst.msk [vmem:[%s702 + $0xac] sm:$0xf] %vm291, %v635
        %v810 = vld [vmem:[%s702 + $0xb0] sm:$0x1]
        %v811 = vsel %vm711, %v636, %v810
        %812 = vst [vmem:[%s702 + $0xb0] sm:$0x1] %v811
        %v813 = vld [vmem:[%s702 + $0xb4] sm:$0xf]
        %v814 = vsel %vm705, %v643, %v813
        %815 = vst [vmem:[%s702 + $0xb4] sm:$0xf] %v814
        %816 = vst.msk [vmem:[%s702 + $0xb8] sm:$0xf] %vm291, %v652
        %v817 = vld [vmem:[%s702 + $0xbc] sm:$0x1]
        %v818 = vsel %vm711, %v653, %v817
        %819 = vst [vmem:[%s702 + $0xbc] sm:$0x1] %v818
        %v820 = vld [vmem:[#allocation2] sm:$0xf]
        %v821 = vld [vmem:[#allocation2 + $0x4] sm:$0xf]
        %v822 = vld [vmem:[#allocation2 + $0xc] sm:$0xf]
        %v823 = vld [vmem:[#allocation2 + $0x10] sm:$0xf]
        %v824 = vld [vmem:[#allocation2 + $0x18] sm:$0xf]
        %v825 = vld [vmem:[#allocation2 + $0x1c] sm:$0xf]
        %v826 = vld [vmem:[#allocation2 + $0x24] sm:$0xf]
        %v827 = vld [vmem:[#allocation2 + $0x28] sm:$0xf]
        %v828 = vld [vmem:[#allocation2 + $0x30] sm:$0xf]
        %v829 = vld [vmem:[#allocation2 + $0x34] sm:$0xf]
        %v830 = vld [vmem:[#allocation2 + $0x3c] sm:$0xf]
        %v831 = vld [vmem:[#allocation2 + $0x40] sm:$0xf]
        %v832 = vld [vmem:[#allocation2 + $0x48] sm:$0xf]
        %v833 = vld [vmem:[#allocation2 + $0x4c] sm:$0xf]
        %v834 = vld [vmem:[#allocation2 + $0x54] sm:$0xf]
        %v835 = vld [vmem:[#allocation2 + $0x58] sm:$0xf]
        %v836 = vld [vmem:[#allocation2 + $0x60] sm:$0xf]
        %v837 = vld [vmem:[#allocation2 + $0x64] sm:$0xf]
        %v838 = vld [vmem:[#allocation2 + $0x6c] sm:$0xf]
        %v839 = vld [vmem:[#allocation2 + $0x70] sm:$0xf]
        %v840 = vld [vmem:[#allocation2 + $0x78] sm:$0xf]
        %v841 = vld [vmem:[#allocation2 + $0x7c] sm:$0xf]
        %v842 = vld [vmem:[#allocation2 + $0x84] sm:$0xf]
        %v843 = vld [vmem:[#allocation2 + $0x88] sm:$0xf]
        %v844 = vld [vmem:[#allocation2 + $0x90] sm:$0xf]
        %v845 = vld [vmem:[#allocation2 + $0x94] sm:$0xf]
        %v846 = vld [vmem:[#allocation2 + $0x9c] sm:$0xf]
        %v847 = vld [vmem:[#allocation2 + $0xa0] sm:$0xf]
        %v848 = vld [vmem:[#allocation2 + $0xa8] sm:$0xf]
        %v849 = vld [vmem:[#allocation2 + $0xac] sm:$0xf]
        %v850 = vld [vmem:[#allocation2 + $0xb4] sm:$0xf]
        %v851 = vld [vmem:[#allocation2 + $0xb8] sm:$0xf]
        %v852 = vld [vmem:[%s249] sm:$0x3]
        %v853 = vld [vmem:[#allocation2 + $0x8] sm:$0x1]
        %v854 = vld [vmem:[#allocation2 + $0x14] sm:$0x1]
        %v855 = vld [vmem:[#allocation2 + $0x20] sm:$0x1]
        %v856 = vld [vmem:[#allocation2 + $0x2c] sm:$0x1]
        %v857 = vld [vmem:[#allocation2 + $0x38] sm:$0x1]
        %v858 = vld [vmem:[#allocation2 + $0x44] sm:$0x1]
        %v859 = vld [vmem:[#allocation2 + $0x50] sm:$0x1]
        %v860 = vld [vmem:[#allocation2 + $0x5c] sm:$0x1]
        %v861 = vld [vmem:[#allocation2 + $0x68] sm:$0x1]
        %v862 = vld [vmem:[#allocation2 + $0x74] sm:$0x1]
        %v863 = vld [vmem:[#allocation2 + $0x80] sm:$0x1]
        %v864 = vld [vmem:[#allocation2 + $0x8c] sm:$0x1]
        %v865 = vld [vmem:[#allocation2 + $0x98] sm:$0x1]
        %v866 = vld [vmem:[#allocation2 + $0xa4] sm:$0x1]
        %v867 = vld [vmem:[#allocation2 + $0xb0] sm:$0x1]
        %v868 = vld [vmem:[#allocation2 + $0xbc] sm:$0x1]
        %vm869 = vsmask.f32 3328
        %vm870 = vsmask.f32 7440
        %vm871 = vmor %vm869, %vm870
        %v873 = vshrl.u32 %v820, 16
        %v875 = vrot.slane %v873, 4
        %v876 = vshll.u32 %v820, 16
        %v878 = vrot.slane %v876, 5
        %v879 = vor.u32 %v875, %v878
        %v880 = vrot.slane %v879, 4
        %v882 = vshll.u32 %v821, 16
        %v884 = vrot.slane %v882, 5
        %v885 = vsel %vm871, %v880, %v884
        %v886 = vshrl.u32 %v821, 16
        %v888 = vrot.slane %v886, 4
        %v889 = vor.u32 %v888, %v884
        %v890 = vrot.slane %v889, 4
        %v892 = vshll.u32 %v853, 16
        %v894 = vrot.slane %v892, 5
        %v895 = vsel %vm871, %v890, %v894
        %v897 = vshrl.u32 %v822, 16
        %v899 = vrot.slane %v897, 4
        %v900 = vshll.u32 %v822, 16
        %v902 = vrot.slane %v900, 5
        %v903 = vor.u32 %v899, %v902
        %v904 = vrot.slane %v903, 4
        %v906 = vshll.u32 %v823, 16
        %v908 = vrot.slane %v906, 5
        %v909 = vsel %vm871, %v904, %v908
        %v910 = vshrl.u32 %v823, 16
        %v912 = vrot.slane %v910, 4
        %v913 = vor.u32 %v912, %v908
        %v914 = vrot.slane %v913, 4
        %v916 = vshll.u32 %v854, 16
        %v918 = vrot.slane %v916, 5
        %v919 = vsel %vm871, %v914, %v918
        %v921 = vshrl.u32 %v824, 16
        %v923 = vrot.slane %v921, 4
        %v924 = vshll.u32 %v824, 16
        %v926 = vrot.slane %v924, 5
        %v927 = vor.u32 %v923, %v926
        %v928 = vrot.slane %v927, 4
        %v930 = vshll.u32 %v825, 16
        %v932 = vrot.slane %v930, 5
        %v933 = vsel %vm871, %v928, %v932
        %v934 = vshrl.u32 %v825, 16
        %v936 = vrot.slane %v934, 4
        %v937 = vor.u32 %v936, %v932
        %v938 = vrot.slane %v937, 4
        %v940 = vshll.u32 %v855, 16
        %v942 = vrot.slane %v940, 5
        %v943 = vsel %vm871, %v938, %v942
        %v945 = vshrl.u32 %v826, 16
        %v947 = vrot.slane %v945, 4
        %v948 = vshll.u32 %v826, 16
        %v950 = vrot.slane %v948, 5
        %v951 = vor.u32 %v947, %v950
        %v952 = vrot.slane %v951, 4
        %v954 = vshll.u32 %v827, 16
        %v956 = vrot.slane %v954, 5
        %v957 = vsel %vm871, %v952, %v956
        %v958 = vshrl.u32 %v827, 16
        %v960 = vrot.slane %v958, 4
        %v961 = vor.u32 %v960, %v956
        %v962 = vrot.slane %v961, 4
        %v964 = vshll.u32 %v856, 16
        %v966 = vrot.slane %v964, 5
        %v967 = vsel %vm871, %v962, %v966
        %v969 = vshrl.u32 %v828, 16
        %v971 = vrot.slane %v969, 4
        %v972 = vshll.u32 %v828, 16
        %v974 = vrot.slane %v972, 5
        %v975 = vor.u32 %v971, %v974
        %v976 = vrot.slane %v975, 4
        %v978 = vshll.u32 %v829, 16
        %v980 = vrot.slane %v978, 5
        %v981 = vsel %vm871, %v976, %v980
        %v982 = vshrl.u32 %v829, 16
        %v984 = vrot.slane %v982, 4
        %v985 = vor.u32 %v984, %v980
        %v986 = vrot.slane %v985, 4
        %v988 = vshll.u32 %v857, 16
        %v990 = vrot.slane %v988, 5
        %v991 = vsel %vm871, %v986, %v990
        %v993 = vshrl.u32 %v830, 16
        %v995 = vrot.slane %v993, 4
        %v996 = vshll.u32 %v830, 16
        %v998 = vrot.slane %v996, 5
        %v999 = vor.u32 %v995, %v998
        %v1000 = vrot.slane %v999, 4
        %v1002 = vshll.u32 %v831, 16
        %v1004 = vrot.slane %v1002, 5
        %v1005 = vsel %vm871, %v1000, %v1004
        %v1006 = vshrl.u32 %v831, 16
        %v1008 = vrot.slane %v1006, 4
        %v1009 = vor.u32 %v1008, %v1004
        %v1010 = vrot.slane %v1009, 4
        %v1012 = vshll.u32 %v858, 16
        %v1014 = vrot.slane %v1012, 5
        %v1015 = vsel %vm871, %v1010, %v1014
        %v1017 = vshrl.u32 %v832, 16
        %v1019 = vrot.slane %v1017, 4
        %v1020 = vshll.u32 %v832, 16
        %v1022 = vrot.slane %v1020, 5
        %v1023 = vor.u32 %v1019, %v1022
        %v1024 = vrot.slane %v1023, 4
        %v1026 = vshll.u32 %v833, 16
        %v1028 = vrot.slane %v1026, 5
        %v1029 = vsel %vm871, %v1024, %v1028
        %v1030 = vshrl.u32 %v833, 16
        %v1032 = vrot.slane %v1030, 4
        %v1033 = vor.u32 %v1032, %v1028
        %v1034 = vrot.slane %v1033, 4
        %v1036 = vshll.u32 %v859, 16
        %v1038 = vrot.slane %v1036, 5
        %v1039 = vsel %vm871, %v1034, %v1038
        %v1041 = vshrl.u32 %v834, 16
        %v1043 = vrot.slane %v1041, 4
        %v1044 = vshll.u32 %v834, 16
        %v1046 = vrot.slane %v1044, 5
        %v1047 = vor.u32 %v1043, %v1046
        %v1048 = vrot.slane %v1047, 4
        %v1050 = vshll.u32 %v835, 16
        %v1052 = vrot.slane %v1050, 5
        %v1053 = vsel %vm871, %v1048, %v1052
        %v1054 = vshrl.u32 %v835, 16
        %v1056 = vrot.slane %v1054, 4
        %v1057 = vor.u32 %v1056, %v1052
        %v1058 = vrot.slane %v1057, 4
        %v1060 = vshll.u32 %v860, 16
        %v1062 = vrot.slane %v1060, 5
        %v1063 = vsel %vm871, %v1058, %v1062
        %v1065 = vshrl.u32 %v836, 16
        %v1067 = vrot.slane %v1065, 4
        %v1068 = vshll.u32 %v836, 16
        %v1070 = vrot.slane %v1068, 5
        %v1071 = vor.u32 %v1067, %v1070
        %v1072 = vrot.slane %v1071, 4
        %v1074 = vshll.u32 %v837, 16
        %v1076 = vrot.slane %v1074, 5
        %v1077 = vsel %vm871, %v1072, %v1076
        %v1078 = vshrl.u32 %v837, 16
        %v1080 = vrot.slane %v1078, 4
        %v1081 = vor.u32 %v1080, %v1076
        %v1082 = vrot.slane %v1081, 4
        %v1084 = vshll.u32 %v861, 16
        %v1086 = vrot.slane %v1084, 5
        %v1087 = vsel %vm871, %v1082, %v1086
        %v1089 = vshrl.u32 %v838, 16
        %v1091 = vrot.slane %v1089, 4
        %v1092 = vshll.u32 %v838, 16
        %v1094 = vrot.slane %v1092, 5
        %v1095 = vor.u32 %v1091, %v1094
        %v1096 = vrot.slane %v1095, 4
        %v1098 = vshll.u32 %v839, 16
        %v1100 = vrot.slane %v1098, 5
        %v1101 = vsel %vm871, %v1096, %v1100
        %v1102 = vshrl.u32 %v839, 16
        %v1104 = vrot.slane %v1102, 4
        %v1105 = vor.u32 %v1104, %v1100
        %v1106 = vrot.slane %v1105, 4
        %v1108 = vshll.u32 %v862, 16
        %v1110 = vrot.slane %v1108, 5
        %v1111 = vsel %vm871, %v1106, %v1110
        %v1113 = vshrl.u32 %v840, 16
        %v1115 = vrot.slane %v1113, 4
        %v1116 = vshll.u32 %v840, 16
        %v1118 = vrot.slane %v1116, 5
        %v1119 = vor.u32 %v1115, %v1118
        %v1120 = vrot.slane %v1119, 4
        %v1122 = vshll.u32 %v841, 16
        %v1124 = vrot.slane %v1122, 5
        %v1125 = vsel %vm871, %v1120, %v1124
        %v1126 = vshrl.u32 %v841, 16
        %v1128 = vrot.slane %v1126, 4
        %v1129 = vor.u32 %v1128, %v1124
        %v1130 = vrot.slane %v1129, 4
        %v1132 = vshll.u32 %v863, 16
        %v1134 = vrot.slane %v1132, 5
        %v1135 = vsel %vm871, %v1130, %v1134
        %v1137 = vshrl.u32 %v842, 16
        %v1139 = vrot.slane %v1137, 4
        %v1140 = vshll.u32 %v842, 16
        %v1142 = vrot.slane %v1140, 5
        %v1143 = vor.u32 %v1139, %v1142
        %v1144 = vrot.slane %v1143, 4
        %v1146 = vshll.u32 %v843, 16
        %v1148 = vrot.slane %v1146, 5
        %v1149 = vsel %vm871, %v1144, %v1148
        %v1150 = vshrl.u32 %v843, 16
        %v1152 = vrot.slane %v1150, 4
        %v1153 = vor.u32 %v1152, %v1148
        %v1154 = vrot.slane %v1153, 4
        %v1156 = vshll.u32 %v864, 16
        %v1158 = vrot.slane %v1156, 5
        %v1159 = vsel %vm871, %v1154, %v1158
        %v1161 = vshrl.u32 %v844, 16
        %v1163 = vrot.slane %v1161, 4
        %v1164 = vshll.u32 %v844, 16
        %v1166 = vrot.slane %v1164, 5
        %v1167 = vor.u32 %v1163, %v1166
        %v1168 = vrot.slane %v1167, 4
        %v1170 = vshll.u32 %v845, 16
        %v1172 = vrot.slane %v1170, 5
        %v1173 = vsel %vm871, %v1168, %v1172
        %v1174 = vshrl.u32 %v845, 16
        %v1176 = vrot.slane %v1174, 4
        %v1177 = vor.u32 %v1176, %v1172
        %v1178 = vrot.slane %v1177, 4
        %v1180 = vshll.u32 %v865, 16
        %v1182 = vrot.slane %v1180, 5
        %v1183 = vsel %vm871, %v1178, %v1182
        %v1185 = vshrl.u32 %v846, 16
        %v1187 = vrot.slane %v1185, 4
        %v1188 = vshll.u32 %v846, 16
        %v1190 = vrot.slane %v1188, 5
        %v1191 = vor.u32 %v1187, %v1190
        %v1192 = vrot.slane %v1191, 4
        %v1194 = vshll.u32 %v847, 16
        %v1196 = vrot.slane %v1194, 5
        %v1197 = vsel %vm871, %v1192, %v1196
        %v1198 = vshrl.u32 %v847, 16
        %v1200 = vrot.slane %v1198, 4
        %v1201 = vor.u32 %v1200, %v1196
        %v1202 = vrot.slane %v1201, 4
        %v1204 = vshll.u32 %v866, 16
        %v1206 = vrot.slane %v1204, 5
        %v1207 = vsel %vm871, %v1202, %v1206
        %v1209 = vshrl.u32 %v848, 16
        %v1211 = vrot.slane %v1209, 4
        %v1212 = vshll.u32 %v848, 16
        %v1214 = vrot.slane %v1212, 5
        %v1215 = vor.u32 %v1211, %v1214
        %v1216 = vrot.slane %v1215, 4
        %v1218 = vshll.u32 %v849, 16
        %v1220 = vrot.slane %v1218, 5
        %v1221 = vsel %vm871, %v1216, %v1220
        %v1222 = vshrl.u32 %v849, 16
        %v1224 = vrot.slane %v1222, 4
        %v1225 = vor.u32 %v1224, %v1220
        %v1226 = vrot.slane %v1225, 4
        %v1228 = vshll.u32 %v867, 16
        %v1230 = vrot.slane %v1228, 5
        %v1231 = vsel %vm871, %v1226, %v1230
        %v1233 = vshrl.u32 %v850, 16
        %v1235 = vrot.slane %v1233, 4
        %v1236 = vshll.u32 %v850, 16
        %v1238 = vrot.slane %v1236, 5
        %v1239 = vor.u32 %v1235, %v1238
        %v1240 = vrot.slane %v1239, 4
        %v1242 = vshll.u32 %v851, 16
        %v1244 = vrot.slane %v1242, 5
        %v1245 = vsel %vm871, %v1240, %v1244
        %v1246 = vshrl.u32 %v851, 16
        %v1248 = vrot.slane %v1246, 4
        %v1249 = vor.u32 %v1248, %v1244
        %v1250 = vrot.slane %v1249, 4
        %v1252 = vshll.u32 %v868, 16
        %v1254 = vrot.slane %v1252, 5
        %v1255 = vsel %vm871, %v1250, %v1254
        %v1256 = vld [vmem:[%s249] sm:$0x6]
        %v1257 = vunpack.c.l.b16 %v885
        %v1258 = vunpack.c.l.b16 %v895
        %v1259 = vunpack.c.l.b16 %v909
        %v1260 = vunpack.c.l.b16 %v919
        %v1261 = vunpack.c.l.b16 %v933
        %v1262 = vunpack.c.l.b16 %v943
        %v1263 = vunpack.c.l.b16 %v957
        %v1264 = vunpack.c.l.b16 %v967
        %v1265 = vunpack.c.l.b16 %v981
        %v1266 = vunpack.c.l.b16 %v991
        %v1267 = vunpack.c.l.b16 %v1005
        %v1268 = vunpack.c.l.b16 %v1015
        %v1269 = vunpack.c.l.b16 %v1029
        %v1270 = vunpack.c.l.b16 %v1039
        %v1271 = vunpack.c.l.b16 %v1053
        %v1272 = vunpack.c.l.b16 %v1063
        %v1273 = vunpack.c.l.b16 %v1077
        %v1274 = vunpack.c.l.b16 %v1087
        %v1275 = vunpack.c.l.b16 %v1101
        %v1276 = vunpack.c.l.b16 %v1111
        %v1277 = vunpack.c.l.b16 %v1125
        %v1278 = vunpack.c.l.b16 %v1135
        %v1279 = vunpack.c.l.b16 %v1149
        %v1280 = vunpack.c.l.b16 %v1159
        %v1281 = vunpack.c.l.b16 %v1173
        %v1282 = vunpack.c.l.b16 %v1183
        %v1283 = vunpack.c.l.b16 %v1197
        %v1284 = vunpack.c.l.b16 %v1207
        %v1285 = vunpack.c.l.b16 %v1221
        %v1286 = vunpack.c.l.b16 %v1231
        %v1287 = vunpack.c.l.b16 %v1245
        %v1288 = vunpack.c.l.b16 %v1255
        %v1289 = vpack.c.b16 %v1258, %v1257
        %v1290 = vpack.c.b16 %v1260, %v1259
        %v1291 = vpack.c.b16 %v1262, %v1261
        %v1292 = vpack.c.b16 %v1264, %v1263
        %v1293 = vpack.c.b16 %v1266, %v1265
        %v1294 = vpack.c.b16 %v1268, %v1267
        %v1295 = vpack.c.b16 %v1270, %v1269
        %v1296 = vpack.c.b16 %v1272, %v1271
        %v1297 = vpack.c.b16 %v1274, %v1273
        %v1298 = vpack.c.b16 %v1276, %v1275
        %v1299 = vpack.c.b16 %v1278, %v1277
        %v1300 = vpack.c.b16 %v1280, %v1279
        %v1301 = vpack.c.b16 %v1282, %v1281
        %v1302 = vpack.c.b16 %v1284, %v1283
        %v1303 = vpack.c.b16 %v1286, %v1285
        %v1304 = vpack.c.b16 %v1288, %v1287
        %v1306 = vunpack.c.l.b16 %v1256
        %v1307 = vpack.c.b16 %v1306, %v1306
        %v1309 = vshrl.u32 %v1307, 16
        %v1311 = vrot.slane %v1309, 1
        %v1312 = vshll.u32 %v1307, 16
        %v1314 = vrot.slane %v1312, 2
        %v1315 = vor.u32 %v1311, %v1314
        %vm1316 = vcmask 23552
        %v1318 = vsel %vm1316, %v1289, 0
        %v1321 = vsel %vm1316, %v1290, 0
        %v1324 = vsel %vm1316, %v1291, 0
        %v1327 = vsel %vm1316, %v1292, 0
        %v1330 = vsel %vm1316, %v1293, 0
        %v1333 = vsel %vm1316, %v1294, 0
        %v1336 = vsel %vm1316, %v1295, 0
        %v1339 = vsel %vm1316, %v1296, 0
        %v1342 = vsel %vm1316, %v1297, 0
        %v1345 = vsel %vm1316, %v1298, 0
        %v1348 = vsel %vm1316, %v1299, 0
        %v1351 = vsel %vm1316, %v1300, 0
        %v1354 = vsel %vm1316, %v1301, 0
        %v1357 = vsel %vm1316, %v1302, 0
        %v1360 = vsel %vm1316, %v1303, 0
        %v1363 = vsel %vm1316, %v1304, 0
        %vm1365 = vcmask 1040384
        %vm1366 = vcmask 1041408
        %v1367 = vsel %vm1365, 4294967295, 65535
        %v1368 = vsel %vm1366, %v1367, 0
        %v1370 = vand.u32 %v1315, %v1368
        %1372 = vmatpush.bf16.msra.mxu0 0
        %1373 = vmatpush.bf16.msra.mxu0 0
        %1374 = vmatpush.bf16.msra.mxu0 0
        %1375 = vmatpush.bf16.msra.mxu0 0
        %1376 = vmatpush.bf16.msra.mxu0 0
        %1377 = vmatpush.bf16.msra.mxu0 0
        %1378 = vmatpush.bf16.msra.mxu0 0
        %1379 = vmatpush.bf16.msra.mxu0 %v1370
        %1380 = vmatmul.bf16.gmra.mxu0 %v1318
        %v1381 = vpop.f32.mrf.mxu0
        %v1382 = vadd.f32 0.0, %v1381
        %v1383 = vpop.f32.mrf.mxu0
        %v1384 = vadd.f32 0.0, %v1383
        %1385 = vmatmul.bf16.gmra.mxu0 %v1321
        %v1386 = vpop.f32.mrf.mxu0
        %v1387 = vadd.f32 0.0, %v1386
        %v1388 = vpop.f32.mrf.mxu0
        %v1389 = vadd.f32 0.0, %v1388
        %1390 = vmatmul.bf16.gmra.mxu0 %v1324
        %v1391 = vpop.f32.mrf.mxu0
        %v1392 = vadd.f32 0.0, %v1391
        %v1393 = vpop.f32.mrf.mxu0
        %v1394 = vadd.f32 0.0, %v1393
        %1395 = vmatmul.bf16.gmra.mxu0 %v1327
        %v1396 = vpop.f32.mrf.mxu0
        %v1397 = vadd.f32 0.0, %v1396
        %v1398 = vpop.f32.mrf.mxu0
        %v1399 = vadd.f32 0.0, %v1398
        %1400 = vmatmul.bf16.gmra.mxu0 %v1330
        %v1401 = vpop.f32.mrf.mxu0
        %v1402 = vadd.f32 0.0, %v1401
        %v1403 = vpop.f32.mrf.mxu0
        %v1404 = vadd.f32 0.0, %v1403
        %1405 = vmatmul.bf16.gmra.mxu0 %v1333
        %v1406 = vpop.f32.mrf.mxu0
        %v1407 = vadd.f32 0.0, %v1406
        %v1408 = vpop.f32.mrf.mxu0
        %v1409 = vadd.f32 0.0, %v1408
        %1410 = vmatmul.bf16.gmra.mxu0 %v1336
        %v1411 = vpop.f32.mrf.mxu0
        %v1412 = vadd.f32 0.0, %v1411
        %v1413 = vpop.f32.mrf.mxu0
        %v1414 = vadd.f32 0.0, %v1413
        %1415 = vmatmul.bf16.gmra.mxu0 %v1339
        %v1416 = vpop.f32.mrf.mxu0
        %v1417 = vadd.f32 0.0, %v1416
        %v1418 = vpop.f32.mrf.mxu0
        %v1419 = vadd.f32 0.0, %v1418
        %1420 = vmatmul.bf16.gmra.mxu0 %v1342
        %v1421 = vpop.f32.mrf.mxu0
        %v1422 = vadd.f32 0.0, %v1421
        %v1423 = vpop.f32.mrf.mxu0
        %v1424 = vadd.f32 0.0, %v1423
        %1425 = vmatmul.bf16.gmra.mxu0 %v1345
        %v1426 = vpop.f32.mrf.mxu0
        %v1427 = vadd.f32 0.0, %v1426
        %v1428 = vpop.f32.mrf.mxu0
        %v1429 = vadd.f32 0.0, %v1428
        %1430 = vmatmul.bf16.gmra.mxu0 %v1348
        %v1431 = vpop.f32.mrf.mxu0
        %v1432 = vadd.f32 0.0, %v1431
        %v1433 = vpop.f32.mrf.mxu0
        %v1434 = vadd.f32 0.0, %v1433
        %1435 = vmatmul.bf16.gmra.mxu0 %v1351
        %v1436 = vpop.f32.mrf.mxu0
        %v1437 = vadd.f32 0.0, %v1436
        %v1438 = vpop.f32.mrf.mxu0
        %v1439 = vadd.f32 0.0, %v1438
        %1440 = vmatmul.bf16.gmra.mxu0 %v1354
        %v1441 = vpop.f32.mrf.mxu0
        %v1442 = vadd.f32 0.0, %v1441
        %v1443 = vpop.f32.mrf.mxu0
        %v1444 = vadd.f32 0.0, %v1443
        %1445 = vmatmul.bf16.gmra.mxu0 %v1357
        %v1446 = vpop.f32.mrf.mxu0
        %v1447 = vadd.f32 0.0, %v1446
        %v1448 = vpop.f32.mrf.mxu0
        %v1449 = vadd.f32 0.0, %v1448
        %1450 = vmatmul.bf16.gmra.mxu0 %v1360
        %v1451 = vpop.f32.mrf.mxu0
        %v1452 = vadd.f32 0.0, %v1451
        %v1453 = vpop.f32.mrf.mxu0
        %v1454 = vadd.f32 0.0, %v1453
        %1455 = vmatmul.bf16.gmra.mxu0 %v1363
        %v1456 = vpop.f32.mrf.mxu0
        %v1457 = vadd.f32 0.0, %v1456
        %v1458 = vpop.f32.mrf.mxu0
        %v1459 = vadd.f32 0.0, %v1458
        %1460 = vdwg.mxu0
        %v1493 = vunpack.c.l.b16 %v820
        %v1494 = vunpack.c.l.b16 %v821
        %v1495 = vunpack.c.l.b16 %v822
        %v1496 = vunpack.c.l.b16 %v823
        %v1497 = vunpack.c.l.b16 %v824
        %v1498 = vunpack.c.l.b16 %v825
        %v1499 = vunpack.c.l.b16 %v826
        %v1500 = vunpack.c.l.b16 %v827
        %v1501 = vunpack.c.l.b16 %v828
        %v1502 = vunpack.c.l.b16 %v829
        %v1503 = vunpack.c.l.b16 %v830
        %v1504 = vunpack.c.l.b16 %v831
        %v1505 = vunpack.c.l.b16 %v832
        %v1506 = vunpack.c.l.b16 %v833
        %v1507 = vunpack.c.l.b16 %v834
        %v1508 = vunpack.c.l.b16 %v835
        %v1509 = vunpack.c.l.b16 %v836
        %v1510 = vunpack.c.l.b16 %v837
        %v1511 = vunpack.c.l.b16 %v838
        %v1512 = vunpack.c.l.b16 %v839
        %v1513 = vunpack.c.l.b16 %v840
        %v1514 = vunpack.c.l.b16 %v841
        %v1515 = vunpack.c.l.b16 %v842
        %v1516 = vunpack.c.l.b16 %v843
        %v1517 = vunpack.c.l.b16 %v844
        %v1518 = vunpack.c.l.b16 %v845
        %v1519 = vunpack.c.l.b16 %v846
        %v1520 = vunpack.c.l.b16 %v847
        %v1521 = vunpack.c.l.b16 %v848
        %v1522 = vunpack.c.l.b16 %v849
        %v1523 = vunpack.c.l.b16 %v850
        %v1524 = vunpack.c.l.b16 %v851
        %v1525 = vpack.c.b16 %v1494, %v1493
        %v1526 = vpack.c.b16 %v1496, %v1495
        %v1527 = vpack.c.b16 %v1498, %v1497
        %v1528 = vpack.c.b16 %v1500, %v1499
        %v1529 = vpack.c.b16 %v1502, %v1501
        %v1530 = vpack.c.b16 %v1504, %v1503
        %v1531 = vpack.c.b16 %v1506, %v1505
        %v1532 = vpack.c.b16 %v1508, %v1507
        %v1533 = vpack.c.b16 %v1510, %v1509
        %v1534 = vpack.c.b16 %v1512, %v1511
        %v1535 = vpack.c.b16 %v1514, %v1513
        %v1536 = vpack.c.b16 %v1516, %v1515
        %v1537 = vpack.c.b16 %v1518, %v1517
        %v1538 = vpack.c.b16 %v1520, %v1519
        %v1539 = vpack.c.b16 %v1522, %v1521
        %v1540 = vpack.c.b16 %v1524, %v1523
        %v1542 = vsel %vm1316, %v1525, 0
        %v1545 = vsel %vm1316, %v1526, 0
        %v1548 = vsel %vm1316, %v1527, 0
        %v1551 = vsel %vm1316, %v1528, 0
        %v1554 = vsel %vm1316, %v1529, 0
        %v1557 = vsel %vm1316, %v1530, 0
        %v1560 = vsel %vm1316, %v1531, 0
        %v1563 = vsel %vm1316, %v1532, 0
        %v1566 = vsel %vm1316, %v1533, 0
        %v1569 = vsel %vm1316, %v1534, 0
        %v1572 = vsel %vm1316, %v1535, 0
        %v1575 = vsel %vm1316, %v1536, 0
        %v1578 = vsel %vm1316, %v1537, 0
        %v1581 = vsel %vm1316, %v1538, 0
        %v1584 = vsel %vm1316, %v1539, 0
        %v1587 = vsel %vm1316, %v1540, 0
        %v1590 = vand.u32 %v852, %v1368
        %1592 = vmatpush.bf16.msra.mxu0 0
        %1593 = vmatpush.bf16.msra.mxu0 0
        %1594 = vmatpush.bf16.msra.mxu0 0
        %1595 = vmatpush.bf16.msra.mxu0 0
        %1596 = vmatpush.bf16.msra.mxu0 0
        %1597 = vmatpush.bf16.msra.mxu0 0
        %1598 = vmatpush.bf16.msra.mxu0 0
        %1599 = vmatpush.bf16.msra.mxu0 %v1590
        %1600 = vmatmul.bf16.gmra.mxu0 %v1542
        %v1601 = vpop.f32.mrf.mxu0
        %v1602 = vadd.f32 %v1382, %v1601
        %v1603 = vpop.f32.mrf.mxu0
        %v1604 = vadd.f32 %v1384, %v1603
        %1605 = vmatmul.bf16.gmra.mxu0 %v1545
        %v1606 = vpop.f32.mrf.mxu0
        %v1607 = vadd.f32 %v1387, %v1606
        %v1608 = vpop.f32.mrf.mxu0
        %v1609 = vadd.f32 %v1389, %v1608
        %1610 = vmatmul.bf16.gmra.mxu0 %v1548
        %v1611 = vpop.f32.mrf.mxu0
        %v1612 = vadd.f32 %v1392, %v1611
        %v1613 = vpop.f32.mrf.mxu0
        %v1614 = vadd.f32 %v1394, %v1613
        %1615 = vmatmul.bf16.gmra.mxu0 %v1551
        %v1616 = vpop.f32.mrf.mxu0
        %v1617 = vadd.f32 %v1397, %v1616
        %v1618 = vpop.f32.mrf.mxu0
        %v1619 = vadd.f32 %v1399, %v1618
        %1620 = vmatmul.bf16.gmra.mxu0 %v1554
        %v1621 = vpop.f32.mrf.mxu0
        %v1622 = vadd.f32 %v1402, %v1621
        %v1623 = vpop.f32.mrf.mxu0
        %v1624 = vadd.f32 %v1404, %v1623
        %1625 = vmatmul.bf16.gmra.mxu0 %v1557
        %v1626 = vpop.f32.mrf.mxu0
        %v1627 = vadd.f32 %v1407, %v1626
        %v1628 = vpop.f32.mrf.mxu0
        %v1629 = vadd.f32 %v1409, %v1628
        %1630 = vmatmul.bf16.gmra.mxu0 %v1560
        %v1631 = vpop.f32.mrf.mxu0
        %v1632 = vadd.f32 %v1412, %v1631
        %v1633 = vpop.f32.mrf.mxu0
        %v1634 = vadd.f32 %v1414, %v1633
        %1635 = vmatmul.bf16.gmra.mxu0 %v1563
        %v1636 = vpop.f32.mrf.mxu0
        %v1637 = vadd.f32 %v1417, %v1636
        %v1638 = vpop.f32.mrf.mxu0
        %v1639 = vadd.f32 %v1419, %v1638
        %1640 = vmatmul.bf16.gmra.mxu0 %v1566
        %v1641 = vpop.f32.mrf.mxu0
        %v1642 = vadd.f32 %v1422, %v1641
        %v1643 = vpop.f32.mrf.mxu0
        %v1644 = vadd.f32 %v1424, %v1643
        %1645 = vmatmul.bf16.gmra.mxu0 %v1569
        %v1646 = vpop.f32.mrf.mxu0
        %v1647 = vadd.f32 %v1427, %v1646
        %v1648 = vpop.f32.mrf.mxu0
        %v1649 = vadd.f32 %v1429, %v1648
        %1650 = vmatmul.bf16.gmra.mxu0 %v1572
        %v1651 = vpop.f32.mrf.mxu0
        %v1652 = vadd.f32 %v1432, %v1651
        %v1653 = vpop.f32.mrf.mxu0
        %v1654 = vadd.f32 %v1434, %v1653
        %1655 = vmatmul.bf16.gmra.mxu0 %v1575
        %v1656 = vpop.f32.mrf.mxu0
        %v1657 = vadd.f32 %v1437, %v1656
        %v1658 = vpop.f32.mrf.mxu0
        %v1659 = vadd.f32 %v1439, %v1658
        %1660 = vmatmul.bf16.gmra.mxu0 %v1578
        %v1661 = vpop.f32.mrf.mxu0
        %v1662 = vadd.f32 %v1442, %v1661
        %v1663 = vpop.f32.mrf.mxu0
        %v1664 = vadd.f32 %v1444, %v1663
        %1665 = vmatmul.bf16.gmra.mxu0 %v1581
        %v1666 = vpop.f32.mrf.mxu0
        %v1667 = vadd.f32 %v1447, %v1666
        %v1668 = vpop.f32.mrf.mxu0
        %v1669 = vadd.f32 %v1449, %v1668
        %1670 = vmatmul.bf16.gmra.mxu0 %v1584
        %v1671 = vpop.f32.mrf.mxu0
        %v1672 = vadd.f32 %v1452, %v1671
        %v1673 = vpop.f32.mrf.mxu0
        %v1674 = vadd.f32 %v1454, %v1673
        %1675 = vmatmul.bf16.gmra.mxu0 %v1587
        %v1676 = vpop.f32.mrf.mxu0
        %v1677 = vadd.f32 %v1457, %v1676
        %v1678 = vpop.f32.mrf.mxu0
        %v1679 = vadd.f32 %v1459, %v1678
        %1680 = vdwg.mxu0
        %v1681 = vld [vmem:[#allocation2] sm:$0xe]
        %v1682 = vld [vmem:[#allocation2 + $0xc] sm:$0xe]
        %v1683 = vld [vmem:[#allocation2 + $0x18] sm:$0xe]
        %v1684 = vld [vmem:[#allocation2 + $0x24] sm:$0xe]
        %v1685 = vld [vmem:[#allocation2 + $0x30] sm:$0xe]
        %v1686 = vld [vmem:[#allocation2 + $0x3c] sm:$0xe]
        %v1687 = vld [vmem:[#allocation2 + $0x48] sm:$0xe]
        %v1688 = vld [vmem:[#allocation2 + $0x54] sm:$0xe]
        %v1689 = vld [vmem:[#allocation2 + $0x60] sm:$0xe]
        %v1690 = vld [vmem:[#allocation2 + $0x6c] sm:$0xe]
        %v1691 = vld [vmem:[#allocation2 + $0x78] sm:$0xe]
        %v1692 = vld [vmem:[#allocation2 + $0x84] sm:$0xe]
        %v1693 = vld [vmem:[#allocation2 + $0x90] sm:$0xe]
        %v1694 = vld [vmem:[#allocation2 + $0x9c] sm:$0xe]
        %v1695 = vld [vmem:[#allocation2 + $0xa8] sm:$0xe]
        %v1696 = vld [vmem:[#allocation2 + $0xb4] sm:$0xe]
        %vm1729 = vcmask 1042432
        %vm1730 = vcmask 1046532
        %vm1731 = vmor %vm1729, %vm1730
        %v1732 = vrot.slane %v1681, 5
        %v1733 = vrot.slane %v1732, 4
        %v1734 = vrot.slane %v821, 5
        %v1735 = vsel %vm1731, %v1733, %v1734
        %v1736 = vrot.slane %v1734, 4
        %v1737 = vrot.slane %v853, 5
        %v1738 = vsel %vm1731, %v1736, %v1737
        %v1739 = vrot.slane %v1682, 5
        %v1740 = vrot.slane %v1739, 4
        %v1741 = vrot.slane %v823, 5
        %v1742 = vsel %vm1731, %v1740, %v1741
        %v1743 = vrot.slane %v1741, 4
        %v1744 = vrot.slane %v854, 5
        %v1745 = vsel %vm1731, %v1743, %v1744
        %v1746 = vrot.slane %v1683, 5
        %v1747 = vrot.slane %v1746, 4
        %v1748 = vrot.slane %v825, 5
        %v1749 = vsel %vm1731, %v1747, %v1748
        %v1750 = vrot.slane %v1748, 4
        %v1751 = vrot.slane %v855, 5
        %v1752 = vsel %vm1731, %v1750, %v1751
        %v1753 = vrot.slane %v1684, 5
        %v1754 = vrot.slane %v1753, 4
        %v1755 = vrot.slane %v827, 5
        %v1756 = vsel %vm1731, %v1754, %v1755
        %v1757 = vrot.slane %v1755, 4
        %v1758 = vrot.slane %v856, 5
        %v1759 = vsel %vm1731, %v1757, %v1758
        %v1760 = vrot.slane %v1685, 5
        %v1761 = vrot.slane %v1760, 4
        %v1762 = vrot.slane %v829, 5
        %v1763 = vsel %vm1731, %v1761, %v1762
        %v1764 = vrot.slane %v1762, 4
        %v1765 = vrot.slane %v857, 5
        %v1766 = vsel %vm1731, %v1764, %v1765
        %v1767 = vrot.slane %v1686, 5
        %v1768 = vrot.slane %v1767, 4
        %v1769 = vrot.slane %v831, 5
        %v1770 = vsel %vm1731, %v1768, %v1769
        %v1771 = vrot.slane %v1769, 4
        %v1772 = vrot.slane %v858, 5
        %v1773 = vsel %vm1731, %v1771, %v1772
        %v1774 = vrot.slane %v1687, 5
        %v1775 = vrot.slane %v1774, 4
        %v1776 = vrot.slane %v833, 5
        %v1777 = vsel %vm1731, %v1775, %v1776
        %v1778 = vrot.slane %v1776, 4
        %v1779 = vrot.slane %v859, 5
        %v1780 = vsel %vm1731, %v1778, %v1779
        %v1781 = vrot.slane %v1688, 5
        %v1782 = vrot.slane %v1781, 4
        %v1783 = vrot.slane %v835, 5
        %v1784 = vsel %vm1731, %v1782, %v1783
        %v1785 = vrot.slane %v1783, 4
        %v1786 = vrot.slane %v860, 5
        %v1787 = vsel %vm1731, %v1785, %v1786
        %v1788 = vrot.slane %v1689, 5
        %v1789 = vrot.slane %v1788, 4
        %v1790 = vrot.slane %v837, 5
        %v1791 = vsel %vm1731, %v1789, %v1790
        %v1792 = vrot.slane %v1790, 4
        %v1793 = vrot.slane %v861, 5
        %v1794 = vsel %vm1731, %v1792, %v1793
        %v1795 = vrot.slane %v1690, 5
        %v1796 = vrot.slane %v1795, 4
        %v1797 = vrot.slane %v839, 5
        %v1798 = vsel %vm1731, %v1796, %v1797
        %v1799 = vrot.slane %v1797, 4
        %v1800 = vrot.slane %v862, 5
        %v1801 = vsel %vm1731, %v1799, %v1800
        %v1802 = vrot.slane %v1691, 5
        %v1803 = vrot.slane %v1802, 4
        %v1804 = vrot.slane %v841, 5
        %v1805 = vsel %vm1731, %v1803, %v1804
        %v1806 = vrot.slane %v1804, 4
        %v1807 = vrot.slane %v863, 5
        %v1808 = vsel %vm1731, %v1806, %v1807
        %v1809 = vrot.slane %v1692, 5
        %v1810 = vrot.slane %v1809, 4
        %v1811 = vrot.slane %v843, 5
        %v1812 = vsel %vm1731, %v1810, %v1811
        %v1813 = vrot.slane %v1811, 4
        %v1814 = vrot.slane %v864, 5
        %v1815 = vsel %vm1731, %v1813, %v1814
        %v1816 = vrot.slane %v1693, 5
        %v1817 = vrot.slane %v1816, 4
        %v1818 = vrot.slane %v845, 5
        %v1819 = vsel %vm1731, %v1817, %v1818
        %v1820 = vrot.slane %v1818, 4
        %v1821 = vrot.slane %v865, 5
        %v1822 = vsel %vm1731, %v1820, %v1821
        %v1823 = vrot.slane %v1694, 5
        %v1824 = vrot.slane %v1823, 4
        %v1825 = vrot.slane %v847, 5
        %v1826 = vsel %vm1731, %v1824, %v1825
        %v1827 = vrot.slane %v1825, 4
        %v1828 = vrot.slane %v866, 5
        %v1829 = vsel %vm1731, %v1827, %v1828
        %v1830 = vrot.slane %v1695, 5
        %v1831 = vrot.slane %v1830, 4
        %v1832 = vrot.slane %v849, 5
        %v1833 = vsel %vm1731, %v1831, %v1832
        %v1834 = vrot.slane %v1832, 4
        %v1835 = vrot.slane %v867, 5
        %v1836 = vsel %vm1731, %v1834, %v1835
        %v1837 = vrot.slane %v1696, 5
        %v1838 = vrot.slane %v1837, 4
        %v1839 = vrot.slane %v851, 5
        %v1840 = vsel %vm1731, %v1838, %v1839
        %v1841 = vrot.slane %v1839, 4
        %v1842 = vrot.slane %v868, 5
        %v1843 = vsel %vm1731, %v1841, %v1842
        %v1844 = vld [vmem:[%s249] sm:$0x8]
        %v1845 = vld [vmem:[%s249 + $0x4] sm:$0x1]
        %v1846 = vunpack.c.l.b16 %v1735
        %v1847 = vunpack.c.l.b16 %v1738
        %v1848 = vunpack.c.l.b16 %v1742
        %v1849 = vunpack.c.l.b16 %v1745
        %v1850 = vunpack.c.l.b16 %v1749
        %v1851 = vunpack.c.l.b16 %v1752
        %v1852 = vunpack.c.l.b16 %v1756
        %v1853 = vunpack.c.l.b16 %v1759
        %v1854 = vunpack.c.l.b16 %v1763
        %v1855 = vunpack.c.l.b16 %v1766
        %v1856 = vunpack.c.l.b16 %v1770
        %v1857 = vunpack.c.l.b16 %v1773
        %v1858 = vunpack.c.l.b16 %v1777
        %v1859 = vunpack.c.l.b16 %v1780
        %v1860 = vunpack.c.l.b16 %v1784
        %v1861 = vunpack.c.l.b16 %v1787
        %v1862 = vunpack.c.l.b16 %v1791
        %v1863 = vunpack.c.l.b16 %v1794
        %v1864 = vunpack.c.l.b16 %v1798
        %v1865 = vunpack.c.l.b16 %v1801
        %v1866 = vunpack.c.l.b16 %v1805
        %v1867 = vunpack.c.l.b16 %v1808
        %v1868 = vunpack.c.l.b16 %v1812
        %v1869 = vunpack.c.l.b16 %v1815
        %v1870 = vunpack.c.l.b16 %v1819
        %v1871 = vunpack.c.l.b16 %v1822
        %v1872 = vunpack.c.l.b16 %v1826
        %v1873 = vunpack.c.l.b16 %v1829
        %v1874 = vunpack.c.l.b16 %v1833
        %v1875 = vunpack.c.l.b16 %v1836
        %v1876 = vunpack.c.l.b16 %v1840
        %v1877 = vunpack.c.l.b16 %v1843
        %v1878 = vpack.c.b16 %v1847, %v1846
        %v1879 = vpack.c.b16 %v1849, %v1848
        %v1880 = vpack.c.b16 %v1851, %v1850
        %v1881 = vpack.c.b16 %v1853, %v1852
        %v1882 = vpack.c.b16 %v1855, %v1854
        %v1883 = vpack.c.b16 %v1857, %v1856
        %v1884 = vpack.c.b16 %v1859, %v1858
        %v1885 = vpack.c.b16 %v1861, %v1860
        %v1886 = vpack.c.b16 %v1863, %v1862
        %v1887 = vpack.c.b16 %v1865, %v1864
        %v1888 = vpack.c.b16 %v1867, %v1866
        %v1889 = vpack.c.b16 %v1869, %v1868
        %v1890 = vpack.c.b16 %v1871, %v1870
        %v1891 = vpack.c.b16 %v1873, %v1872
        %v1892 = vpack.c.b16 %v1875, %v1874
        %v1893 = vpack.c.b16 %v1877, %v1876
        %v1896 = vunpack.c.l.b16 %v1844
        %v1897 = vunpack.c.l.b16 %v1845
        %v1898 = vpack.c.b16 %v1897, %v1896
        %v1899 = vrot.slane %v1898, 3
        %v1901 = vsel %vm1316, %v1878, 0
        %v1904 = vsel %vm1316, %v1879, 0
        %v1907 = vsel %vm1316, %v1880, 0
        %v1910 = vsel %vm1316, %v1881, 0
        %v1913 = vsel %vm1316, %v1882, 0
        %v1916 = vsel %vm1316, %v1883, 0
        %v1919 = vsel %vm1316, %v1884, 0
        %v1922 = vsel %vm1316, %v1885, 0
        %v1925 = vsel %vm1316, %v1886, 0
        %v1928 = vsel %vm1316, %v1887, 0
        %v1931 = vsel %vm1316, %v1888, 0
        %v1934 = vsel %vm1316, %v1889, 0
        %v1937 = vsel %vm1316, %v1890, 0
        %v1940 = vsel %vm1316, %v1891, 0
        %v1943 = vsel %vm1316, %v1892, 0
        %v1946 = vsel %vm1316, %v1893, 0
        %v1949 = vand.u32 %v1899, %v1368
        %1951 = vmatpush.bf16.msra.mxu0 0
        %1952 = vmatpush.bf16.msra.mxu0 0
        %1953 = vmatpush.bf16.msra.mxu0 0
        %1954 = vmatpush.bf16.msra.mxu0 0
        %1955 = vmatpush.bf16.msra.mxu0 0
        %1956 = vmatpush.bf16.msra.mxu0 0
        %1957 = vmatpush.bf16.msra.mxu0 0
        %1958 = vmatpush.bf16.msra.mxu0 %v1949
        %1959 = vmatmul.bf16.gmra.mxu0 %v1901
        %v1960 = vpop.f32.mrf.mxu0
        %v1961 = vadd.f32 0.0, %v1960
        %v1962 = vpop.f32.mrf.mxu0
        %v1963 = vadd.f32 0.0, %v1962
        %1964 = vmatmul.bf16.gmra.mxu0 %v1904
        %v1965 = vpop.f32.mrf.mxu0
        %v1966 = vadd.f32 0.0, %v1965
        %v1967 = vpop.f32.mrf.mxu0
        %v1968 = vadd.f32 0.0, %v1967
        %1969 = vmatmul.bf16.gmra.mxu0 %v1907
        %v1970 = vpop.f32.mrf.mxu0
        %v1971 = vadd.f32 0.0, %v1970
        %v1972 = vpop.f32.mrf.mxu0
        %v1973 = vadd.f32 0.0, %v1972
        %1974 = vmatmul.bf16.gmra.mxu0 %v1910
        %v1975 = vpop.f32.mrf.mxu0
        %v1976 = vadd.f32 0.0, %v1975
        %v1977 = vpop.f32.mrf.mxu0
        %v1978 = vadd.f32 0.0, %v1977
        %1979 = vmatmul.bf16.gmra.mxu0 %v1913
        %v1980 = vpop.f32.mrf.mxu0
        %v1981 = vadd.f32 0.0, %v1980
        %v1982 = vpop.f32.mrf.mxu0
        %v1983 = vadd.f32 0.0, %v1982
        %1984 = vmatmul.bf16.gmra.mxu0 %v1916
        %v1985 = vpop.f32.mrf.mxu0
        %v1986 = vadd.f32 0.0, %v1985
        %v1987 = vpop.f32.mrf.mxu0
        %v1988 = vadd.f32 0.0, %v1987
        %1989 = vmatmul.bf16.gmra.mxu0 %v1919
        %v1990 = vpop.f32.mrf.mxu0
        %v1991 = vadd.f32 0.0, %v1990
        %v1992 = vpop.f32.mrf.mxu0
        %v1993 = vadd.f32 0.0, %v1992
        %1994 = vmatmul.bf16.gmra.mxu0 %v1922
        %v1995 = vpop.f32.mrf.mxu0
        %v1996 = vadd.f32 0.0, %v1995
        %v1997 = vpop.f32.mrf.mxu0
        %v1998 = vadd.f32 0.0, %v1997
        %1999 = vmatmul.bf16.gmra.mxu0 %v1925
        %v2000 = vpop.f32.mrf.mxu0
        %v2001 = vadd.f32 0.0, %v2000
        %v2002 = vpop.f32.mrf.mxu0
        %v2003 = vadd.f32 0.0, %v2002
        %2004 = vmatmul.bf16.gmra.mxu0 %v1928
        %v2005 = vpop.f32.mrf.mxu0
        %v2006 = vadd.f32 0.0, %v2005
        %v2007 = vpop.f32.mrf.mxu0
        %v2008 = vadd.f32 0.0, %v2007
        %2009 = vmatmul.bf16.gmra.mxu0 %v1931
        %v2010 = vpop.f32.mrf.mxu0
        %v2011 = vadd.f32 0.0, %v2010
        %v2012 = vpop.f32.mrf.mxu0
        %v2013 = vadd.f32 0.0, %v2012
        %2014 = vmatmul.bf16.gmra.mxu0 %v1934
        %v2015 = vpop.f32.mrf.mxu0
        %v2016 = vadd.f32 0.0, %v2015
        %v2017 = vpop.f32.mrf.mxu0
        %v2018 = vadd.f32 0.0, %v2017
        %2019 = vmatmul.bf16.gmra.mxu0 %v1937
        %v2020 = vpop.f32.mrf.mxu0
        %v2021 = vadd.f32 0.0, %v2020
        %v2022 = vpop.f32.mrf.mxu0
        %v2023 = vadd.f32 0.0, %v2022
        %2024 = vmatmul.bf16.gmra.mxu0 %v1940
        %v2025 = vpop.f32.mrf.mxu0
        %v2026 = vadd.f32 0.0, %v2025
        %v2027 = vpop.f32.mrf.mxu0
        %v2028 = vadd.f32 0.0, %v2027
        %2029 = vmatmul.bf16.gmra.mxu0 %v1943
        %v2030 = vpop.f32.mrf.mxu0
        %v2031 = vadd.f32 0.0, %v2030
        %v2032 = vpop.f32.mrf.mxu0
        %v2033 = vadd.f32 0.0, %v2032
        %2034 = vmatmul.bf16.gmra.mxu0 %v1946
        %v2035 = vpop.f32.mrf.mxu0
        %v2036 = vadd.f32 0.0, %v2035
        %v2037 = vpop.f32.mrf.mxu0
        %v2038 = vadd.f32 0.0, %v2037
        %2039 = vdwg.mxu0
        %v2040 = vadd.f32 %v1602, %v1961
        %v2041 = vadd.f32 %v1604, %v1963
        %v2042 = vadd.f32 %v1607, %v1966
        %v2043 = vadd.f32 %v1609, %v1968
        %v2044 = vadd.f32 %v1612, %v1971
        %v2045 = vadd.f32 %v1614, %v1973
        %v2046 = vadd.f32 %v1617, %v1976
        %v2047 = vadd.f32 %v1619, %v1978
        %v2048 = vadd.f32 %v1622, %v1981
        %v2049 = vadd.f32 %v1624, %v1983
        %v2050 = vadd.f32 %v1627, %v1986
        %v2051 = vadd.f32 %v1629, %v1988
        %v2052 = vadd.f32 %v1632, %v1991
        %v2053 = vadd.f32 %v1634, %v1993
        %v2054 = vadd.f32 %v1637, %v1996
        %v2055 = vadd.f32 %v1639, %v1998
        %v2056 = vadd.f32 %v1642, %v2001
        %v2057 = vadd.f32 %v1644, %v2003
        %v2058 = vadd.f32 %v1647, %v2006
        %v2059 = vadd.f32 %v1649, %v2008
        %v2060 = vadd.f32 %v1652, %v2011
        %v2061 = vadd.f32 %v1654, %v2013
        %v2062 = vadd.f32 %v1657, %v2016
        %v2063 = vadd.f32 %v1659, %v2018
        %v2064 = vadd.f32 %v1662, %v2021
        %v2065 = vadd.f32 %v1664, %v2023
        %v2066 = vadd.f32 %v1667, %v2026
        %v2067 = vadd.f32 %v1669, %v2028
        %v2068 = vadd.f32 %v1672, %v2031
        %v2069 = vadd.f32 %v1674, %v2033
        %v2070 = vadd.f32 %v1677, %v2036
        %v2071 = vadd.f32 %v1679, %v2038
        %v2072 = vld [vmem:[%s702] sm:$0xf]
        %v2073 = vld [vmem:[%s702 + $0x4] sm:$0xf]
        %v2074 = vld [vmem:[%s702 + $0xc] sm:$0xf]
        %v2075 = vld [vmem:[%s702 + $0x10] sm:$0xf]
        %v2076 = vld [vmem:[%s702 + $0x18] sm:$0xf]
        %v2077 = vld [vmem:[%s702 + $0x1c] sm:$0xf]
        %v2078 = vld [vmem:[%s702 + $0x24] sm:$0xf]
        %v2079 = vld [vmem:[%s702 + $0x28] sm:$0xf]
        %v2080 = vld [vmem:[%s702 + $0x30] sm:$0xf]
        %v2081 = vld [vmem:[%s702 + $0x34] sm:$0xf]
        %v2082 = vld [vmem:[%s702 + $0x3c] sm:$0xf]
        %v2083 = vld [vmem:[%s702 + $0x40] sm:$0xf]
        %v2084 = vld [vmem:[%s702 + $0x48] sm:$0xf]
        %v2085 = vld [vmem:[%s702 + $0x4c] sm:$0xf]
        %v2086 = vld [vmem:[%s702 + $0x54] sm:$0xf]
        %v2087 = vld [vmem:[%s702 + $0x58] sm:$0xf]
        %v2088 = vld [vmem:[%s702 + $0x60] sm:$0xf]
        %v2089 = vld [vmem:[%s702 + $0x64] sm:$0xf]
        %v2090 = vld [vmem:[%s702 + $0x6c] sm:$0xf]
        %v2091 = vld [vmem:[%s702 + $0x70] sm:$0xf]
        %v2092 = vld [vmem:[%s702 + $0x78] sm:$0xf]
        %v2093 = vld [vmem:[%s702 + $0x7c] sm:$0xf]
        %v2094 = vld [vmem:[%s702 + $0x84] sm:$0xf]
        %v2095 = vld [vmem:[%s702 + $0x88] sm:$0xf]
        %v2096 = vld [vmem:[%s702 + $0x90] sm:$0xf]
        %v2097 = vld [vmem:[%s702 + $0x94] sm:$0xf]
        %v2098 = vld [vmem:[%s702 + $0x9c] sm:$0xf]
        %v2099 = vld [vmem:[%s702 + $0xa0] sm:$0xf]
        %v2100 = vld [vmem:[%s702 + $0xa8] sm:$0xf]
        %v2101 = vld [vmem:[%s702 + $0xac] sm:$0xf]
        %v2102 = vld [vmem:[%s702 + $0xb4] sm:$0xf]
        %v2103 = vld [vmem:[%s702 + $0xb8] sm:$0xf]
        %v2104 = vld [vmem:[%s249 + $0x4] sm:$0x3]
        %v2137 = vunpack.c.l.b16 %v2072
        %v2138 = vunpack.c.l.b16 %v2073
        %v2139 = vunpack.c.l.b16 %v2074
        %v2140 = vunpack.c.l.b16 %v2075
        %v2141 = vunpack.c.l.b16 %v2076
        %v2142 = vunpack.c.l.b16 %v2077
        %v2143 = vunpack.c.l.b16 %v2078
        %v2144 = vunpack.c.l.b16 %v2079
        %v2145 = vunpack.c.l.b16 %v2080
        %v2146 = vunpack.c.l.b16 %v2081
        %v2147 = vunpack.c.l.b16 %v2082
        %v2148 = vunpack.c.l.b16 %v2083
        %v2149 = vunpack.c.l.b16 %v2084
        %v2150 = vunpack.c.l.b16 %v2085
        %v2151 = vunpack.c.l.b16 %v2086
        %v2152 = vunpack.c.l.b16 %v2087
        %v2153 = vunpack.c.l.b16 %v2088
        %v2154 = vunpack.c.l.b16 %v2089
        %v2155 = vunpack.c.l.b16 %v2090
        %v2156 = vunpack.c.l.b16 %v2091
        %v2157 = vunpack.c.l.b16 %v2092
        %v2158 = vunpack.c.l.b16 %v2093
        %v2159 = vunpack.c.l.b16 %v2094
        %v2160 = vunpack.c.l.b16 %v2095
        %v2161 = vunpack.c.l.b16 %v2096
        %v2162 = vunpack.c.l.b16 %v2097
        %v2163 = vunpack.c.l.b16 %v2098
        %v2164 = vunpack.c.l.b16 %v2099
        %v2165 = vunpack.c.l.b16 %v2100
        %v2166 = vunpack.c.l.b16 %v2101
        %v2167 = vunpack.c.l.b16 %v2102
        %v2168 = vunpack.c.l.b16 %v2103
        %v2169 = vpack.c.b16 %v2138, %v2137
        %v2170 = vpack.c.b16 %v2140, %v2139
        %v2171 = vpack.c.b16 %v2142, %v2141
        %v2172 = vpack.c.b16 %v2144, %v2143
        %v2173 = vpack.c.b16 %v2146, %v2145
        %v2174 = vpack.c.b16 %v2148, %v2147
        %v2175 = vpack.c.b16 %v2150, %v2149
        %v2176 = vpack.c.b16 %v2152, %v2151
        %v2177 = vpack.c.b16 %v2154, %v2153
        %v2178 = vpack.c.b16 %v2156, %v2155
        %v2179 = vpack.c.b16 %v2158, %v2157
        %v2180 = vpack.c.b16 %v2160, %v2159
        %v2181 = vpack.c.b16 %v2162, %v2161
        %v2182 = vpack.c.b16 %v2164, %v2163
        %v2183 = vpack.c.b16 %v2166, %v2165
        %v2184 = vpack.c.b16 %v2168, %v2167
        %v2186 = vunpack.c.l.b16 %v2104
        %v2187 = vpack.c.b16 %v2186, %v2186
        %v2189 = vshrl.u32 %v2187, 16
        %v2191 = vshll.u32 %v2187, 16
        %v2193 = vrot.slane %v2191, 1
        %v2194 = vor.u32 %v2189, %v2193
        %v2196 = vsel %vm1316, %v2169, 0
        %v2199 = vsel %vm1316, %v2170, 0
        %v2202 = vsel %vm1316, %v2171, 0
        %v2205 = vsel %vm1316, %v2172, 0
        %v2208 = vsel %vm1316, %v2173, 0
        %v2211 = vsel %vm1316, %v2174, 0
        %v2214 = vsel %vm1316, %v2175, 0
        %v2217 = vsel %vm1316, %v2176, 0
        %v2220 = vsel %vm1316, %v2177, 0
        %v2223 = vsel %vm1316, %v2178, 0
        %v2226 = vsel %vm1316, %v2179, 0
        %v2229 = vsel %vm1316, %v2180, 0
        %v2232 = vsel %vm1316, %v2181, 0
        %v2235 = vsel %vm1316, %v2182, 0
        %v2238 = vsel %vm1316, %v2183, 0
        %v2241 = vsel %vm1316, %v2184, 0
        %v2244 = vand.u32 %v2194, %v1368
        %2246 = vmatpush.bf16.msra.mxu0 0
        %2247 = vmatpush.bf16.msra.mxu0 0
        %2248 = vmatpush.bf16.msra.mxu0 0
        %2249 = vmatpush.bf16.msra.mxu0 0
        %2250 = vmatpush.bf16.msra.mxu0 0
        %2251 = vmatpush.bf16.msra.mxu0 0
        %2252 = vmatpush.bf16.msra.mxu0 0
        %2253 = vmatpush.bf16.msra.mxu0 %v2244
        %2254 = vmatmul.bf16.gmra.mxu0 %v2196
        %v2255 = vpop.f32.mrf.mxu0
        %v2256 = vadd.f32 0.0, %v2255
        %v2257 = vpop.f32.mrf.mxu0
        %v2258 = vadd.f32 0.0, %v2257
        %2259 = vmatmul.bf16.gmra.mxu0 %v2199
        %v2260 = vpop.f32.mrf.mxu0
        %v2261 = vadd.f32 0.0, %v2260
        %v2262 = vpop.f32.mrf.mxu0
        %v2263 = vadd.f32 0.0, %v2262
        %2264 = vmatmul.bf16.gmra.mxu0 %v2202
        %v2265 = vpop.f32.mrf.mxu0
        %v2266 = vadd.f32 0.0, %v2265
        %v2267 = vpop.f32.mrf.mxu0
        %v2268 = vadd.f32 0.0, %v2267
        %2269 = vmatmul.bf16.gmra.mxu0 %v2205
        %v2270 = vpop.f32.mrf.mxu0
        %v2271 = vadd.f32 0.0, %v2270
        %v2272 = vpop.f32.mrf.mxu0
        %v2273 = vadd.f32 0.0, %v2272
        %2274 = vmatmul.bf16.gmra.mxu0 %v2208
        %v2275 = vpop.f32.mrf.mxu0
        %v2276 = vadd.f32 0.0, %v2275
        %v2277 = vpop.f32.mrf.mxu0
        %v2278 = vadd.f32 0.0, %v2277
        %2279 = vmatmul.bf16.gmra.mxu0 %v2211
        %v2280 = vpop.f32.mrf.mxu0
        %v2281 = vadd.f32 0.0, %v2280
        %v2282 = vpop.f32.mrf.mxu0
        %v2283 = vadd.f32 0.0, %v2282
        %2284 = vmatmul.bf16.gmra.mxu0 %v2214
        %v2285 = vpop.f32.mrf.mxu0
        %v2286 = vadd.f32 0.0, %v2285
        %v2287 = vpop.f32.mrf.mxu0
        %v2288 = vadd.f32 0.0, %v2287
        %2289 = vmatmul.bf16.gmra.mxu0 %v2217
        %v2290 = vpop.f32.mrf.mxu0
        %v2291 = vadd.f32 0.0, %v2290
        %v2292 = vpop.f32.mrf.mxu0
        %v2293 = vadd.f32 0.0, %v2292
        %2294 = vmatmul.bf16.gmra.mxu0 %v2220
        %v2295 = vpop.f32.mrf.mxu0
        %v2296 = vadd.f32 0.0, %v2295
        %v2297 = vpop.f32.mrf.mxu0
        %v2298 = vadd.f32 0.0, %v2297
        %2299 = vmatmul.bf16.gmra.mxu0 %v2223
        %v2300 = vpop.f32.mrf.mxu0
        %v2301 = vadd.f32 0.0, %v2300
        %v2302 = vpop.f32.mrf.mxu0
        %v2303 = vadd.f32 0.0, %v2302
        %2304 = vmatmul.bf16.gmra.mxu0 %v2226
        %v2305 = vpop.f32.mrf.mxu0
        %v2306 = vadd.f32 0.0, %v2305
        %v2307 = vpop.f32.mrf.mxu0
        %v2308 = vadd.f32 0.0, %v2307
        %2309 = vmatmul.bf16.gmra.mxu0 %v2229
        %v2310 = vpop.f32.mrf.mxu0
        %v2311 = vadd.f32 0.0, %v2310
        %v2312 = vpop.f32.mrf.mxu0
        %v2313 = vadd.f32 0.0, %v2312
        %2314 = vmatmul.bf16.gmra.mxu0 %v2232
        %v2315 = vpop.f32.mrf.mxu0
        %v2316 = vadd.f32 0.0, %v2315
        %v2317 = vpop.f32.mrf.mxu0
        %v2318 = vadd.f32 0.0, %v2317
        %2319 = vmatmul.bf16.gmra.mxu0 %v2235
        %v2320 = vpop.f32.mrf.mxu0
        %v2321 = vadd.f32 0.0, %v2320
        %v2322 = vpop.f32.mrf.mxu0
        %v2323 = vadd.f32 0.0, %v2322
        %2324 = vmatmul.bf16.gmra.mxu0 %v2238
        %v2325 = vpop.f32.mrf.mxu0
        %v2326 = vadd.f32 0.0, %v2325
        %v2327 = vpop.f32.mrf.mxu0
        %v2328 = vadd.f32 0.0, %v2327
        %2329 = vmatmul.bf16.gmra.mxu0 %v2241
        %v2330 = vpop.f32.mrf.mxu0
        %v2331 = vadd.f32 0.0, %v2330
        %v2332 = vpop.f32.mrf.mxu0
        %v2333 = vadd.f32 0.0, %v2332
        %2334 = vdwg.mxu0
        %v2335 = vadd.f32 %v2040, %v2256
        %v2336 = vadd.f32 %v2041, %v2258
        %v2337 = vadd.f32 %v2042, %v2261
        %v2338 = vadd.f32 %v2043, %v2263
        %v2339 = vadd.f32 %v2044, %v2266
        %v2340 = vadd.f32 %v2045, %v2268
        %v2341 = vadd.f32 %v2046, %v2271
        %v2342 = vadd.f32 %v2047, %v2273
        %v2343 = vadd.f32 %v2048, %v2276
        %v2344 = vadd.f32 %v2049, %v2278
        %v2345 = vadd.f32 %v2050, %v2281
        %v2346 = vadd.f32 %v2051, %v2283
        %v2347 = vadd.f32 %v2052, %v2286
        %v2348 = vadd.f32 %v2053, %v2288
        %v2349 = vadd.f32 %v2054, %v2291
        %v2350 = vadd.f32 %v2055, %v2293
        %v2351 = vadd.f32 %v2056, %v2296
        %v2352 = vadd.f32 %v2057, %v2298
        %v2353 = vadd.f32 %v2058, %v2301
        %v2354 = vadd.f32 %v2059, %v2303
        %v2355 = vadd.f32 %v2060, %v2306
        %v2356 = vadd.f32 %v2061, %v2308
        %v2357 = vadd.f32 %v2062, %v2311
        %v2358 = vadd.f32 %v2063, %v2313
        %v2359 = vadd.f32 %v2064, %v2316
        %v2360 = vadd.f32 %v2065, %v2318
        %v2361 = vadd.f32 %v2066, %v2321
        %v2362 = vadd.f32 %v2067, %v2323
        %v2363 = vadd.f32 %v2068, %v2326
        %v2364 = vadd.f32 %v2069, %v2328
        %v2365 = vadd.f32 %v2070, %v2331
        %v2366 = vadd.f32 %v2071, %v2333
        %v2367 = vld [vmem:[%s702] sm:$0xf]
        %v2368 = vld [vmem:[%s702 + $0x4] sm:$0xf]
        %v2369 = vld [vmem:[%s702 + $0x8] sm:$0x1]
        %v2370 = vld [vmem:[%s702 + $0xc] sm:$0xf]
        %v2371 = vld [vmem:[%s702 + $0x10] sm:$0xf]
        %v2372 = vld [vmem:[%s702 + $0x14] sm:$0x1]
        %v2373 = vld [vmem:[%s702 + $0x18] sm:$0xf]
        %v2374 = vld [vmem:[%s702 + $0x1c] sm:$0xf]
        %v2375 = vld [vmem:[%s702 + $0x20] sm:$0x1]
        %v2376 = vld [vmem:[%s702 + $0x24] sm:$0xf]
        %v2377 = vld [vmem:[%s702 + $0x28] sm:$0xf]
        %v2378 = vld [vmem:[%s702 + $0x2c] sm:$0x1]
        %v2379 = vld [vmem:[%s702 + $0x30] sm:$0xf]
        %v2380 = vld [vmem:[%s702 + $0x34] sm:$0xf]
        %v2381 = vld [vmem:[%s702 + $0x38] sm:$0x1]
        %v2382 = vld [vmem:[%s702 + $0x3c] sm:$0xf]
        %v2383 = vld [vmem:[%s702 + $0x40] sm:$0xf]
        %v2384 = vld [vmem:[%s702 + $0x44] sm:$0x1]
        %v2385 = vld [vmem:[%s702 + $0x48] sm:$0xf]
        %v2386 = vld [vmem:[%s702 + $0x4c] sm:$0xf]
        %v2387 = vld [vmem:[%s702 + $0x50] sm:$0x1]
        %v2388 = vld [vmem:[%s702 + $0x54] sm:$0xf]
        %v2389 = vld [vmem:[%s702 + $0x58] sm:$0xf]
        %v2390 = vld [vmem:[%s702 + $0x5c] sm:$0x1]
        %v2391 = vld [vmem:[%s702 + $0x60] sm:$0xf]
        %v2392 = vld [vmem:[%s702 + $0x64] sm:$0xf]
        %v2393 = vld [vmem:[%s702 + $0x68] sm:$0x1]
        %v2394 = vld [vmem:[%s702 + $0x6c] sm:$0xf]
        %v2395 = vld [vmem:[%s702 + $0x70] sm:$0xf]
        %v2396 = vld [vmem:[%s702 + $0x74] sm:$0x1]
        %v2397 = vld [vmem:[%s702 + $0x78] sm:$0xf]
        %v2398 = vld [vmem:[%s702 + $0x7c] sm:$0xf]
        %v2399 = vld [vmem:[%s702 + $0x80] sm:$0x1]
        %v2400 = vld [vmem:[%s702 + $0x84] sm:$0xf]
        %v2401 = vld [vmem:[%s702 + $0x88] sm:$0xf]
        %v2402 = vld [vmem:[%s702 + $0x8c] sm:$0x1]
        %v2403 = vld [vmem:[%s702 + $0x90] sm:$0xf]
        %v2404 = vld [vmem:[%s702 + $0x94] sm:$0xf]
        %v2405 = vld [vmem:[%s702 + $0x98] sm:$0x1]
        %v2406 = vld [vmem:[%s702 + $0x9c] sm:$0xf]
        %v2407 = vld [vmem:[%s702 + $0xa0] sm:$0xf]
        %v2408 = vld [vmem:[%s702 + $0xa4] sm:$0x1]
        %v2409 = vld [vmem:[%s702 + $0xa8] sm:$0xf]
        %v2410 = vld [vmem:[%s702 + $0xac] sm:$0xf]
        %v2411 = vld [vmem:[%s702 + $0xb0] sm:$0x1]
        %v2412 = vld [vmem:[%s702 + $0xb4] sm:$0xf]
        %v2413 = vld [vmem:[%s702 + $0xb8] sm:$0xf]
        %v2414 = vld [vmem:[%s702 + $0xbc] sm:$0x1]
        %v2416 = vshrl.u32 %v2367, 16
        %v2418 = vrot.slane %v2416, 4
        %v2419 = vshll.u32 %v2367, 16
        %v2421 = vrot.slane %v2419, 5
        %v2422 = vor.u32 %v2418, %v2421
        %v2423 = vrot.slane %v2422, 4
        %v2425 = vshll.u32 %v2368, 16
        %v2427 = vrot.slane %v2425, 5
        %v2428 = vsel %vm871, %v2423, %v2427
        %v2429 = vshrl.u32 %v2368, 16
        %v2431 = vrot.slane %v2429, 4
        %v2432 = vor.u32 %v2431, %v2427
        %v2433 = vrot.slane %v2432, 4
        %v2435 = vshll.u32 %v2369, 16
        %v2437 = vrot.slane %v2435, 5
        %v2438 = vsel %vm871, %v2433, %v2437
        %v2440 = vshrl.u32 %v2370, 16
        %v2442 = vrot.slane %v2440, 4
        %v2443 = vshll.u32 %v2370, 16
        %v2445 = vrot.slane %v2443, 5
        %v2446 = vor.u32 %v2442, %v2445
        %v2447 = vrot.slane %v2446, 4
        %v2449 = vshll.u32 %v2371, 16
        %v2451 = vrot.slane %v2449, 5
        %v2452 = vsel %vm871, %v2447, %v2451
        %v2453 = vshrl.u32 %v2371, 16
        %v2455 = vrot.slane %v2453, 4
        %v2456 = vor.u32 %v2455, %v2451
        %v2457 = vrot.slane %v2456, 4
        %v2459 = vshll.u32 %v2372, 16
        %v2461 = vrot.slane %v2459, 5
        %v2462 = vsel %vm871, %v2457, %v2461
        %v2464 = vshrl.u32 %v2373, 16
        %v2466 = vrot.slane %v2464, 4
        %v2467 = vshll.u32 %v2373, 16
        %v2469 = vrot.slane %v2467, 5
        %v2470 = vor.u32 %v2466, %v2469
        %v2471 = vrot.slane %v2470, 4
        %v2473 = vshll.u32 %v2374, 16
        %v2475 = vrot.slane %v2473, 5
        %v2476 = vsel %vm871, %v2471, %v2475
        %v2477 = vshrl.u32 %v2374, 16
        %v2479 = vrot.slane %v2477, 4
        %v2480 = vor.u32 %v2479, %v2475
        %v2481 = vrot.slane %v2480, 4
        %v2483 = vshll.u32 %v2375, 16
        %v2485 = vrot.slane %v2483, 5
        %v2486 = vsel %vm871, %v2481, %v2485
        %v2488 = vshrl.u32 %v2376, 16
        %v2490 = vrot.slane %v2488, 4
        %v2491 = vshll.u32 %v2376, 16
        %v2493 = vrot.slane %v2491, 5
        %v2494 = vor.u32 %v2490, %v2493
        %v2495 = vrot.slane %v2494, 4
        %v2497 = vshll.u32 %v2377, 16
        %v2499 = vrot.slane %v2497, 5
        %v2500 = vsel %vm871, %v2495, %v2499
        %v2501 = vshrl.u32 %v2377, 16
        %v2503 = vrot.slane %v2501, 4
        %v2504 = vor.u32 %v2503, %v2499
        %v2505 = vrot.slane %v2504, 4
        %v2507 = vshll.u32 %v2378, 16
        %v2509 = vrot.slane %v2507, 5
        %v2510 = vsel %vm871, %v2505, %v2509
        %v2512 = vshrl.u32 %v2379, 16
        %v2514 = vrot.slane %v2512, 4
        %v2515 = vshll.u32 %v2379, 16
        %v2517 = vrot.slane %v2515, 5
        %v2518 = vor.u32 %v2514, %v2517
        %v2519 = vrot.slane %v2518, 4
        %v2521 = vshll.u32 %v2380, 16
        %v2523 = vrot.slane %v2521, 5
        %v2524 = vsel %vm871, %v2519, %v2523
        %v2525 = vshrl.u32 %v2380, 16
        %v2527 = vrot.slane %v2525, 4
        %v2528 = vor.u32 %v2527, %v2523
        %v2529 = vrot.slane %v2528, 4
        %v2531 = vshll.u32 %v2381, 16
        %v2533 = vrot.slane %v2531, 5
        %v2534 = vsel %vm871, %v2529, %v2533
        %v2536 = vshrl.u32 %v2382, 16
        %v2538 = vrot.slane %v2536, 4
        %v2539 = vshll.u32 %v2382, 16
        %v2541 = vrot.slane %v2539, 5
        %v2542 = vor.u32 %v2538, %v2541
        %v2543 = vrot.slane %v2542, 4
        %v2545 = vshll.u32 %v2383, 16
        %v2547 = vrot.slane %v2545, 5
        %v2548 = vsel %vm871, %v2543, %v2547
        %v2549 = vshrl.u32 %v2383, 16
        %v2551 = vrot.slane %v2549, 4
        %v2552 = vor.u32 %v2551, %v2547
        %v2553 = vrot.slane %v2552, 4
        %v2555 = vshll.u32 %v2384, 16
        %v2557 = vrot.slane %v2555, 5
        %v2558 = vsel %vm871, %v2553, %v2557
        %v2560 = vshrl.u32 %v2385, 16
        %v2562 = vrot.slane %v2560, 4
        %v2563 = vshll.u32 %v2385, 16
        %v2565 = vrot.slane %v2563, 5
        %v2566 = vor.u32 %v2562, %v2565
        %v2567 = vrot.slane %v2566, 4
        %v2569 = vshll.u32 %v2386, 16
        %v2571 = vrot.slane %v2569, 5
        %v2572 = vsel %vm871, %v2567, %v2571
        %v2573 = vshrl.u32 %v2386, 16
        %v2575 = vrot.slane %v2573, 4
        %v2576 = vor.u32 %v2575, %v2571
        %v2577 = vrot.slane %v2576, 4
        %v2579 = vshll.u32 %v2387, 16
        %v2581 = vrot.slane %v2579, 5
        %v2582 = vsel %vm871, %v2577, %v2581
        %v2584 = vshrl.u32 %v2388, 16
        %v2586 = vrot.slane %v2584, 4
        %v2587 = vshll.u32 %v2388, 16
        %v2589 = vrot.slane %v2587, 5
        %v2590 = vor.u32 %v2586, %v2589
        %v2591 = vrot.slane %v2590, 4
        %v2593 = vshll.u32 %v2389, 16
        %v2595 = vrot.slane %v2593, 5
        %v2596 = vsel %vm871, %v2591, %v2595
        %v2597 = vshrl.u32 %v2389, 16
        %v2599 = vrot.slane %v2597, 4
        %v2600 = vor.u32 %v2599, %v2595
        %v2601 = vrot.slane %v2600, 4
        %v2603 = vshll.u32 %v2390, 16
        %v2605 = vrot.slane %v2603, 5
        %v2606 = vsel %vm871, %v2601, %v2605
        %v2608 = vshrl.u32 %v2391, 16
        %v2610 = vrot.slane %v2608, 4
        %v2611 = vshll.u32 %v2391, 16
        %v2613 = vrot.slane %v2611, 5
        %v2614 = vor.u32 %v2610, %v2613
        %v2615 = vrot.slane %v2614, 4
        %v2617 = vshll.u32 %v2392, 16
        %v2619 = vrot.slane %v2617, 5
        %v2620 = vsel %vm871, %v2615, %v2619
        %v2621 = vshrl.u32 %v2392, 16
        %v2623 = vrot.slane %v2621, 4
        %v2624 = vor.u32 %v2623, %v2619
        %v2625 = vrot.slane %v2624, 4
        %v2627 = vshll.u32 %v2393, 16
        %v2629 = vrot.slane %v2627, 5
        %v2630 = vsel %vm871, %v2625, %v2629
        %v2632 = vshrl.u32 %v2394, 16
        %v2634 = vrot.slane %v2632, 4
        %v2635 = vshll.u32 %v2394, 16
        %v2637 = vrot.slane %v2635, 5
        %v2638 = vor.u32 %v2634, %v2637
        %v2639 = vrot.slane %v2638, 4
        %v2641 = vshll.u32 %v2395, 16
        %v2643 = vrot.slane %v2641, 5
        %v2644 = vsel %vm871, %v2639, %v2643
        %v2645 = vshrl.u32 %v2395, 16
        %v2647 = vrot.slane %v2645, 4
        %v2648 = vor.u32 %v2647, %v2643
        %v2649 = vrot.slane %v2648, 4
        %v2651 = vshll.u32 %v2396, 16
        %v2653 = vrot.slane %v2651, 5
        %v2654 = vsel %vm871, %v2649, %v2653
        %v2656 = vshrl.u32 %v2397, 16
        %v2658 = vrot.slane %v2656, 4
        %v2659 = vshll.u32 %v2397, 16
        %v2661 = vrot.slane %v2659, 5
        %v2662 = vor.u32 %v2658, %v2661
        %v2663 = vrot.slane %v2662, 4
        %v2665 = vshll.u32 %v2398, 16
        %v2667 = vrot.slane %v2665, 5
        %v2668 = vsel %vm871, %v2663, %v2667
        %v2669 = vshrl.u32 %v2398, 16
        %v2671 = vrot.slane %v2669, 4
        %v2672 = vor.u32 %v2671, %v2667
        %v2673 = vrot.slane %v2672, 4
        %v2675 = vshll.u32 %v2399, 16
        %v2677 = vrot.slane %v2675, 5
        %v2678 = vsel %vm871, %v2673, %v2677
        %v2680 = vshrl.u32 %v2400, 16
        %v2682 = vrot.slane %v2680, 4
        %v2683 = vshll.u32 %v2400, 16
        %v2685 = vrot.slane %v2683, 5
        %v2686 = vor.u32 %v2682, %v2685
        %v2687 = vrot.slane %v2686, 4
        %v2689 = vshll.u32 %v2401, 16
        %v2691 = vrot.slane %v2689, 5
        %v2692 = vsel %vm871, %v2687, %v2691
        %v2693 = vshrl.u32 %v2401, 16
        %v2695 = vrot.slane %v2693, 4
        %v2696 = vor.u32 %v2695, %v2691
        %v2697 = vrot.slane %v2696, 4
        %v2699 = vshll.u32 %v2402, 16
        %v2701 = vrot.slane %v2699, 5
        %v2702 = vsel %vm871, %v2697, %v2701
        %v2704 = vshrl.u32 %v2403, 16
        %v2706 = vrot.slane %v2704, 4
        %v2707 = vshll.u32 %v2403, 16
        %v2709 = vrot.slane %v2707, 5
        %v2710 = vor.u32 %v2706, %v2709
        %v2711 = vrot.slane %v2710, 4
        %v2713 = vshll.u32 %v2404, 16
        %v2715 = vrot.slane %v2713, 5
        %v2716 = vsel %vm871, %v2711, %v2715
        %v2717 = vshrl.u32 %v2404, 16
        %v2719 = vrot.slane %v2717, 4
        %v2720 = vor.u32 %v2719, %v2715
        %v2721 = vrot.slane %v2720, 4
        %v2723 = vshll.u32 %v2405, 16
        %v2725 = vrot.slane %v2723, 5
        %v2726 = vsel %vm871, %v2721, %v2725
        %v2728 = vshrl.u32 %v2406, 16
        %v2730 = vrot.slane %v2728, 4
        %v2731 = vshll.u32 %v2406, 16
        %v2733 = vrot.slane %v2731, 5
        %v2734 = vor.u32 %v2730, %v2733
        %v2735 = vrot.slane %v2734, 4
        %v2737 = vshll.u32 %v2407, 16
        %v2739 = vrot.slane %v2737, 5
        %v2740 = vsel %vm871, %v2735, %v2739
        %v2741 = vshrl.u32 %v2407, 16
        %v2743 = vrot.slane %v2741, 4
        %v2744 = vor.u32 %v2743, %v2739
        %v2745 = vrot.slane %v2744, 4
        %v2747 = vshll.u32 %v2408, 16
        %v2749 = vrot.slane %v2747, 5
        %v2750 = vsel %vm871, %v2745, %v2749
        %v2752 = vshrl.u32 %v2409, 16
        %v2754 = vrot.slane %v2752, 4
        %v2755 = vshll.u32 %v2409, 16
        %v2757 = vrot.slane %v2755, 5
        %v2758 = vor.u32 %v2754, %v2757
        %v2759 = vrot.slane %v2758, 4
        %v2761 = vshll.u32 %v2410, 16
        %v2763 = vrot.slane %v2761, 5
        %v2764 = vsel %vm871, %v2759, %v2763
        %v2765 = vshrl.u32 %v2410, 16
        %v2767 = vrot.slane %v2765, 4
        %v2768 = vor.u32 %v2767, %v2763
        %v2769 = vrot.slane %v2768, 4
        %v2771 = vshll.u32 %v2411, 16
        %v2773 = vrot.slane %v2771, 5
        %v2774 = vsel %vm871, %v2769, %v2773
        %v2776 = vshrl.u32 %v2412, 16
        %v2778 = vrot.slane %v2776, 4
        %v2779 = vshll.u32 %v2412, 16
        %v2781 = vrot.slane %v2779, 5
        %v2782 = vor.u32 %v2778, %v2781
        %v2783 = vrot.slane %v2782, 4
        %v2785 = vshll.u32 %v2413, 16
        %v2787 = vrot.slane %v2785, 5
        %v2788 = vsel %vm871, %v2783, %v2787
        %v2789 = vshrl.u32 %v2413, 16
        %v2791 = vrot.slane %v2789, 4
        %v2792 = vor.u32 %v2791, %v2787
        %v2793 = vrot.slane %v2792, 4
        %v2795 = vshll.u32 %v2414, 16
        %v2797 = vrot.slane %v2795, 5
        %v2798 = vsel %vm871, %v2793, %v2797
        %v2799 = vld [vmem:[%s249 + $0x4] sm:$0xc]
        %v2800 = vunpack.c.l.b16 %v2428
        %v2801 = vunpack.c.l.b16 %v2438
        %v2802 = vunpack.c.l.b16 %v2452
        %v2803 = vunpack.c.l.b16 %v2462
        %v2804 = vunpack.c.l.b16 %v2476
        %v2805 = vunpack.c.l.b16 %v2486
        %v2806 = vunpack.c.l.b16 %v2500
        %v2807 = vunpack.c.l.b16 %v2510
        %v2808 = vunpack.c.l.b16 %v2524
        %v2809 = vunpack.c.l.b16 %v2534
        %v2810 = vunpack.c.l.b16 %v2548
        %v2811 = vunpack.c.l.b16 %v2558
        %v2812 = vunpack.c.l.b16 %v2572
        %v2813 = vunpack.c.l.b16 %v2582
        %v2814 = vunpack.c.l.b16 %v2596
        %v2815 = vunpack.c.l.b16 %v2606
        %v2816 = vunpack.c.l.b16 %v2620
        %v2817 = vunpack.c.l.b16 %v2630
        %v2818 = vunpack.c.l.b16 %v2644
        %v2819 = vunpack.c.l.b16 %v2654
        %v2820 = vunpack.c.l.b16 %v2668
        %v2821 = vunpack.c.l.b16 %v2678
        %v2822 = vunpack.c.l.b16 %v2692
        %v2823 = vunpack.c.l.b16 %v2702
        %v2824 = vunpack.c.l.b16 %v2716
        %v2825 = vunpack.c.l.b16 %v2726
        %v2826 = vunpack.c.l.b16 %v2740
        %v2827 = vunpack.c.l.b16 %v2750
        %v2828 = vunpack.c.l.b16 %v2764
        %v2829 = vunpack.c.l.b16 %v2774
        %v2830 = vunpack.c.l.b16 %v2788
        %v2831 = vunpack.c.l.b16 %v2798
        %v2832 = vpack.c.b16 %v2801, %v2800
        %v2833 = vpack.c.b16 %v2803, %v2802
        %v2834 = vpack.c.b16 %v2805, %v2804
        %v2835 = vpack.c.b16 %v2807, %v2806
        %v2836 = vpack.c.b16 %v2809, %v2808
        %v2837 = vpack.c.b16 %v2811, %v2810
        %v2838 = vpack.c.b16 %v2813, %v2812
        %v2839 = vpack.c.b16 %v2815, %v2814
        %v2840 = vpack.c.b16 %v2817, %v2816
        %v2841 = vpack.c.b16 %v2819, %v2818
        %v2842 = vpack.c.b16 %v2821, %v2820
        %v2843 = vpack.c.b16 %v2823, %v2822
        %v2844 = vpack.c.b16 %v2825, %v2824
        %v2845 = vpack.c.b16 %v2827, %v2826
        %v2846 = vpack.c.b16 %v2829, %v2828
        %v2847 = vpack.c.b16 %v2831, %v2830
        %v2849 = vunpack.c.l.b16 %v2799
        %v2850 = vpack.c.b16 %v2849, %v2849
        %v2851 = vrot.slane %v2850, 2
        %v2853 = vsel %vm1316, %v2832, 0
        %v2856 = vsel %vm1316, %v2833, 0
        %v2859 = vsel %vm1316, %v2834, 0
        %v2862 = vsel %vm1316, %v2835, 0
        %v2865 = vsel %vm1316, %v2836, 0
        %v2868 = vsel %vm1316, %v2837, 0
        %v2871 = vsel %vm1316, %v2838, 0
        %v2874 = vsel %vm1316, %v2839, 0
        %v2877 = vsel %vm1316, %v2840, 0
        %v2880 = vsel %vm1316, %v2841, 0
        %v2883 = vsel %vm1316, %v2842, 0
        %v2886 = vsel %vm1316, %v2843, 0
        %v2889 = vsel %vm1316, %v2844, 0
        %v2892 = vsel %vm1316, %v2845, 0
        %v2895 = vsel %vm1316, %v2846, 0
        %v2898 = vsel %vm1316, %v2847, 0
        %v2901 = vand.u32 %v2851, %v1368
        %2903 = vmatpush.bf16.msra.mxu0 0
        %2904 = vmatpush.bf16.msra.mxu0 0
        %2905 = vmatpush.bf16.msra.mxu0 0
        %2906 = vmatpush.bf16.msra.mxu0 0
        %2907 = vmatpush.bf16.msra.mxu0 0
        %2908 = vmatpush.bf16.msra.mxu0 0
        %2909 = vmatpush.bf16.msra.mxu0 0
        %2910 = vmatpush.bf16.msra.mxu0 %v2901
        %2911 = vmatmul.bf16.gmra.mxu0 %v2853
        %v2912 = vpop.f32.mrf.mxu0
        %v2913 = vadd.f32 0.0, %v2912
        %v2914 = vpop.f32.mrf.mxu0
        %v2915 = vadd.f32 0.0, %v2914
        %2916 = vmatmul.bf16.gmra.mxu0 %v2856
        %v2917 = vpop.f32.mrf.mxu0
        %v2918 = vadd.f32 0.0, %v2917
        %v2919 = vpop.f32.mrf.mxu0
        %v2920 = vadd.f32 0.0, %v2919
        %2921 = vmatmul.bf16.gmra.mxu0 %v2859
        %v2922 = vpop.f32.mrf.mxu0
        %v2923 = vadd.f32 0.0, %v2922
        %v2924 = vpop.f32.mrf.mxu0
        %v2925 = vadd.f32 0.0, %v2924
        %2926 = vmatmul.bf16.gmra.mxu0 %v2862
        %v2927 = vpop.f32.mrf.mxu0
        %v2928 = vadd.f32 0.0, %v2927
        %v2929 = vpop.f32.mrf.mxu0
        %v2930 = vadd.f32 0.0, %v2929
        %2931 = vmatmul.bf16.gmra.mxu0 %v2865
        %v2932 = vpop.f32.mrf.mxu0
        %v2933 = vadd.f32 0.0, %v2932
        %v2934 = vpop.f32.mrf.mxu0
        %v2935 = vadd.f32 0.0, %v2934
        %2936 = vmatmul.bf16.gmra.mxu0 %v2868
        %v2937 = vpop.f32.mrf.mxu0
        %v2938 = vadd.f32 0.0, %v2937
        %v2939 = vpop.f32.mrf.mxu0
        %v2940 = vadd.f32 0.0, %v2939
        %2941 = vmatmul.bf16.gmra.mxu0 %v2871
        %v2942 = vpop.f32.mrf.mxu0
        %v2943 = vadd.f32 0.0, %v2942
        %v2944 = vpop.f32.mrf.mxu0
        %v2945 = vadd.f32 0.0, %v2944
        %2946 = vmatmul.bf16.gmra.mxu0 %v2874
        %v2947 = vpop.f32.mrf.mxu0
        %v2948 = vadd.f32 0.0, %v2947
        %v2949 = vpop.f32.mrf.mxu0
        %v2950 = vadd.f32 0.0, %v2949
        %2951 = vmatmul.bf16.gmra.mxu0 %v2877
        %v2952 = vpop.f32.mrf.mxu0
        %v2953 = vadd.f32 0.0, %v2952
        %v2954 = vpop.f32.mrf.mxu0
        %v2955 = vadd.f32 0.0, %v2954
        %2956 = vmatmul.bf16.gmra.mxu0 %v2880
        %v2957 = vpop.f32.mrf.mxu0
        %v2958 = vadd.f32 0.0, %v2957
        %v2959 = vpop.f32.mrf.mxu0
        %v2960 = vadd.f32 0.0, %v2959
        %2961 = vmatmul.bf16.gmra.mxu0 %v2883
        %v2962 = vpop.f32.mrf.mxu0
        %v2963 = vadd.f32 0.0, %v2962
        %v2964 = vpop.f32.mrf.mxu0
        %v2965 = vadd.f32 0.0, %v2964
        %2966 = vmatmul.bf16.gmra.mxu0 %v2886
        %v2967 = vpop.f32.mrf.mxu0
        %v2968 = vadd.f32 0.0, %v2967
        %v2969 = vpop.f32.mrf.mxu0
        %v2970 = vadd.f32 0.0, %v2969
        %2971 = vmatmul.bf16.gmra.mxu0 %v2889
        %v2972 = vpop.f32.mrf.mxu0
        %v2973 = vadd.f32 0.0, %v2972
        %v2974 = vpop.f32.mrf.mxu0
        %v2975 = vadd.f32 0.0, %v2974
        %2976 = vmatmul.bf16.gmra.mxu0 %v2892
        %v2977 = vpop.f32.mrf.mxu0
        %v2978 = vadd.f32 0.0, %v2977
        %v2979 = vpop.f32.mrf.mxu0
        %v2980 = vadd.f32 0.0, %v2979
        %2981 = vmatmul.bf16.gmra.mxu0 %v2895
        %v2982 = vpop.f32.mrf.mxu0
        %v2983 = vadd.f32 0.0, %v2982
        %v2984 = vpop.f32.mrf.mxu0
        %v2985 = vadd.f32 0.0, %v2984
        %2986 = vmatmul.bf16.gmra.mxu0 %v2898
        %v2987 = vpop.f32.mrf.mxu0
        %v2988 = vadd.f32 0.0, %v2987
        %v2989 = vpop.f32.mrf.mxu0
        %v2990 = vadd.f32 0.0, %v2989
        %2991 = vdwg.mxu0
        %v2992 = vadd.f32 %v2335, %v2913
        %v2993 = vadd.f32 %v2336, %v2915
        %v2994 = vadd.f32 %v2337, %v2918
        %v2995 = vadd.f32 %v2338, %v2920
        %v2996 = vadd.f32 %v2339, %v2923
        %v2997 = vadd.f32 %v2340, %v2925
        %v2998 = vadd.f32 %v2341, %v2928
        %v2999 = vadd.f32 %v2342, %v2930
        %v3000 = vadd.f32 %v2343, %v2933
        %v3001 = vadd.f32 %v2344, %v2935
        %v3002 = vadd.f32 %v2345, %v2938
        %v3003 = vadd.f32 %v2346, %v2940
        %v3004 = vadd.f32 %v2347, %v2943
        %v3005 = vadd.f32 %v2348, %v2945
        %v3006 = vadd.f32 %v2349, %v2948
        %v3007 = vadd.f32 %v2350, %v2950
        %v3008 = vadd.f32 %v2351, %v2953
        %v3009 = vadd.f32 %v2352, %v2955
        %v3010 = vadd.f32 %v2353, %v2958
        %v3011 = vadd.f32 %v2354, %v2960
        %v3012 = vadd.f32 %v2355, %v2963
        %v3013 = vadd.f32 %v2356, %v2965
        %v3014 = vadd.f32 %v2357, %v2968
        %v3015 = vadd.f32 %v2358, %v2970
        %v3016 = vadd.f32 %v2359, %v2973
        %v3017 = vadd.f32 %v2360, %v2975
        %v3018 = vadd.f32 %v2361, %v2978
        %v3019 = vadd.f32 %v2362, %v2980
        %v3020 = vadd.f32 %v2363, %v2983
        %v3021 = vadd.f32 %v2364, %v2985
        %v3022 = vadd.f32 %v2365, %v2988
        %v3023 = vadd.f32 %v2366, %v2990
        %v3024 = vld [vmem:[%s702] sm:$0xe]
        %v3025 = vld [vmem:[%s702 + $0xc] sm:$0xe]
        %v3026 = vld [vmem:[%s702 + $0x18] sm:$0xe]
        %v3027 = vld [vmem:[%s702 + $0x24] sm:$0xe]
        %v3028 = vld [vmem:[%s702 + $0x30] sm:$0xe]
        %v3029 = vld [vmem:[%s702 + $0x3c] sm:$0xe]
        %v3030 = vld [vmem:[%s702 + $0x48] sm:$0xe]
        %v3031 = vld [vmem:[%s702 + $0x54] sm:$0xe]
        %v3032 = vld [vmem:[%s702 + $0x60] sm:$0xe]
        %v3033 = vld [vmem:[%s702 + $0x6c] sm:$0xe]
        %v3034 = vld [vmem:[%s702 + $0x78] sm:$0xe]
        %v3035 = vld [vmem:[%s702 + $0x84] sm:$0xe]
        %v3036 = vld [vmem:[%s702 + $0x90] sm:$0xe]
        %v3037 = vld [vmem:[%s702 + $0x9c] sm:$0xe]
        %v3038 = vld [vmem:[%s702 + $0xa8] sm:$0xe]
        %v3039 = vld [vmem:[%s702 + $0xb4] sm:$0xe]
        %v3088 = vrot.slane %v3024, 5
        %v3089 = vrot.slane %v3088, 4
        %v3090 = vrot.slane %v2368, 5
        %v3091 = vsel %vm1731, %v3089, %v3090
        %v3092 = vrot.slane %v3090, 4
        %v3093 = vrot.slane %v2369, 5
        %v3094 = vsel %vm1731, %v3092, %v3093
        %v3095 = vrot.slane %v3025, 5
        %v3096 = vrot.slane %v3095, 4
        %v3097 = vrot.slane %v2371, 5
        %v3098 = vsel %vm1731, %v3096, %v3097
        %v3099 = vrot.slane %v3097, 4
        %v3100 = vrot.slane %v2372, 5
        %v3101 = vsel %vm1731, %v3099, %v3100
        %v3102 = vrot.slane %v3026, 5
        %v3103 = vrot.slane %v3102, 4
        %v3104 = vrot.slane %v2374, 5
        %v3105 = vsel %vm1731, %v3103, %v3104
        %v3106 = vrot.slane %v3104, 4
        %v3107 = vrot.slane %v2375, 5
        %v3108 = vsel %vm1731, %v3106, %v3107
        %v3109 = vrot.slane %v3027, 5
        %v3110 = vrot.slane %v3109, 4
        %v3111 = vrot.slane %v2377, 5
        %v3112 = vsel %vm1731, %v3110, %v3111
        %v3113 = vrot.slane %v3111, 4
        %v3114 = vrot.slane %v2378, 5
        %v3115 = vsel %vm1731, %v3113, %v3114
        %v3116 = vrot.slane %v3028, 5
        %v3117 = vrot.slane %v3116, 4
        %v3118 = vrot.slane %v2380, 5
        %v3119 = vsel %vm1731, %v3117, %v3118
        %v3120 = vrot.slane %v3118, 4
        %v3121 = vrot.slane %v2381, 5
        %v3122 = vsel %vm1731, %v3120, %v3121
        %v3123 = vrot.slane %v3029, 5
        %v3124 = vrot.slane %v3123, 4
        %v3125 = vrot.slane %v2383, 5
        %v3126 = vsel %vm1731, %v3124, %v3125
        %v3127 = vrot.slane %v3125, 4
        %v3128 = vrot.slane %v2384, 5
        %v3129 = vsel %vm1731, %v3127, %v3128
        %v3130 = vrot.slane %v3030, 5
        %v3131 = vrot.slane %v3130, 4
        %v3132 = vrot.slane %v2386, 5
        %v3133 = vsel %vm1731, %v3131, %v3132
        %v3134 = vrot.slane %v3132, 4
        %v3135 = vrot.slane %v2387, 5
        %v3136 = vsel %vm1731, %v3134, %v3135
        %v3137 = vrot.slane %v3031, 5
        %v3138 = vrot.slane %v3137, 4
        %v3139 = vrot.slane %v2389, 5
        %v3140 = vsel %vm1731, %v3138, %v3139
        %v3141 = vrot.slane %v3139, 4
        %v3142 = vrot.slane %v2390, 5
        %v3143 = vsel %vm1731, %v3141, %v3142
        %v3144 = vrot.slane %v3032, 5
        %v3145 = vrot.slane %v3144, 4
        %v3146 = vrot.slane %v2392, 5
        %v3147 = vsel %vm1731, %v3145, %v3146
        %v3148 = vrot.slane %v3146, 4
        %v3149 = vrot.slane %v2393, 5
        %v3150 = vsel %vm1731, %v3148, %v3149
        %v3151 = vrot.slane %v3033, 5
        %v3152 = vrot.slane %v3151, 4
        %v3153 = vrot.slane %v2395, 5
        %v3154 = vsel %vm1731, %v3152, %v3153
        %v3155 = vrot.slane %v3153, 4
        %v3156 = vrot.slane %v2396, 5
        %v3157 = vsel %vm1731, %v3155, %v3156
        %v3158 = vrot.slane %v3034, 5
        %v3159 = vrot.slane %v3158, 4
        %v3160 = vrot.slane %v2398, 5
        %v3161 = vsel %vm1731, %v3159, %v3160
        %v3162 = vrot.slane %v3160, 4
        %v3163 = vrot.slane %v2399, 5
        %v3164 = vsel %vm1731, %v3162, %v3163
        %v3165 = vrot.slane %v3035, 5
        %v3166 = vrot.slane %v3165, 4
        %v3167 = vrot.slane %v2401, 5
        %v3168 = vsel %vm1731, %v3166, %v3167
        %v3169 = vrot.slane %v3167, 4
        %v3170 = vrot.slane %v2402, 5
        %v3171 = vsel %vm1731, %v3169, %v3170
        %v3172 = vrot.slane %v3036, 5
        %v3173 = vrot.slane %v3172, 4
        %v3174 = vrot.slane %v2404, 5
        %v3175 = vsel %vm1731, %v3173, %v3174
        %v3176 = vrot.slane %v3174, 4
        %v3177 = vrot.slane %v2405, 5
        %v3178 = vsel %vm1731, %v3176, %v3177
        %v3179 = vrot.slane %v3037, 5
        %v3180 = vrot.slane %v3179, 4
        %v3181 = vrot.slane %v2407, 5
        %v3182 = vsel %vm1731, %v3180, %v3181
        %v3183 = vrot.slane %v3181, 4
        %v3184 = vrot.slane %v2408, 5
        %v3185 = vsel %vm1731, %v3183, %v3184
        %v3186 = vrot.slane %v3038, 5
        %v3187 = vrot.slane %v3186, 4
        %v3188 = vrot.slane %v2410, 5
        %v3189 = vsel %vm1731, %v3187, %v3188
        %v3190 = vrot.slane %v3188, 4
        %v3191 = vrot.slane %v2411, 5
        %v3192 = vsel %vm1731, %v3190, %v3191
        %v3193 = vrot.slane %v3039, 5
        %v3194 = vrot.slane %v3193, 4
        %v3195 = vrot.slane %v2413, 5
        %v3196 = vsel %vm1731, %v3194, %v3195
        %v3197 = vrot.slane %v3195, 4
        %v3198 = vrot.slane %v2414, 5
        %v3199 = vsel %vm1731, %v3197, %v3198
        %v3200 = vld [vmem:[%s249 + $0x4] sm:$0x8]
        %v3201 = vld [vmem:[%s249 + $0x8] sm:$0x1]
        %v3202 = vunpack.c.l.b16 %v3091
        %v3203 = vunpack.c.l.b16 %v3094
        %v3204 = vunpack.c.l.b16 %v3098
        %v3205 = vunpack.c.l.b16 %v3101
        %v3206 = vunpack.c.l.b16 %v3105
        %v3207 = vunpack.c.l.b16 %v3108
        %v3208 = vunpack.c.l.b16 %v3112
        %v3209 = vunpack.c.l.b16 %v3115
        %v3210 = vunpack.c.l.b16 %v3119
        %v3211 = vunpack.c.l.b16 %v3122
        %v3212 = vunpack.c.l.b16 %v3126
        %v3213 = vunpack.c.l.b16 %v3129
        %v3214 = vunpack.c.l.b16 %v3133
        %v3215 = vunpack.c.l.b16 %v3136
        %v3216 = vunpack.c.l.b16 %v3140
        %v3217 = vunpack.c.l.b16 %v3143
        %v3218 = vunpack.c.l.b16 %v3147
        %v3219 = vunpack.c.l.b16 %v3150
        %v3220 = vunpack.c.l.b16 %v3154
        %v3221 = vunpack.c.l.b16 %v3157
        %v3222 = vunpack.c.l.b16 %v3161
        %v3223 = vunpack.c.l.b16 %v3164
        %v3224 = vunpack.c.l.b16 %v3168
        %v3225 = vunpack.c.l.b16 %v3171
        %v3226 = vunpack.c.l.b16 %v3175
        %v3227 = vunpack.c.l.b16 %v3178
        %v3228 = vunpack.c.l.b16 %v3182
        %v3229 = vunpack.c.l.b16 %v3185
        %v3230 = vunpack.c.l.b16 %v3189
        %v3231 = vunpack.c.l.b16 %v3192
        %v3232 = vunpack.c.l.b16 %v3196
        %v3233 = vunpack.c.l.b16 %v3199
        %v3234 = vpack.c.b16 %v3203, %v3202
        %v3235 = vpack.c.b16 %v3205, %v3204
        %v3236 = vpack.c.b16 %v3207, %v3206
        %v3237 = vpack.c.b16 %v3209, %v3208
        %v3238 = vpack.c.b16 %v3211, %v3210
        %v3239 = vpack.c.b16 %v3213, %v3212
        %v3240 = vpack.c.b16 %v3215, %v3214
        %v3241 = vpack.c.b16 %v3217, %v3216
        %v3242 = vpack.c.b16 %v3219, %v3218
        %v3243 = vpack.c.b16 %v3221, %v3220
        %v3244 = vpack.c.b16 %v3223, %v3222
        %v3245 = vpack.c.b16 %v3225, %v3224
        %v3246 = vpack.c.b16 %v3227, %v3226
        %v3247 = vpack.c.b16 %v3229, %v3228
        %v3248 = vpack.c.b16 %v3231, %v3230
        %v3249 = vpack.c.b16 %v3233, %v3232
        %v3252 = vunpack.c.l.b16 %v3200
        %v3253 = vunpack.c.l.b16 %v3201
        %v3254 = vpack.c.b16 %v3253, %v3252
        %v3256 = vshrl.u32 %v3254, 16
        %v3258 = vrot.slane %v3256, 3
        %v3259 = vshll.u32 %v3254, 16
        %v3261 = vrot.slane %v3259, 4
        %v3262 = vor.u32 %v3258, %v3261
        %v3264 = vsel %vm1316, %v3234, 0
        %v3267 = vsel %vm1316, %v3235, 0
        %v3270 = vsel %vm1316, %v3236, 0
        %v3273 = vsel %vm1316, %v3237, 0
        %v3276 = vsel %vm1316, %v3238, 0
        %v3279 = vsel %vm1316, %v3239, 0
        %v3282 = vsel %vm1316, %v3240, 0
        %v3285 = vsel %vm1316, %v3241, 0
        %v3288 = vsel %vm1316, %v3242, 0
        %v3291 = vsel %vm1316, %v3243, 0
        %v3294 = vsel %vm1316, %v3244, 0
        %v3297 = vsel %vm1316, %v3245, 0
        %v3300 = vsel %vm1316, %v3246, 0
        %v3303 = vsel %vm1316, %v3247, 0
        %v3306 = vsel %vm1316, %v3248, 0
        %v3309 = vsel %vm1316, %v3249, 0
        %v3312 = vand.u32 %v3262, %v1368
        %3314 = vmatpush.bf16.msra.mxu0 0
        %3315 = vmatpush.bf16.msra.mxu0 0
        %3316 = vmatpush.bf16.msra.mxu0 0
        %3317 = vmatpush.bf16.msra.mxu0 0
        %3318 = vmatpush.bf16.msra.mxu0 0
        %3319 = vmatpush.bf16.msra.mxu0 0
        %3320 = vmatpush.bf16.msra.mxu0 0
        %3321 = vmatpush.bf16.msra.mxu0 %v3312
        %3322 = vmatmul.bf16.gmra.mxu0 %v3264
        %v3323 = vpop.f32.mrf.mxu0
        %v3324 = vadd.f32 0.0, %v3323
        %v3325 = vpop.f32.mrf.mxu0
        %v3326 = vadd.f32 0.0, %v3325
        %3327 = vmatmul.bf16.gmra.mxu0 %v3267
        %v3328 = vpop.f32.mrf.mxu0
        %v3329 = vadd.f32 0.0, %v3328
        %v3330 = vpop.f32.mrf.mxu0
        %v3331 = vadd.f32 0.0, %v3330
        %3332 = vmatmul.bf16.gmra.mxu0 %v3270
        %v3333 = vpop.f32.mrf.mxu0
        %v3334 = vadd.f32 0.0, %v3333
        %v3335 = vpop.f32.mrf.mxu0
        %v3336 = vadd.f32 0.0, %v3335
        %3337 = vmatmul.bf16.gmra.mxu0 %v3273
        %v3338 = vpop.f32.mrf.mxu0
        %v3339 = vadd.f32 0.0, %v3338
        %v3340 = vpop.f32.mrf.mxu0
        %v3341 = vadd.f32 0.0, %v3340
        %3342 = vmatmul.bf16.gmra.mxu0 %v3276
        %v3343 = vpop.f32.mrf.mxu0
        %v3344 = vadd.f32 0.0, %v3343
        %v3345 = vpop.f32.mrf.mxu0
        %v3346 = vadd.f32 0.0, %v3345
        %3347 = vmatmul.bf16.gmra.mxu0 %v3279
        %v3348 = vpop.f32.mrf.mxu0
        %v3349 = vadd.f32 0.0, %v3348
        %v3350 = vpop.f32.mrf.mxu0
        %v3351 = vadd.f32 0.0, %v3350
        %3352 = vmatmul.bf16.gmra.mxu0 %v3282
        %v3353 = vpop.f32.mrf.mxu0
        %v3354 = vadd.f32 0.0, %v3353
        %v3355 = vpop.f32.mrf.mxu0
        %v3356 = vadd.f32 0.0, %v3355
        %3357 = vmatmul.bf16.gmra.mxu0 %v3285
        %v3358 = vpop.f32.mrf.mxu0
        %v3359 = vadd.f32 0.0, %v3358
        %v3360 = vpop.f32.mrf.mxu0
        %v3361 = vadd.f32 0.0, %v3360
        %3362 = vmatmul.bf16.gmra.mxu0 %v3288
        %v3363 = vpop.f32.mrf.mxu0
        %v3364 = vadd.f32 0.0, %v3363
        %v3365 = vpop.f32.mrf.mxu0
        %v3366 = vadd.f32 0.0, %v3365
        %3367 = vmatmul.bf16.gmra.mxu0 %v3291
        %v3368 = vpop.f32.mrf.mxu0
        %v3369 = vadd.f32 0.0, %v3368
        %v3370 = vpop.f32.mrf.mxu0
        %v3371 = vadd.f32 0.0, %v3370
        %3372 = vmatmul.bf16.gmra.mxu0 %v3294
        %v3373 = vpop.f32.mrf.mxu0
        %v3374 = vadd.f32 0.0, %v3373
        %v3375 = vpop.f32.mrf.mxu0
        %v3376 = vadd.f32 0.0, %v3375
        %3377 = vmatmul.bf16.gmra.mxu0 %v3297
        %v3378 = vpop.f32.mrf.mxu0
        %v3379 = vadd.f32 0.0, %v3378
        %v3380 = vpop.f32.mrf.mxu0
        %v3381 = vadd.f32 0.0, %v3380
        %3382 = vmatmul.bf16.gmra.mxu0 %v3300
        %v3383 = vpop.f32.mrf.mxu0
        %v3384 = vadd.f32 0.0, %v3383
        %v3385 = vpop.f32.mrf.mxu0
        %v3386 = vadd.f32 0.0, %v3385
        %3387 = vmatmul.bf16.gmra.mxu0 %v3303
        %v3388 = vpop.f32.mrf.mxu0
        %v3389 = vadd.f32 0.0, %v3388
        %v3390 = vpop.f32.mrf.mxu0
        %v3391 = vadd.f32 0.0, %v3390
        %3392 = vmatmul.bf16.gmra.mxu0 %v3306
        %v3393 = vpop.f32.mrf.mxu0
        %v3394 = vadd.f32 0.0, %v3393
        %v3395 = vpop.f32.mrf.mxu0
        %v3396 = vadd.f32 0.0, %v3395
        %3397 = vmatmul.bf16.gmra.mxu0 %v3309
        %v3398 = vpop.f32.mrf.mxu0
        %v3399 = vadd.f32 0.0, %v3398
        %v3400 = vpop.f32.mrf.mxu0
        %v3401 = vadd.f32 0.0, %v3400
        %3402 = vdwg.mxu0
        %v3403 = vadd.f32 %v2992, %v3324
        %v3404 = vadd.f32 %v2993, %v3326
        %v3405 = vadd.f32 %v2994, %v3329
        %v3406 = vadd.f32 %v2995, %v3331
        %v3407 = vadd.f32 %v2996, %v3334
        %v3408 = vadd.f32 %v2997, %v3336
        %v3409 = vadd.f32 %v2998, %v3339
        %v3410 = vadd.f32 %v2999, %v3341
        %v3411 = vadd.f32 %v3000, %v3344
        %v3412 = vadd.f32 %v3001, %v3346
        %v3413 = vadd.f32 %v3002, %v3349
        %v3414 = vadd.f32 %v3003, %v3351
        %v3415 = vadd.f32 %v3004, %v3354
        %v3416 = vadd.f32 %v3005, %v3356
        %v3417 = vadd.f32 %v3006, %v3359
        %v3418 = vadd.f32 %v3007, %v3361
        %v3419 = vadd.f32 %v3008, %v3364
        %v3420 = vadd.f32 %v3009, %v3366
        %v3421 = vadd.f32 %v3010, %v3369
        %v3422 = vadd.f32 %v3011, %v3371
        %v3423 = vadd.f32 %v3012, %v3374
        %v3424 = vadd.f32 %v3013, %v3376
        %v3425 = vadd.f32 %v3014, %v3379
        %v3426 = vadd.f32 %v3015, %v3381
        %v3427 = vadd.f32 %v3016, %v3384
        %v3428 = vadd.f32 %v3017, %v3386
        %v3429 = vadd.f32 %v3018, %v3389
        %v3430 = vadd.f32 %v3019, %v3391
        %v3431 = vadd.f32 %v3020, %v3394
        %v3432 = vadd.f32 %v3021, %v3396
        %v3433 = vadd.f32 %v3022, %v3399
        %v3434 = vadd.f32 %v3023, %v3401
        %s3435 = scalar_lea.vmem [#allocation2], 24
        %v3436 = vld [vmem:[%s3435] sm:$0xf]
        %v3437 = vld [vmem:[%s3435 + $0x4] sm:$0xf]
        %v3438 = vld [vmem:[%s3435 + $0xc] sm:$0xf]
        %v3439 = vld [vmem:[%s3435 + $0x10] sm:$0xf]
        %v3440 = vld [vmem:[%s3435 + $0x18] sm:$0xf]
        %v3441 = vld [vmem:[%s3435 + $0x1c] sm:$0xf]
        %v3442 = vld [vmem:[%s3435 + $0x24] sm:$0xf]
        %v3443 = vld [vmem:[%s3435 + $0x28] sm:$0xf]
        %v3444 = vld [vmem:[%s3435 + $0x30] sm:$0xf]
        %v3445 = vld [vmem:[%s3435 + $0x34] sm:$0xf]
        %v3446 = vld [vmem:[%s3435 + $0x3c] sm:$0xf]
        %v3447 = vld [vmem:[%s3435 + $0x40] sm:$0xf]
        %v3448 = vld [vmem:[%s3435 + $0x48] sm:$0xf]
        %v3449 = vld [vmem:[%s3435 + $0x4c] sm:$0xf]
        %v3450 = vld [vmem:[%s3435 + $0x54] sm:$0xf]
        %v3451 = vld [vmem:[%s3435 + $0x58] sm:$0xf]
        %v3452 = vld [vmem:[%s3435 + $0x60] sm:$0xf]
        %v3453 = vld [vmem:[%s3435 + $0x64] sm:$0xf]
        %v3454 = vld [vmem:[%s3435 + $0x6c] sm:$0xf]
        %v3455 = vld [vmem:[%s3435 + $0x70] sm:$0xf]
        %v3456 = vld [vmem:[%s3435 + $0x78] sm:$0xf]
        %v3457 = vld [vmem:[%s3435 + $0x7c] sm:$0xf]
        %v3458 = vld [vmem:[%s3435 + $0x84] sm:$0xf]
        %v3459 = vld [vmem:[%s3435 + $0x88] sm:$0xf]
        %v3460 = vld [vmem:[%s3435 + $0x90] sm:$0xf]
        %v3461 = vld [vmem:[%s3435 + $0x94] sm:$0xf]
        %v3462 = vld [vmem:[%s3435 + $0x9c] sm:$0xf]
        %v3463 = vld [vmem:[%s3435 + $0xa0] sm:$0xf]
        %v3464 = vld [vmem:[%s3435 + $0xa8] sm:$0xf]
        %v3465 = vld [vmem:[%s3435 + $0xac] sm:$0xf]
        %v3466 = vld [vmem:[%s3435 + $0xb4] sm:$0xf]
        %v3467 = vld [vmem:[%s3435 + $0xb8] sm:$0xf]
        %v3468 = vld [vmem:[%s249 + $0x8] sm:$0x6]
        %v3501 = vunpack.c.l.b16 %v3436
        %v3502 = vunpack.c.l.b16 %v3437
        %v3503 = vunpack.c.l.b16 %v3438
        %v3504 = vunpack.c.l.b16 %v3439
        %v3505 = vunpack.c.l.b16 %v3440
        %v3506 = vunpack.c.l.b16 %v3441
        %v3507 = vunpack.c.l.b16 %v3442
        %v3508 = vunpack.c.l.b16 %v3443
        %v3509 = vunpack.c.l.b16 %v3444
        %v3510 = vunpack.c.l.b16 %v3445
        %v3511 = vunpack.c.l.b16 %v3446
        %v3512 = vunpack.c.l.b16 %v3447
        %v3513 = vunpack.c.l.b16 %v3448
        %v3514 = vunpack.c.l.b16 %v3449
        %v3515 = vunpack.c.l.b16 %v3450
        %v3516 = vunpack.c.l.b16 %v3451
        %v3517 = vunpack.c.l.b16 %v3452
        %v3518 = vunpack.c.l.b16 %v3453
        %v3519 = vunpack.c.l.b16 %v3454
        %v3520 = vunpack.c.l.b16 %v3455
        %v3521 = vunpack.c.l.b16 %v3456
        %v3522 = vunpack.c.l.b16 %v3457
        %v3523 = vunpack.c.l.b16 %v3458
        %v3524 = vunpack.c.l.b16 %v3459
        %v3525 = vunpack.c.l.b16 %v3460
        %v3526 = vunpack.c.l.b16 %v3461
        %v3527 = vunpack.c.l.b16 %v3462
        %v3528 = vunpack.c.l.b16 %v3463
        %v3529 = vunpack.c.l.b16 %v3464
        %v3530 = vunpack.c.l.b16 %v3465
        %v3531 = vunpack.c.l.b16 %v3466
        %v3532 = vunpack.c.l.b16 %v3467
        %v3533 = vpack.c.b16 %v3502, %v3501
        %v3534 = vpack.c.b16 %v3504, %v3503
        %v3535 = vpack.c.b16 %v3506, %v3505
        %v3536 = vpack.c.b16 %v3508, %v3507
        %v3537 = vpack.c.b16 %v3510, %v3509
        %v3538 = vpack.c.b16 %v3512, %v3511
        %v3539 = vpack.c.b16 %v3514, %v3513
        %v3540 = vpack.c.b16 %v3516, %v3515
        %v3541 = vpack.c.b16 %v3518, %v3517
        %v3542 = vpack.c.b16 %v3520, %v3519
        %v3543 = vpack.c.b16 %v3522, %v3521
        %v3544 = vpack.c.b16 %v3524, %v3523
        %v3545 = vpack.c.b16 %v3526, %v3525
        %v3546 = vpack.c.b16 %v3528, %v3527
        %v3547 = vpack.c.b16 %v3530, %v3529
        %v3548 = vpack.c.b16 %v3532, %v3531
        %v3550 = vunpack.c.l.b16 %v3468
        %v3551 = vpack.c.b16 %v3550, %v3550
        %v3552 = vrot.slane %v3551, 1
        %v3554 = vsel %vm1316, %v3533, 0
        %v3557 = vsel %vm1316, %v3534, 0
        %v3560 = vsel %vm1316, %v3535, 0
        %v3563 = vsel %vm1316, %v3536, 0
        %v3566 = vsel %vm1316, %v3537, 0
        %v3569 = vsel %vm1316, %v3538, 0
        %v3572 = vsel %vm1316, %v3539, 0
        %v3575 = vsel %vm1316, %v3540, 0
        %v3578 = vsel %vm1316, %v3541, 0
        %v3581 = vsel %vm1316, %v3542, 0
        %v3584 = vsel %vm1316, %v3543, 0
        %v3587 = vsel %vm1316, %v3544, 0
        %v3590 = vsel %vm1316, %v3545, 0
        %v3593 = vsel %vm1316, %v3546, 0
        %v3596 = vsel %vm1316, %v3547, 0
        %v3599 = vsel %vm1316, %v3548, 0
        %v3602 = vand.u32 %v3552, %v1368
        %3604 = vmatpush.bf16.msra.mxu0 0
        %3605 = vmatpush.bf16.msra.mxu0 0
        %3606 = vmatpush.bf16.msra.mxu0 0
        %3607 = vmatpush.bf16.msra.mxu0 0
        %3608 = vmatpush.bf16.msra.mxu0 0
        %3609 = vmatpush.bf16.msra.mxu0 0
        %3610 = vmatpush.bf16.msra.mxu0 0
        %3611 = vmatpush.bf16.msra.mxu0 %v3602
        %3612 = vmatmul.bf16.gmra.mxu0 %v3554
        %v3613 = vpop.f32.mrf.mxu0
        %v3614 = vadd.f32 0.0, %v3613
        %v3615 = vpop.f32.mrf.mxu0
        %v3616 = vadd.f32 0.0, %v3615
        %3617 = vmatmul.bf16.gmra.mxu0 %v3557
        %v3618 = vpop.f32.mrf.mxu0
        %v3619 = vadd.f32 0.0, %v3618
        %v3620 = vpop.f32.mrf.mxu0
        %v3621 = vadd.f32 0.0, %v3620
        %3622 = vmatmul.bf16.gmra.mxu0 %v3560
        %v3623 = vpop.f32.mrf.mxu0
        %v3624 = vadd.f32 0.0, %v3623
        %v3625 = vpop.f32.mrf.mxu0
        %v3626 = vadd.f32 0.0, %v3625
        %3627 = vmatmul.bf16.gmra.mxu0 %v3563
        %v3628 = vpop.f32.mrf.mxu0
        %v3629 = vadd.f32 0.0, %v3628
        %v3630 = vpop.f32.mrf.mxu0
        %v3631 = vadd.f32 0.0, %v3630
        %3632 = vmatmul.bf16.gmra.mxu0 %v3566
        %v3633 = vpop.f32.mrf.mxu0
        %v3634 = vadd.f32 0.0, %v3633
        %v3635 = vpop.f32.mrf.mxu0
        %v3636 = vadd.f32 0.0, %v3635
        %3637 = vmatmul.bf16.gmra.mxu0 %v3569
        %v3638 = vpop.f32.mrf.mxu0
        %v3639 = vadd.f32 0.0, %v3638
        %v3640 = vpop.f32.mrf.mxu0
        %v3641 = vadd.f32 0.0, %v3640
        %3642 = vmatmul.bf16.gmra.mxu0 %v3572
        %v3643 = vpop.f32.mrf.mxu0
        %v3644 = vadd.f32 0.0, %v3643
        %v3645 = vpop.f32.mrf.mxu0
        %v3646 = vadd.f32 0.0, %v3645
        %3647 = vmatmul.bf16.gmra.mxu0 %v3575
        %v3648 = vpop.f32.mrf.mxu0
        %v3649 = vadd.f32 0.0, %v3648
        %v3650 = vpop.f32.mrf.mxu0
        %v3651 = vadd.f32 0.0, %v3650
        %3652 = vmatmul.bf16.gmra.mxu0 %v3578
        %v3653 = vpop.f32.mrf.mxu0
        %v3654 = vadd.f32 0.0, %v3653
        %v3655 = vpop.f32.mrf.mxu0
        %v3656 = vadd.f32 0.0, %v3655
        %3657 = vmatmul.bf16.gmra.mxu0 %v3581
        %v3658 = vpop.f32.mrf.mxu0
        %v3659 = vadd.f32 0.0, %v3658
        %v3660 = vpop.f32.mrf.mxu0
        %v3661 = vadd.f32 0.0, %v3660
        %3662 = vmatmul.bf16.gmra.mxu0 %v3584
        %v3663 = vpop.f32.mrf.mxu0
        %v3664 = vadd.f32 0.0, %v3663
        %v3665 = vpop.f32.mrf.mxu0
        %v3666 = vadd.f32 0.0, %v3665
        %3667 = vmatmul.bf16.gmra.mxu0 %v3587
        %v3668 = vpop.f32.mrf.mxu0
        %v3669 = vadd.f32 0.0, %v3668
        %v3670 = vpop.f32.mrf.mxu0
        %v3671 = vadd.f32 0.0, %v3670
        %3672 = vmatmul.bf16.gmra.mxu0 %v3590
        %v3673 = vpop.f32.mrf.mxu0
        %v3674 = vadd.f32 0.0, %v3673
        %v3675 = vpop.f32.mrf.mxu0
        %v3676 = vadd.f32 0.0, %v3675
        %3677 = vmatmul.bf16.gmra.mxu0 %v3593
        %v3678 = vpop.f32.mrf.mxu0
        %v3679 = vadd.f32 0.0, %v3678
        %v3680 = vpop.f32.mrf.mxu0
        %v3681 = vadd.f32 0.0, %v3680
        %3682 = vmatmul.bf16.gmra.mxu0 %v3596
        %v3683 = vpop.f32.mrf.mxu0
        %v3684 = vadd.f32 0.0, %v3683
        %v3685 = vpop.f32.mrf.mxu0
        %v3686 = vadd.f32 0.0, %v3685
        %3687 = vmatmul.bf16.gmra.mxu0 %v3599
        %v3688 = vpop.f32.mrf.mxu0
        %v3689 = vadd.f32 0.0, %v3688
        %v3690 = vpop.f32.mrf.mxu0
        %v3691 = vadd.f32 0.0, %v3690
        %3692 = vdwg.mxu0
        %v3693 = vadd.f32 %v3403, %v3614
        %v3694 = vadd.f32 %v3404, %v3616
        %v3695 = vadd.f32 %v3405, %v3619
        %v3696 = vadd.f32 %v3406, %v3621
        %v3697 = vadd.f32 %v3407, %v3624
        %v3698 = vadd.f32 %v3408, %v3626
        %v3699 = vadd.f32 %v3409, %v3629
        %v3700 = vadd.f32 %v3410, %v3631
        %v3701 = vadd.f32 %v3411, %v3634
        %v3702 = vadd.f32 %v3412, %v3636
        %v3703 = vadd.f32 %v3413, %v3639
        %v3704 = vadd.f32 %v3414, %v3641
        %v3705 = vadd.f32 %v3415, %v3644
        %v3706 = vadd.f32 %v3416, %v3646
        %v3707 = vadd.f32 %v3417, %v3649
        %v3708 = vadd.f32 %v3418, %v3651
        %v3709 = vadd.f32 %v3419, %v3654
        %v3710 = vadd.f32 %v3420, %v3656
        %v3711 = vadd.f32 %v3421, %v3659
        %v3712 = vadd.f32 %v3422, %v3661
        %v3713 = vadd.f32 %v3423, %v3664
        %v3714 = vadd.f32 %v3424, %v3666
        %v3715 = vadd.f32 %v3425, %v3669
        %v3716 = vadd.f32 %v3426, %v3671
        %v3717 = vadd.f32 %v3427, %v3674
        %v3718 = vadd.f32 %v3428, %v3676
        %v3719 = vadd.f32 %v3429, %v3679
        %v3720 = vadd.f32 %v3430, %v3681
        %v3721 = vadd.f32 %v3431, %v3684
        %v3722 = vadd.f32 %v3432, %v3686
        %v3723 = vadd.f32 %v3433, %v3689
        %v3724 = vadd.f32 %v3434, %v3691
        %v3725 = vld [vmem:[%s3435] sm:$0xf]
        %v3726 = vld [vmem:[%s3435 + $0x4] sm:$0xf]
        %v3727 = vld [vmem:[%s3435 + $0x8] sm:$0x1]
        %v3728 = vld [vmem:[%s3435 + $0xc] sm:$0xf]
        %v3729 = vld [vmem:[%s3435 + $0x10] sm:$0xf]
        %v3730 = vld [vmem:[%s3435 + $0x14] sm:$0x1]
        %v3731 = vld [vmem:[%s3435 + $0x18] sm:$0xf]
        %v3732 = vld [vmem:[%s3435 + $0x1c] sm:$0xf]
        %v3733 = vld [vmem:[%s3435 + $0x20] sm:$0x1]
        %v3734 = vld [vmem:[%s3435 + $0x24] sm:$0xf]
        %v3735 = vld [vmem:[%s3435 + $0x28] sm:$0xf]
        %v3736 = vld [vmem:[%s3435 + $0x2c] sm:$0x1]
        %v3737 = vld [vmem:[%s3435 + $0x30] sm:$0xf]
        %v3738 = vld [vmem:[%s3435 + $0x34] sm:$0xf]
        %v3739 = vld [vmem:[%s3435 + $0x38] sm:$0x1]
        %v3740 = vld [vmem:[%s3435 + $0x3c] sm:$0xf]
        %v3741 = vld [vmem:[%s3435 + $0x40] sm:$0xf]
        %v3742 = vld [vmem:[%s3435 + $0x44] sm:$0x1]
        %v3743 = vld [vmem:[%s3435 + $0x48] sm:$0xf]
        %v3744 = vld [vmem:[%s3435 + $0x4c] sm:$0xf]
        %v3745 = vld [vmem:[%s3435 + $0x50] sm:$0x1]
        %v3746 = vld [vmem:[%s3435 + $0x54] sm:$0xf]
        %v3747 = vld [vmem:[%s3435 + $0x58] sm:$0xf]
        %v3748 = vld [vmem:[%s3435 + $0x5c] sm:$0x1]
        %v3749 = vld [vmem:[%s3435 + $0x60] sm:$0xf]
        %v3750 = vld [vmem:[%s3435 + $0x64] sm:$0xf]
        %v3751 = vld [vmem:[%s3435 + $0x68] sm:$0x1]
        %v3752 = vld [vmem:[%s3435 + $0x6c] sm:$0xf]
        %v3753 = vld [vmem:[%s3435 + $0x70] sm:$0xf]
        %v3754 = vld [vmem:[%s3435 + $0x74] sm:$0x1]
        %v3755 = vld [vmem:[%s3435 + $0x78] sm:$0xf]
        %v3756 = vld [vmem:[%s3435 + $0x7c] sm:$0xf]
        %v3757 = vld [vmem:[%s3435 + $0x80] sm:$0x1]
        %v3758 = vld [vmem:[%s3435 + $0x84] sm:$0xf]
        %v3759 = vld [vmem:[%s3435 + $0x88] sm:$0xf]
        %v3760 = vld [vmem:[%s3435 + $0x8c] sm:$0x1]
        %v3761 = vld [vmem:[%s3435 + $0x90] sm:$0xf]
        %v3762 = vld [vmem:[%s3435 + $0x94] sm:$0xf]
        %v3763 = vld [vmem:[%s3435 + $0x98] sm:$0x1]
        %v3764 = vld [vmem:[%s3435 + $0x9c] sm:$0xf]
        %v3765 = vld [vmem:[%s3435 + $0xa0] sm:$0xf]
        %v3766 = vld [vmem:[%s3435 + $0xa4] sm:$0x1]
        %v3767 = vld [vmem:[%s3435 + $0xa8] sm:$0xf]
        %v3768 = vld [vmem:[%s3435 + $0xac] sm:$0xf]
        %v3769 = vld [vmem:[%s3435 + $0xb0] sm:$0x1]
        %v3770 = vld [vmem:[%s3435 + $0xb4] sm:$0xf]
        %v3771 = vld [vmem:[%s3435 + $0xb8] sm:$0xf]
        %v3772 = vld [vmem:[%s3435 + $0xbc] sm:$0x1]
        %v3774 = vshrl.u32 %v3725, 16
        %v3776 = vrot.slane %v3774, 4
        %v3777 = vshll.u32 %v3725, 16
        %v3779 = vrot.slane %v3777, 5
        %v3780 = vor.u32 %v3776, %v3779
        %v3781 = vrot.slane %v3780, 4
        %v3783 = vshll.u32 %v3726, 16
        %v3785 = vrot.slane %v3783, 5
        %v3786 = vsel %vm871, %v3781, %v3785
        %v3787 = vshrl.u32 %v3726, 16
        %v3789 = vrot.slane %v3787, 4
        %v3790 = vor.u32 %v3789, %v3785
        %v3791 = vrot.slane %v3790, 4
        %v3793 = vshll.u32 %v3727, 16
        %v3795 = vrot.slane %v3793, 5
        %v3796 = vsel %vm871, %v3791, %v3795
        %v3798 = vshrl.u32 %v3728, 16
        %v3800 = vrot.slane %v3798, 4
        %v3801 = vshll.u32 %v3728, 16
        %v3803 = vrot.slane %v3801, 5
        %v3804 = vor.u32 %v3800, %v3803
        %v3805 = vrot.slane %v3804, 4
        %v3807 = vshll.u32 %v3729, 16
        %v3809 = vrot.slane %v3807, 5
        %v3810 = vsel %vm871, %v3805, %v3809
        %v3811 = vshrl.u32 %v3729, 16
        %v3813 = vrot.slane %v3811, 4
        %v3814 = vor.u32 %v3813, %v3809
        %v3815 = vrot.slane %v3814, 4
        %v3817 = vshll.u32 %v3730, 16
        %v3819 = vrot.slane %v3817, 5
        %v3820 = vsel %vm871, %v3815, %v3819
        %v3822 = vshrl.u32 %v3731, 16
        %v3824 = vrot.slane %v3822, 4
        %v3825 = vshll.u32 %v3731, 16
        %v3827 = vrot.slane %v3825, 5
        %v3828 = vor.u32 %v3824, %v3827
        %v3829 = vrot.slane %v3828, 4
        %v3831 = vshll.u32 %v3732, 16
        %v3833 = vrot.slane %v3831, 5
        %v3834 = vsel %vm871, %v3829, %v3833
        %v3835 = vshrl.u32 %v3732, 16
        %v3837 = vrot.slane %v3835, 4
        %v3838 = vor.u32 %v3837, %v3833
        %v3839 = vrot.slane %v3838, 4
        %v3841 = vshll.u32 %v3733, 16
        %v3843 = vrot.slane %v3841, 5
        %v3844 = vsel %vm871, %v3839, %v3843
        %v3846 = vshrl.u32 %v3734, 16
        %v3848 = vrot.slane %v3846, 4
        %v3849 = vshll.u32 %v3734, 16
        %v3851 = vrot.slane %v3849, 5
        %v3852 = vor.u32 %v3848, %v3851
        %v3853 = vrot.slane %v3852, 4
        %v3855 = vshll.u32 %v3735, 16
        %v3857 = vrot.slane %v3855, 5
        %v3858 = vsel %vm871, %v3853, %v3857
        %v3859 = vshrl.u32 %v3735, 16
        %v3861 = vrot.slane %v3859, 4
        %v3862 = vor.u32 %v3861, %v3857
        %v3863 = vrot.slane %v3862, 4
        %v3865 = vshll.u32 %v3736, 16
        %v3867 = vrot.slane %v3865, 5
        %v3868 = vsel %vm871, %v3863, %v3867
        %v3870 = vshrl.u32 %v3737, 16
        %v3872 = vrot.slane %v3870, 4
        %v3873 = vshll.u32 %v3737, 16
        %v3875 = vrot.slane %v3873, 5
        %v3876 = vor.u32 %v3872, %v3875
        %v3877 = vrot.slane %v3876, 4
        %v3879 = vshll.u32 %v3738, 16
        %v3881 = vrot.slane %v3879, 5
        %v3882 = vsel %vm871, %v3877, %v3881
        %v3883 = vshrl.u32 %v3738, 16
        %v3885 = vrot.slane %v3883, 4
        %v3886 = vor.u32 %v3885, %v3881
        %v3887 = vrot.slane %v3886, 4
        %v3889 = vshll.u32 %v3739, 16
        %v3891 = vrot.slane %v3889, 5
        %v3892 = vsel %vm871, %v3887, %v3891
        %v3894 = vshrl.u32 %v3740, 16
        %v3896 = vrot.slane %v3894, 4
        %v3897 = vshll.u32 %v3740, 16
        %v3899 = vrot.slane %v3897, 5
        %v3900 = vor.u32 %v3896, %v3899
        %v3901 = vrot.slane %v3900, 4
        %v3903 = vshll.u32 %v3741, 16
        %v3905 = vrot.slane %v3903, 5
        %v3906 = vsel %vm871, %v3901, %v3905
        %v3907 = vshrl.u32 %v3741, 16
        %v3909 = vrot.slane %v3907, 4
        %v3910 = vor.u32 %v3909, %v3905
        %v3911 = vrot.slane %v3910, 4
        %v3913 = vshll.u32 %v3742, 16
        %v3915 = vrot.slane %v3913, 5
        %v3916 = vsel %vm871, %v3911, %v3915
        %v3918 = vshrl.u32 %v3743, 16
        %v3920 = vrot.slane %v3918, 4
        %v3921 = vshll.u32 %v3743, 16
        %v3923 = vrot.slane %v3921, 5
        %v3924 = vor.u32 %v3920, %v3923
        %v3925 = vrot.slane %v3924, 4
        %v3927 = vshll.u32 %v3744, 16
        %v3929 = vrot.slane %v3927, 5
        %v3930 = vsel %vm871, %v3925, %v3929
        %v3931 = vshrl.u32 %v3744, 16
        %v3933 = vrot.slane %v3931, 4
        %v3934 = vor.u32 %v3933, %v3929
        %v3935 = vrot.slane %v3934, 4
        %v3937 = vshll.u32 %v3745, 16
        %v3939 = vrot.slane %v3937, 5
        %v3940 = vsel %vm871, %v3935, %v3939
        %v3942 = vshrl.u32 %v3746, 16
        %v3944 = vrot.slane %v3942, 4
        %v3945 = vshll.u32 %v3746, 16
        %v3947 = vrot.slane %v3945, 5
        %v3948 = vor.u32 %v3944, %v3947
        %v3949 = vrot.slane %v3948, 4
        %v3951 = vshll.u32 %v3747, 16
        %v3953 = vrot.slane %v3951, 5
        %v3954 = vsel %vm871, %v3949, %v3953
        %v3955 = vshrl.u32 %v3747, 16
        %v3957 = vrot.slane %v3955, 4
        %v3958 = vor.u32 %v3957, %v3953
        %v3959 = vrot.slane %v3958, 4
        %v3961 = vshll.u32 %v3748, 16
        %v3963 = vrot.slane %v3961, 5
        %v3964 = vsel %vm871, %v3959, %v3963
        %v3966 = vshrl.u32 %v3749, 16
        %v3968 = vrot.slane %v3966, 4
        %v3969 = vshll.u32 %v3749, 16
        %v3971 = vrot.slane %v3969, 5
        %v3972 = vor.u32 %v3968, %v3971
        %v3973 = vrot.slane %v3972, 4
        %v3975 = vshll.u32 %v3750, 16
        %v3977 = vrot.slane %v3975, 5
        %v3978 = vsel %vm871, %v3973, %v3977
        %v3979 = vshrl.u32 %v3750, 16
        %v3981 = vrot.slane %v3979, 4
        %v3982 = vor.u32 %v3981, %v3977
        %v3983 = vrot.slane %v3982, 4
        %v3985 = vshll.u32 %v3751, 16
        %v3987 = vrot.slane %v3985, 5
        %v3988 = vsel %vm871, %v3983, %v3987
        %v3990 = vshrl.u32 %v3752, 16
        %v3992 = vrot.slane %v3990, 4
        %v3993 = vshll.u32 %v3752, 16
        %v3995 = vrot.slane %v3993, 5
        %v3996 = vor.u32 %v3992, %v3995
        %v3997 = vrot.slane %v3996, 4
        %v3999 = vshll.u32 %v3753, 16
        %v4001 = vrot.slane %v3999, 5
        %v4002 = vsel %vm871, %v3997, %v4001
        %v4003 = vshrl.u32 %v3753, 16
        %v4005 = vrot.slane %v4003, 4
        %v4006 = vor.u32 %v4005, %v4001
        %v4007 = vrot.slane %v4006, 4
        %v4009 = vshll.u32 %v3754, 16
        %v4011 = vrot.slane %v4009, 5
        %v4012 = vsel %vm871, %v4007, %v4011
        %v4014 = vshrl.u32 %v3755, 16
        %v4016 = vrot.slane %v4014, 4
        %v4017 = vshll.u32 %v3755, 16
        %v4019 = vrot.slane %v4017, 5
        %v4020 = vor.u32 %v4016, %v4019
        %v4021 = vrot.slane %v4020, 4
        %v4023 = vshll.u32 %v3756, 16
        %v4025 = vrot.slane %v4023, 5
        %v4026 = vsel %vm871, %v4021, %v4025
        %v4027 = vshrl.u32 %v3756, 16
        %v4029 = vrot.slane %v4027, 4
        %v4030 = vor.u32 %v4029, %v4025
        %v4031 = vrot.slane %v4030, 4
        %v4033 = vshll.u32 %v3757, 16
        %v4035 = vrot.slane %v4033, 5
        %v4036 = vsel %vm871, %v4031, %v4035
        %v4038 = vshrl.u32 %v3758, 16
        %v4040 = vrot.slane %v4038, 4
        %v4041 = vshll.u32 %v3758, 16
        %v4043 = vrot.slane %v4041, 5
        %v4044 = vor.u32 %v4040, %v4043
        %v4045 = vrot.slane %v4044, 4
        %v4047 = vshll.u32 %v3759, 16
        %v4049 = vrot.slane %v4047, 5
        %v4050 = vsel %vm871, %v4045, %v4049
        %v4051 = vshrl.u32 %v3759, 16
        %v4053 = vrot.slane %v4051, 4
        %v4054 = vor.u32 %v4053, %v4049
        %v4055 = vrot.slane %v4054, 4
        %v4057 = vshll.u32 %v3760, 16
        %v4059 = vrot.slane %v4057, 5
        %v4060 = vsel %vm871, %v4055, %v4059
        %v4062 = vshrl.u32 %v3761, 16
        %v4064 = vrot.slane %v4062, 4
        %v4065 = vshll.u32 %v3761, 16
        %v4067 = vrot.slane %v4065, 5
        %v4068 = vor.u32 %v4064, %v4067
        %v4069 = vrot.slane %v4068, 4
        %v4071 = vshll.u32 %v3762, 16
        %v4073 = vrot.slane %v4071, 5
        %v4074 = vsel %vm871, %v4069, %v4073
        %v4075 = vshrl.u32 %v3762, 16
        %v4077 = vrot.slane %v4075, 4
        %v4078 = vor.u32 %v4077, %v4073
        %v4079 = vrot.slane %v4078, 4
        %v4081 = vshll.u32 %v3763, 16
        %v4083 = vrot.slane %v4081, 5
        %v4084 = vsel %vm871, %v4079, %v4083
        %v4086 = vshrl.u32 %v3764, 16
        %v4088 = vrot.slane %v4086, 4
        %v4089 = vshll.u32 %v3764, 16
        %v4091 = vrot.slane %v4089, 5
        %v4092 = vor.u32 %v4088, %v4091
        %v4093 = vrot.slane %v4092, 4
        %v4095 = vshll.u32 %v3765, 16
        %v4097 = vrot.slane %v4095, 5
        %v4098 = vsel %vm871, %v4093, %v4097
        %v4099 = vshrl.u32 %v3765, 16
        %v4101 = vrot.slane %v4099, 4
        %v4102 = vor.u32 %v4101, %v4097
        %v4103 = vrot.slane %v4102, 4
        %v4105 = vshll.u32 %v3766, 16
        %v4107 = vrot.slane %v4105, 5
        %v4108 = vsel %vm871, %v4103, %v4107
        %v4110 = vshrl.u32 %v3767, 16
        %v4112 = vrot.slane %v4110, 4
        %v4113 = vshll.u32 %v3767, 16
        %v4115 = vrot.slane %v4113, 5
        %v4116 = vor.u32 %v4112, %v4115
        %v4117 = vrot.slane %v4116, 4
        %v4119 = vshll.u32 %v3768, 16
        %v4121 = vrot.slane %v4119, 5
        %v4122 = vsel %vm871, %v4117, %v4121
        %v4123 = vshrl.u32 %v3768, 16
        %v4125 = vrot.slane %v4123, 4
        %v4126 = vor.u32 %v4125, %v4121
        %v4127 = vrot.slane %v4126, 4
        %v4129 = vshll.u32 %v3769, 16
        %v4131 = vrot.slane %v4129, 5
        %v4132 = vsel %vm871, %v4127, %v4131
        %v4134 = vshrl.u32 %v3770, 16
        %v4136 = vrot.slane %v4134, 4
        %v4137 = vshll.u32 %v3770, 16
        %v4139 = vrot.slane %v4137, 5
        %v4140 = vor.u32 %v4136, %v4139
        %v4141 = vrot.slane %v4140, 4
        %v4143 = vshll.u32 %v3771, 16
        %v4145 = vrot.slane %v4143, 5
        %v4146 = vsel %vm871, %v4141, %v4145
        %v4147 = vshrl.u32 %v3771, 16
        %v4149 = vrot.slane %v4147, 4
        %v4150 = vor.u32 %v4149, %v4145
        %v4151 = vrot.slane %v4150, 4
        %v4153 = vshll.u32 %v3772, 16
        %v4155 = vrot.slane %v4153, 5
        %v4156 = vsel %vm871, %v4151, %v4155
        %v4157 = vld [vmem:[%s249 + $0x8] sm:$0xc]
        %v4158 = vunpack.c.l.b16 %v3786
        %v4159 = vunpack.c.l.b16 %v3796
        %v4160 = vunpack.c.l.b16 %v3810
        %v4161 = vunpack.c.l.b16 %v3820
        %v4162 = vunpack.c.l.b16 %v3834
        %v4163 = vunpack.c.l.b16 %v3844
        %v4164 = vunpack.c.l.b16 %v3858
        %v4165 = vunpack.c.l.b16 %v3868
        %v4166 = vunpack.c.l.b16 %v3882
        %v4167 = vunpack.c.l.b16 %v3892
        %v4168 = vunpack.c.l.b16 %v3906
        %v4169 = vunpack.c.l.b16 %v3916
        %v4170 = vunpack.c.l.b16 %v3930
        %v4171 = vunpack.c.l.b16 %v3940
        %v4172 = vunpack.c.l.b16 %v3954
        %v4173 = vunpack.c.l.b16 %v3964
        %v4174 = vunpack.c.l.b16 %v3978
        %v4175 = vunpack.c.l.b16 %v3988
        %v4176 = vunpack.c.l.b16 %v4002
        %v4177 = vunpack.c.l.b16 %v4012
        %v4178 = vunpack.c.l.b16 %v4026
        %v4179 = vunpack.c.l.b16 %v4036
        %v4180 = vunpack.c.l.b16 %v4050
        %v4181 = vunpack.c.l.b16 %v4060
        %v4182 = vunpack.c.l.b16 %v4074
        %v4183 = vunpack.c.l.b16 %v4084
        %v4184 = vunpack.c.l.b16 %v4098
        %v4185 = vunpack.c.l.b16 %v4108
        %v4186 = vunpack.c.l.b16 %v4122
        %v4187 = vunpack.c.l.b16 %v4132
        %v4188 = vunpack.c.l.b16 %v4146
        %v4189 = vunpack.c.l.b16 %v4156
        %v4190 = vpack.c.b16 %v4159, %v4158
        %v4191 = vpack.c.b16 %v4161, %v4160
        %v4192 = vpack.c.b16 %v4163, %v4162
        %v4193 = vpack.c.b16 %v4165, %v4164
        %v4194 = vpack.c.b16 %v4167, %v4166
        %v4195 = vpack.c.b16 %v4169, %v4168
        %v4196 = vpack.c.b16 %v4171, %v4170
        %v4197 = vpack.c.b16 %v4173, %v4172
        %v4198 = vpack.c.b16 %v4175, %v4174
        %v4199 = vpack.c.b16 %v4177, %v4176
        %v4200 = vpack.c.b16 %v4179, %v4178
        %v4201 = vpack.c.b16 %v4181, %v4180
        %v4202 = vpack.c.b16 %v4183, %v4182
        %v4203 = vpack.c.b16 %v4185, %v4184
        %v4204 = vpack.c.b16 %v4187, %v4186
        %v4205 = vpack.c.b16 %v4189, %v4188
        %v4207 = vunpack.c.l.b16 %v4157
        %v4208 = vpack.c.b16 %v4207, %v4207
        %v4210 = vshrl.u32 %v4208, 16
        %v4212 = vrot.slane %v4210, 2
        %v4213 = vshll.u32 %v4208, 16
        %v4215 = vrot.slane %v4213, 3
        %v4216 = vor.u32 %v4212, %v4215
        %v4218 = vsel %vm1316, %v4190, 0
        %v4221 = vsel %vm1316, %v4191, 0
        %v4224 = vsel %vm1316, %v4192, 0
        %v4227 = vsel %vm1316, %v4193, 0
        %v4230 = vsel %vm1316, %v4194, 0
        %v4233 = vsel %vm1316, %v4195, 0
        %v4236 = vsel %vm1316, %v4196, 0
        %v4239 = vsel %vm1316, %v4197, 0
        %v4242 = vsel %vm1316, %v4198, 0
        %v4245 = vsel %vm1316, %v4199, 0
        %v4248 = vsel %vm1316, %v4200, 0
        %v4251 = vsel %vm1316, %v4201, 0
        %v4254 = vsel %vm1316, %v4202, 0
        %v4257 = vsel %vm1316, %v4203, 0
        %v4260 = vsel %vm1316, %v4204, 0
        %v4263 = vsel %vm1316, %v4205, 0
        %v4266 = vand.u32 %v4216, %v1368
        %4268 = vmatpush.bf16.msra.mxu0 0
        %4269 = vmatpush.bf16.msra.mxu0 0
        %4270 = vmatpush.bf16.msra.mxu0 0
        %4271 = vmatpush.bf16.msra.mxu0 0
        %4272 = vmatpush.bf16.msra.mxu0 0
        %4273 = vmatpush.bf16.msra.mxu0 0
        %4274 = vmatpush.bf16.msra.mxu0 0
        %4275 = vmatpush.bf16.msra.mxu0 %v4266
        %4276 = vmatmul.bf16.gmra.mxu0 %v4218
        %v4277 = vpop.f32.mrf.mxu0
        %v4278 = vadd.f32 0.0, %v4277
        %v4279 = vpop.f32.mrf.mxu0
        %v4280 = vadd.f32 0.0, %v4279
        %4281 = vmatmul.bf16.gmra.mxu0 %v4221
        %v4282 = vpop.f32.mrf.mxu0
        %v4283 = vadd.f32 0.0, %v4282
        %v4284 = vpop.f32.mrf.mxu0
        %v4285 = vadd.f32 0.0, %v4284
        %4286 = vmatmul.bf16.gmra.mxu0 %v4224
        %v4287 = vpop.f32.mrf.mxu0
        %v4288 = vadd.f32 0.0, %v4287
        %v4289 = vpop.f32.mrf.mxu0
        %v4290 = vadd.f32 0.0, %v4289
        %4291 = vmatmul.bf16.gmra.mxu0 %v4227
        %v4292 = vpop.f32.mrf.mxu0
        %v4293 = vadd.f32 0.0, %v4292
        %v4294 = vpop.f32.mrf.mxu0
        %v4295 = vadd.f32 0.0, %v4294
        %4296 = vmatmul.bf16.gmra.mxu0 %v4230
        %v4297 = vpop.f32.mrf.mxu0
        %v4298 = vadd.f32 0.0, %v4297
        %v4299 = vpop.f32.mrf.mxu0
        %v4300 = vadd.f32 0.0, %v4299
        %4301 = vmatmul.bf16.gmra.mxu0 %v4233
        %v4302 = vpop.f32.mrf.mxu0
        %v4303 = vadd.f32 0.0, %v4302
        %v4304 = vpop.f32.mrf.mxu0
        %v4305 = vadd.f32 0.0, %v4304
        %4306 = vmatmul.bf16.gmra.mxu0 %v4236
        %v4307 = vpop.f32.mrf.mxu0
        %v4308 = vadd.f32 0.0, %v4307
        %v4309 = vpop.f32.mrf.mxu0
        %v4310 = vadd.f32 0.0, %v4309
        %4311 = vmatmul.bf16.gmra.mxu0 %v4239
        %v4312 = vpop.f32.mrf.mxu0
        %v4313 = vadd.f32 0.0, %v4312
        %v4314 = vpop.f32.mrf.mxu0
        %v4315 = vadd.f32 0.0, %v4314
        %4316 = vmatmul.bf16.gmra.mxu0 %v4242
        %v4317 = vpop.f32.mrf.mxu0
        %v4318 = vadd.f32 0.0, %v4317
        %v4319 = vpop.f32.mrf.mxu0
        %v4320 = vadd.f32 0.0, %v4319
        %4321 = vmatmul.bf16.gmra.mxu0 %v4245
        %v4322 = vpop.f32.mrf.mxu0
        %v4323 = vadd.f32 0.0, %v4322
        %v4324 = vpop.f32.mrf.mxu0
        %v4325 = vadd.f32 0.0, %v4324
        %4326 = vmatmul.bf16.gmra.mxu0 %v4248
        %v4327 = vpop.f32.mrf.mxu0
        %v4328 = vadd.f32 0.0, %v4327
        %v4329 = vpop.f32.mrf.mxu0
        %v4330 = vadd.f32 0.0, %v4329
        %4331 = vmatmul.bf16.gmra.mxu0 %v4251
        %v4332 = vpop.f32.mrf.mxu0
        %v4333 = vadd.f32 0.0, %v4332
        %v4334 = vpop.f32.mrf.mxu0
        %v4335 = vadd.f32 0.0, %v4334
        %4336 = vmatmul.bf16.gmra.mxu0 %v4254
        %v4337 = vpop.f32.mrf.mxu0
        %v4338 = vadd.f32 0.0, %v4337
        %v4339 = vpop.f32.mrf.mxu0
        %v4340 = vadd.f32 0.0, %v4339
        %4341 = vmatmul.bf16.gmra.mxu0 %v4257
        %v4342 = vpop.f32.mrf.mxu0
        %v4343 = vadd.f32 0.0, %v4342
        %v4344 = vpop.f32.mrf.mxu0
        %v4345 = vadd.f32 0.0, %v4344
        %4346 = vmatmul.bf16.gmra.mxu0 %v4260
        %v4347 = vpop.f32.mrf.mxu0
        %v4348 = vadd.f32 0.0, %v4347
        %v4349 = vpop.f32.mrf.mxu0
        %v4350 = vadd.f32 0.0, %v4349
        %4351 = vmatmul.bf16.gmra.mxu0 %v4263
        %v4352 = vpop.f32.mrf.mxu0
        %v4353 = vadd.f32 0.0, %v4352
        %v4354 = vpop.f32.mrf.mxu0
        %v4355 = vadd.f32 0.0, %v4354
        %4356 = vdwg.mxu0
        %v4357 = vadd.f32 %v3693, %v4278
        %v4358 = vadd.f32 %v3694, %v4280
        %v4359 = vadd.f32 %v3695, %v4283
        %v4360 = vadd.f32 %v3696, %v4285
        %v4361 = vadd.f32 %v3697, %v4288
        %v4362 = vadd.f32 %v3698, %v4290
        %v4363 = vadd.f32 %v3699, %v4293
        %v4364 = vadd.f32 %v3700, %v4295
        %v4365 = vadd.f32 %v3701, %v4298
        %v4366 = vadd.f32 %v3702, %v4300
        %v4367 = vadd.f32 %v3703, %v4303
        %v4368 = vadd.f32 %v3704, %v4305
        %v4369 = vadd.f32 %v3705, %v4308
        %v4370 = vadd.f32 %v3706, %v4310
        %v4371 = vadd.f32 %v3707, %v4313
        %v4372 = vadd.f32 %v3708, %v4315
        %v4373 = vadd.f32 %v3709, %v4318
        %v4374 = vadd.f32 %v3710, %v4320
        %v4375 = vadd.f32 %v3711, %v4323
        %v4376 = vadd.f32 %v3712, %v4325
        %v4377 = vadd.f32 %v3713, %v4328
        %v4378 = vadd.f32 %v3714, %v4330
        %v4379 = vadd.f32 %v3715, %v4333
        %v4380 = vadd.f32 %v3716, %v4335
        %v4381 = vadd.f32 %v3717, %v4338
        %v4382 = vadd.f32 %v3718, %v4340
        %v4383 = vadd.f32 %v3719, %v4343
        %v4384 = vadd.f32 %v3720, %v4345
        %v4385 = vadd.f32 %v3721, %v4348
        %v4386 = vadd.f32 %v3722, %v4350
        %v4387 = vadd.f32 %v3723, %v4353
        %v4388 = vadd.f32 %v3724, %v4355
        %v4389 = vld [vmem:[%s3435] sm:$0xe]
        %v4390 = vld [vmem:[%s3435 + $0xc] sm:$0xe]
        %v4391 = vld [vmem:[%s3435 + $0x18] sm:$0xe]
        %v4392 = vld [vmem:[%s3435 + $0x24] sm:$0xe]
        %v4393 = vld [vmem:[%s3435 + $0x30] sm:$0xe]
        %v4394 = vld [vmem:[%s3435 + $0x3c] sm:$0xe]
        %v4395 = vld [vmem:[%s3435 + $0x48] sm:$0xe]
        %v4396 = vld [vmem:[%s3435 + $0x54] sm:$0xe]
        %v4397 = vld [vmem:[%s3435 + $0x60] sm:$0xe]
        %v4398 = vld [vmem:[%s3435 + $0x6c] sm:$0xe]
        %v4399 = vld [vmem:[%s3435 + $0x78] sm:$0xe]
        %v4400 = vld [vmem:[%s3435 + $0x84] sm:$0xe]
        %v4401 = vld [vmem:[%s3435 + $0x90] sm:$0xe]
        %v4402 = vld [vmem:[%s3435 + $0x9c] sm:$0xe]
        %v4403 = vld [vmem:[%s3435 + $0xa8] sm:$0xe]
        %v4404 = vld [vmem:[%s3435 + $0xb4] sm:$0xe]
        %v4453 = vrot.slane %v4389, 5
        %v4454 = vrot.slane %v4453, 4
        %v4455 = vrot.slane %v3726, 5
        %v4456 = vsel %vm1731, %v4454, %v4455
        %v4457 = vrot.slane %v4455, 4
        %v4458 = vrot.slane %v3727, 5
        %v4459 = vsel %vm1731, %v4457, %v4458
        %v4460 = vrot.slane %v4390, 5
        %v4461 = vrot.slane %v4460, 4
        %v4462 = vrot.slane %v3729, 5
        %v4463 = vsel %vm1731, %v4461, %v4462
        %v4464 = vrot.slane %v4462, 4
        %v4465 = vrot.slane %v3730, 5
        %v4466 = vsel %vm1731, %v4464, %v4465
        %v4467 = vrot.slane %v4391, 5
        %v4468 = vrot.slane %v4467, 4
        %v4469 = vrot.slane %v3732, 5
        %v4470 = vsel %vm1731, %v4468, %v4469
        %v4471 = vrot.slane %v4469, 4
        %v4472 = vrot.slane %v3733, 5
        %v4473 = vsel %vm1731, %v4471, %v4472
        %v4474 = vrot.slane %v4392, 5
        %v4475 = vrot.slane %v4474, 4
        %v4476 = vrot.slane %v3735, 5
        %v4477 = vsel %vm1731, %v4475, %v4476
        %v4478 = vrot.slane %v4476, 4
        %v4479 = vrot.slane %v3736, 5
        %v4480 = vsel %vm1731, %v4478, %v4479
        %v4481 = vrot.slane %v4393, 5
        %v4482 = vrot.slane %v4481, 4
        %v4483 = vrot.slane %v3738, 5
        %v4484 = vsel %vm1731, %v4482, %v4483
        %v4485 = vrot.slane %v4483, 4
        %v4486 = vrot.slane %v3739, 5
        %v4487 = vsel %vm1731, %v4485, %v4486
        %v4488 = vrot.slane %v4394, 5
        %v4489 = vrot.slane %v4488, 4
        %v4490 = vrot.slane %v3741, 5
        %v4491 = vsel %vm1731, %v4489, %v4490
        %v4492 = vrot.slane %v4490, 4
        %v4493 = vrot.slane %v3742, 5
        %v4494 = vsel %vm1731, %v4492, %v4493
        %v4495 = vrot.slane %v4395, 5
        %v4496 = vrot.slane %v4495, 4
        %v4497 = vrot.slane %v3744, 5
        %v4498 = vsel %vm1731, %v4496, %v4497
        %v4499 = vrot.slane %v4497, 4
        %v4500 = vrot.slane %v3745, 5
        %v4501 = vsel %vm1731, %v4499, %v4500
        %v4502 = vrot.slane %v4396, 5
        %v4503 = vrot.slane %v4502, 4
        %v4504 = vrot.slane %v3747, 5
        %v4505 = vsel %vm1731, %v4503, %v4504
        %v4506 = vrot.slane %v4504, 4
        %v4507 = vrot.slane %v3748, 5
        %v4508 = vsel %vm1731, %v4506, %v4507
        %v4509 = vrot.slane %v4397, 5
        %v4510 = vrot.slane %v4509, 4
        %v4511 = vrot.slane %v3750, 5
        %v4512 = vsel %vm1731, %v4510, %v4511
        %v4513 = vrot.slane %v4511, 4
        %v4514 = vrot.slane %v3751, 5
        %v4515 = vsel %vm1731, %v4513, %v4514
        %v4516 = vrot.slane %v4398, 5
        %v4517 = vrot.slane %v4516, 4
        %v4518 = vrot.slane %v3753, 5
        %v4519 = vsel %vm1731, %v4517, %v4518
        %v4520 = vrot.slane %v4518, 4
        %v4521 = vrot.slane %v3754, 5
        %v4522 = vsel %vm1731, %v4520, %v4521
        %v4523 = vrot.slane %v4399, 5
        %v4524 = vrot.slane %v4523, 4
        %v4525 = vrot.slane %v3756, 5
        %v4526 = vsel %vm1731, %v4524, %v4525
        %v4527 = vrot.slane %v4525, 4
        %v4528 = vrot.slane %v3757, 5
        %v4529 = vsel %vm1731, %v4527, %v4528
        %v4530 = vrot.slane %v4400, 5
        %v4531 = vrot.slane %v4530, 4
        %v4532 = vrot.slane %v3759, 5
        %v4533 = vsel %vm1731, %v4531, %v4532
        %v4534 = vrot.slane %v4532, 4
        %v4535 = vrot.slane %v3760, 5
        %v4536 = vsel %vm1731, %v4534, %v4535
        %v4537 = vrot.slane %v4401, 5
        %v4538 = vrot.slane %v4537, 4
        %v4539 = vrot.slane %v3762, 5
        %v4540 = vsel %vm1731, %v4538, %v4539
        %v4541 = vrot.slane %v4539, 4
        %v4542 = vrot.slane %v3763, 5
        %v4543 = vsel %vm1731, %v4541, %v4542
        %v4544 = vrot.slane %v4402, 5
        %v4545 = vrot.slane %v4544, 4
        %v4546 = vrot.slane %v3765, 5
        %v4547 = vsel %vm1731, %v4545, %v4546
        %v4548 = vrot.slane %v4546, 4
        %v4549 = vrot.slane %v3766, 5
        %v4550 = vsel %vm1731, %v4548, %v4549
        %v4551 = vrot.slane %v4403, 5
        %v4552 = vrot.slane %v4551, 4
        %v4553 = vrot.slane %v3768, 5
        %v4554 = vsel %vm1731, %v4552, %v4553
        %v4555 = vrot.slane %v4553, 4
        %v4556 = vrot.slane %v3769, 5
        %v4557 = vsel %vm1731, %v4555, %v4556
        %v4558 = vrot.slane %v4404, 5
        %v4559 = vrot.slane %v4558, 4
        %v4560 = vrot.slane %v3771, 5
        %v4561 = vsel %vm1731, %v4559, %v4560
        %v4562 = vrot.slane %v4560, 4
        %v4563 = vrot.slane %v3772, 5
        %v4564 = vsel %vm1731, %v4562, %v4563
        %v4565 = vld [vmem:[%s249 + $0xc] sm:$0x3]
        %v4566 = vunpack.c.l.b16 %v4456
        %v4567 = vunpack.c.l.b16 %v4459
        %v4568 = vunpack.c.l.b16 %v4463
        %v4569 = vunpack.c.l.b16 %v4466
        %v4570 = vunpack.c.l.b16 %v4470
        %v4571 = vunpack.c.l.b16 %v4473
        %v4572 = vunpack.c.l.b16 %v4477
        %v4573 = vunpack.c.l.b16 %v4480
        %v4574 = vunpack.c.l.b16 %v4484
        %v4575 = vunpack.c.l.b16 %v4487
        %v4576 = vunpack.c.l.b16 %v4491
        %v4577 = vunpack.c.l.b16 %v4494
        %v4578 = vunpack.c.l.b16 %v4498
        %v4579 = vunpack.c.l.b16 %v4501
        %v4580 = vunpack.c.l.b16 %v4505
        %v4581 = vunpack.c.l.b16 %v4508
        %v4582 = vunpack.c.l.b16 %v4512
        %v4583 = vunpack.c.l.b16 %v4515
        %v4584 = vunpack.c.l.b16 %v4519
        %v4585 = vunpack.c.l.b16 %v4522
        %v4586 = vunpack.c.l.b16 %v4526
        %v4587 = vunpack.c.l.b16 %v4529
        %v4588 = vunpack.c.l.b16 %v4533
        %v4589 = vunpack.c.l.b16 %v4536
        %v4590 = vunpack.c.l.b16 %v4540
        %v4591 = vunpack.c.l.b16 %v4543
        %v4592 = vunpack.c.l.b16 %v4547
        %v4593 = vunpack.c.l.b16 %v4550
        %v4594 = vunpack.c.l.b16 %v4554
        %v4595 = vunpack.c.l.b16 %v4557
        %v4596 = vunpack.c.l.b16 %v4561
        %v4597 = vunpack.c.l.b16 %v4564
        %v4598 = vpack.c.b16 %v4567, %v4566
        %v4599 = vpack.c.b16 %v4569, %v4568
        %v4600 = vpack.c.b16 %v4571, %v4570
        %v4601 = vpack.c.b16 %v4573, %v4572
        %v4602 = vpack.c.b16 %v4575, %v4574
        %v4603 = vpack.c.b16 %v4577, %v4576
        %v4604 = vpack.c.b16 %v4579, %v4578
        %v4605 = vpack.c.b16 %v4581, %v4580
        %v4606 = vpack.c.b16 %v4583, %v4582
        %v4607 = vpack.c.b16 %v4585, %v4584
        %v4608 = vpack.c.b16 %v4587, %v4586
        %v4609 = vpack.c.b16 %v4589, %v4588
        %v4610 = vpack.c.b16 %v4591, %v4590
        %v4611 = vpack.c.b16 %v4593, %v4592
        %v4612 = vpack.c.b16 %v4595, %v4594
        %v4613 = vpack.c.b16 %v4597, %v4596
        %v4615 = vsel %vm1316, %v4598, 0
        %v4618 = vsel %vm1316, %v4599, 0
        %v4621 = vsel %vm1316, %v4600, 0
        %v4624 = vsel %vm1316, %v4601, 0
        %v4627 = vsel %vm1316, %v4602, 0
        %v4630 = vsel %vm1316, %v4603, 0
        %v4633 = vsel %vm1316, %v4604, 0
        %v4636 = vsel %vm1316, %v4605, 0
        %v4639 = vsel %vm1316, %v4606, 0
        %v4642 = vsel %vm1316, %v4607, 0
        %v4645 = vsel %vm1316, %v4608, 0
        %v4648 = vsel %vm1316, %v4609, 0
        %v4651 = vsel %vm1316, %v4610, 0
        %v4654 = vsel %vm1316, %v4611, 0
        %v4657 = vsel %vm1316, %v4612, 0
        %v4660 = vsel %vm1316, %v4613, 0
        %v4663 = vand.u32 %v4565, %v1368
        %4665 = vmatpush.bf16.msra.mxu0 0
        %4666 = vmatpush.bf16.msra.mxu0 0
        %4667 = vmatpush.bf16.msra.mxu0 0
        %4668 = vmatpush.bf16.msra.mxu0 0
        %4669 = vmatpush.bf16.msra.mxu0 0
        %4670 = vmatpush.bf16.msra.mxu0 0
        %4671 = vmatpush.bf16.msra.mxu0 0
        %4672 = vmatpush.bf16.msra.mxu0 %v4663
        %4673 = vmatmul.bf16.gmra.mxu0 %v4615
        %v4674 = vpop.f32.mrf.mxu0
        %v4675 = vadd.f32 0.0, %v4674
        %v4676 = vpop.f32.mrf.mxu0
        %v4677 = vadd.f32 0.0, %v4676
        %4678 = vmatmul.bf16.gmra.mxu0 %v4618
        %v4679 = vpop.f32.mrf.mxu0
        %v4680 = vadd.f32 0.0, %v4679
        %v4681 = vpop.f32.mrf.mxu0
        %v4682 = vadd.f32 0.0, %v4681
        %4683 = vmatmul.bf16.gmra.mxu0 %v4621
        %v4684 = vpop.f32.mrf.mxu0
        %v4685 = vadd.f32 0.0, %v4684
        %v4686 = vpop.f32.mrf.mxu0
        %v4687 = vadd.f32 0.0, %v4686
        %4688 = vmatmul.bf16.gmra.mxu0 %v4624
        %v4689 = vpop.f32.mrf.mxu0
        %v4690 = vadd.f32 0.0, %v4689
        %v4691 = vpop.f32.mrf.mxu0
        %v4692 = vadd.f32 0.0, %v4691
        %4693 = vmatmul.bf16.gmra.mxu0 %v4627
        %v4694 = vpop.f32.mrf.mxu0
        %v4695 = vadd.f32 0.0, %v4694
        %v4696 = vpop.f32.mrf.mxu0
        %v4697 = vadd.f32 0.0, %v4696
        %4698 = vmatmul.bf16.gmra.mxu0 %v4630
        %v4699 = vpop.f32.mrf.mxu0
        %v4700 = vadd.f32 0.0, %v4699
        %v4701 = vpop.f32.mrf.mxu0
        %v4702 = vadd.f32 0.0, %v4701
        %4703 = vmatmul.bf16.gmra.mxu0 %v4633
        %v4704 = vpop.f32.mrf.mxu0
        %v4705 = vadd.f32 0.0, %v4704
        %v4706 = vpop.f32.mrf.mxu0
        %v4707 = vadd.f32 0.0, %v4706
        %4708 = vmatmul.bf16.gmra.mxu0 %v4636
        %v4709 = vpop.f32.mrf.mxu0
        %v4710 = vadd.f32 0.0, %v4709
        %v4711 = vpop.f32.mrf.mxu0
        %v4712 = vadd.f32 0.0, %v4711
        %4713 = vmatmul.bf16.gmra.mxu0 %v4639
        %v4714 = vpop.f32.mrf.mxu0
        %v4715 = vadd.f32 0.0, %v4714
        %v4716 = vpop.f32.mrf.mxu0
        %v4717 = vadd.f32 0.0, %v4716
        %4718 = vmatmul.bf16.gmra.mxu0 %v4642
        %v4719 = vpop.f32.mrf.mxu0
        %v4720 = vadd.f32 0.0, %v4719
        %v4721 = vpop.f32.mrf.mxu0
        %v4722 = vadd.f32 0.0, %v4721
        %4723 = vmatmul.bf16.gmra.mxu0 %v4645
        %v4724 = vpop.f32.mrf.mxu0
        %v4725 = vadd.f32 0.0, %v4724
        %v4726 = vpop.f32.mrf.mxu0
        %v4727 = vadd.f32 0.0, %v4726
        %4728 = vmatmul.bf16.gmra.mxu0 %v4648
        %v4729 = vpop.f32.mrf.mxu0
        %v4730 = vadd.f32 0.0, %v4729
        %v4731 = vpop.f32.mrf.mxu0
        %v4732 = vadd.f32 0.0, %v4731
        %4733 = vmatmul.bf16.gmra.mxu0 %v4651
        %v4734 = vpop.f32.mrf.mxu0
        %v4735 = vadd.f32 0.0, %v4734
        %v4736 = vpop.f32.mrf.mxu0
        %v4737 = vadd.f32 0.0, %v4736
        %4738 = vmatmul.bf16.gmra.mxu0 %v4654
        %v4739 = vpop.f32.mrf.mxu0
        %v4740 = vadd.f32 0.0, %v4739
        %v4741 = vpop.f32.mrf.mxu0
        %v4742 = vadd.f32 0.0, %v4741
        %4743 = vmatmul.bf16.gmra.mxu0 %v4657
        %v4744 = vpop.f32.mrf.mxu0
        %v4745 = vadd.f32 0.0, %v4744
        %v4746 = vpop.f32.mrf.mxu0
        %v4747 = vadd.f32 0.0, %v4746
        %4748 = vmatmul.bf16.gmra.mxu0 %v4660
        %v4749 = vpop.f32.mrf.mxu0
        %v4750 = vadd.f32 0.0, %v4749
        %v4751 = vpop.f32.mrf.mxu0
        %v4752 = vadd.f32 0.0, %v4751
        %4753 = vdwg.mxu0
        %v4754 = vadd.f32 %v4357, %v4675
        %v4755 = vadd.f32 %v4358, %v4677
        %v4756 = vadd.f32 %v4359, %v4680
        %v4757 = vadd.f32 %v4360, %v4682
        %v4758 = vadd.f32 %v4361, %v4685
        %v4759 = vadd.f32 %v4362, %v4687
        %v4760 = vadd.f32 %v4363, %v4690
        %v4761 = vadd.f32 %v4364, %v4692
        %v4762 = vadd.f32 %v4365, %v4695
        %v4763 = vadd.f32 %v4366, %v4697
        %v4764 = vadd.f32 %v4367, %v4700
        %v4765 = vadd.f32 %v4368, %v4702
        %v4766 = vadd.f32 %v4369, %v4705
        %v4767 = vadd.f32 %v4370, %v4707
        %v4768 = vadd.f32 %v4371, %v4710
        %v4769 = vadd.f32 %v4372, %v4712
        %v4770 = vadd.f32 %v4373, %v4715
        %v4771 = vadd.f32 %v4374, %v4717
        %v4772 = vadd.f32 %v4375, %v4720
        %v4773 = vadd.f32 %v4376, %v4722
        %v4774 = vadd.f32 %v4377, %v4725
        %v4775 = vadd.f32 %v4378, %v4727
        %v4776 = vadd.f32 %v4379, %v4730
        %v4777 = vadd.f32 %v4380, %v4732
        %v4778 = vadd.f32 %v4381, %v4735
        %v4779 = vadd.f32 %v4382, %v4737
        %v4780 = vadd.f32 %v4383, %v4740
        %v4781 = vadd.f32 %v4384, %v4742
        %v4782 = vadd.f32 %v4385, %v4745
        %v4783 = vadd.f32 %v4386, %v4747
        %v4784 = vadd.f32 %v4387, %v4750
        %v4785 = vadd.f32 %v4388, %v4752
        %vm4786 = vcmask 64512
        %4787 = vst.msk [vmem:[%s257] sm:$0xff] %vm4786, %v4754
        %4788 = vst.msk [vmem:[%s257 + $0x8] sm:$0xff] %vm4786, %v4755
        %4789 = vst.msk [vmem:[%s257 + $0x10] sm:$0xff] %vm4786, %v4756
        %4790 = vst.msk [vmem:[%s257 + $0x18] sm:$0xff] %vm4786, %v4757
        %4791 = vst.msk [vmem:[%s257 + $0x20] sm:$0xff] %vm4786, %v4758
        %4792 = vst.msk [vmem:[%s257 + $0x28] sm:$0xff] %vm4786, %v4759
        %4793 = vst.msk [vmem:[%s257 + $0x30] sm:$0xff] %vm4786, %v4760
        %4794 = vst.msk [vmem:[%s257 + $0x38] sm:$0xff] %vm4786, %v4761
        %4795 = vst.msk [vmem:[%s257 + $0x40] sm:$0xff] %vm4786, %v4762
        %4796 = vst.msk [vmem:[%s257 + $0x48] sm:$0xff] %vm4786, %v4763
        %4797 = vst.msk [vmem:[%s257 + $0x50] sm:$0xff] %vm4786, %v4764
        %4798 = vst.msk [vmem:[%s257 + $0x58] sm:$0xff] %vm4786, %v4765
        %4799 = vst.msk [vmem:[%s257 + $0x60] sm:$0xff] %vm4786, %v4766
        %4800 = vst.msk [vmem:[%s257 + $0x68] sm:$0xff] %vm4786, %v4767
        %4801 = vst.msk [vmem:[%s257 + $0x70] sm:$0xff] %vm4786, %v4768
        %4802 = vst.msk [vmem:[%s257 + $0x78] sm:$0xff] %vm4786, %v4769
        %4803 = vst.msk [vmem:[%s257 + $0x80] sm:$0xff] %vm4786, %v4770
        %4804 = vst.msk [vmem:[%s257 + $0x88] sm:$0xff] %vm4786, %v4771
        %4805 = vst.msk [vmem:[%s257 + $0x90] sm:$0xff] %vm4786, %v4772
        %4806 = vst.msk [vmem:[%s257 + $0x98] sm:$0xff] %vm4786, %v4773
        %4807 = vst.msk [vmem:[%s257 + $0xa0] sm:$0xff] %vm4786, %v4774
        %4808 = vst.msk [vmem:[%s257 + $0xa8] sm:$0xff] %vm4786, %v4775
        %4809 = vst.msk [vmem:[%s257 + $0xb0] sm:$0xff] %vm4786, %v4776
        %4810 = vst.msk [vmem:[%s257 + $0xb8] sm:$0xff] %vm4786, %v4777
        %4811 = vst.msk [vmem:[%s257 + $0xc0] sm:$0xff] %vm4786, %v4778
        %4812 = vst.msk [vmem:[%s257 + $0xc8] sm:$0xff] %vm4786, %v4779
        %4813 = vst.msk [vmem:[%s257 + $0xd0] sm:$0xff] %vm4786, %v4780
        %4814 = vst.msk [vmem:[%s257 + $0xd8] sm:$0xff] %vm4786, %v4781
        %4815 = vst.msk [vmem:[%s257 + $0xe0] sm:$0xff] %vm4786, %v4782
        %4816 = vst.msk [vmem:[%s257 + $0xe8] sm:$0xff] %vm4786, %v4783
        %4817 = vst.msk [vmem:[%s257 + $0xf0] sm:$0xff] %vm4786, %v4784
        %4818 = vst.msk [vmem:[%s257 + $0xf8] sm:$0xff] %vm4786, %v4785
        %v4819 = vsel %vm4786, %v4754, 0.0
        %v4820 = vsel %vm4786, %v4755, 0.0
        %v4821 = vadd.f32 %v4819, %v4820
        %v4822 = vsel %vm4786, %v4756, 0.0
        %v4823 = vadd.f32 %v4821, %v4822
        %v4824 = vsel %vm4786, %v4757, 0.0
        %v4825 = vadd.f32 %v4823, %v4824
        %v4826 = vsel %vm4786, %v4758, 0.0
        %v4827 = vadd.f32 %v4825, %v4826
        %v4828 = vsel %vm4786, %v4759, 0.0
        %v4829 = vadd.f32 %v4827, %v4828
        %v4830 = vsel %vm4786, %v4760, 0.0
        %v4831 = vadd.f32 %v4829, %v4830
        %v4832 = vsel %vm4786, %v4761, 0.0
        %v4833 = vadd.f32 %v4831, %v4832
        %v4834 = vsel %vm4786, %v4762, 0.0
        %v4835 = vadd.f32 %v4833, %v4834
        %v4836 = vsel %vm4786, %v4763, 0.0
        %v4837 = vadd.f32 %v4835, %v4836
        %v4838 = vsel %vm4786, %v4764, 0.0
        %v4839 = vadd.f32 %v4837, %v4838
        %v4840 = vsel %vm4786, %v4765, 0.0
        %v4841 = vadd.f32 %v4839, %v4840
        %v4842 = vsel %vm4786, %v4766, 0.0
        %v4843 = vadd.f32 %v4841, %v4842
        %v4844 = vsel %vm4786, %v4767, 0.0
        %v4845 = vadd.f32 %v4843, %v4844
        %v4846 = vsel %vm4786, %v4768, 0.0
        %v4847 = vadd.f32 %v4845, %v4846
        %v4848 = vsel %vm4786, %v4769, 0.0
        %v4849 = vadd.f32 %v4847, %v4848
        %v4850 = vsel %vm4786, %v4770, 0.0
        %v4851 = vadd.f32 %v4849, %v4850
        %v4852 = vsel %vm4786, %v4771, 0.0
        %v4853 = vadd.f32 %v4851, %v4852
        %v4854 = vsel %vm4786, %v4772, 0.0
        %v4855 = vadd.f32 %v4853, %v4854
        %v4856 = vsel %vm4786, %v4773, 0.0
        %v4857 = vadd.f32 %v4855, %v4856
        %v4858 = vsel %vm4786, %v4774, 0.0
        %v4859 = vadd.f32 %v4857, %v4858
        %v4860 = vsel %vm4786, %v4775, 0.0
        %v4861 = vadd.f32 %v4859, %v4860
        %v4862 = vsel %vm4786, %v4776, 0.0
        %v4863 = vadd.f32 %v4861, %v4862
        %v4864 = vsel %vm4786, %v4777, 0.0
        %v4865 = vadd.f32 %v4863, %v4864
        %v4866 = vsel %vm4786, %v4778, 0.0
        %v4867 = vadd.f32 %v4865, %v4866
        %v4868 = vsel %vm4786, %v4779, 0.0
        %v4869 = vadd.f32 %v4867, %v4868
        %v4870 = vsel %vm4786, %v4780, 0.0
        %v4871 = vadd.f32 %v4869, %v4870
        %v4872 = vsel %vm4786, %v4781, 0.0
        %v4873 = vadd.f32 %v4871, %v4872
        %v4874 = vsel %vm4786, %v4782, 0.0
        %v4875 = vadd.f32 %v4873, %v4874
        %v4876 = vsel %vm4786, %v4783, 0.0
        %v4877 = vadd.f32 %v4875, %v4876
        %v4878 = vsel %vm4786, %v4784, 0.0
        %v4879 = vadd.f32 %v4877, %v4878
        %v4880 = vsel %vm4786, %v4785, 0.0
        %v4881 = vadd.f32 %v4879, %v4880
        %v4882 = vrot.slane %v4881, 4
        %v4883 = vadd.f32 %v4881, %v4882
        %v4884 = vrot.slane %v4883, 2
        %v4885 = vadd.f32 %v4883, %v4884
        %v4886 = vrot.slane %v4885, 1
        %v4887 = vadd.f32 %v4885, %v4886
        %vm4888 = vcmask 57344
        %4889 = vst.msk [vmem:[%s234] sm:$0x1] %vm4888, %v4887
        %v4890 = vmul.f32 %v4754, %v4754
        %v4891 = vmul.f32 %v4755, %v4755
        %v4892 = vmul.f32 %v4756, %v4756
        %v4893 = vmul.f32 %v4757, %v4757
        %v4894 = vmul.f32 %v4758, %v4758
        %v4895 = vmul.f32 %v4759, %v4759
        %v4896 = vmul.f32 %v4760, %v4760
        %v4897 = vmul.f32 %v4761, %v4761
        %v4898 = vmul.f32 %v4762, %v4762
        %v4899 = vmul.f32 %v4763, %v4763
        %v4900 = vmul.f32 %v4764, %v4764
        %v4901 = vmul.f32 %v4765, %v4765
        %v4902 = vmul.f32 %v4766, %v4766
        %v4903 = vmul.f32 %v4767, %v4767
        %v4904 = vmul.f32 %v4768, %v4768
        %v4905 = vmul.f32 %v4769, %v4769
        %v4906 = vmul.f32 %v4770, %v4770
        %v4907 = vmul.f32 %v4771, %v4771
        %v4908 = vmul.f32 %v4772, %v4772
        %v4909 = vmul.f32 %v4773, %v4773
        %v4910 = vmul.f32 %v4774, %v4774
        %v4911 = vmul.f32 %v4775, %v4775
        %v4912 = vmul.f32 %v4776, %v4776
        %v4913 = vmul.f32 %v4777, %v4777
        %v4914 = vmul.f32 %v4778, %v4778
        %v4915 = vmul.f32 %v4779, %v4779
        %v4916 = vmul.f32 %v4780, %v4780
        %v4917 = vmul.f32 %v4781, %v4781
        %v4918 = vmul.f32 %v4782, %v4782
        %v4919 = vmul.f32 %v4783, %v4783
        %v4920 = vmul.f32 %v4784, %v4784
        %v4921 = vmul.f32 %v4785, %v4785
        %v4922 = vsel %vm4786, %v4890, 0.0
        %v4923 = vsel %vm4786, %v4891, 0.0
        %v4924 = vadd.f32 %v4922, %v4923
        %v4925 = vsel %vm4786, %v4892, 0.0
        %v4926 = vadd.f32 %v4924, %v4925
        %v4927 = vsel %vm4786, %v4893, 0.0
        %v4928 = vadd.f32 %v4926, %v4927
        %v4929 = vsel %vm4786, %v4894, 0.0
        %v4930 = vadd.f32 %v4928, %v4929
        %v4931 = vsel %vm4786, %v4895, 0.0
        %v4932 = vadd.f32 %v4930, %v4931
        %v4933 = vsel %vm4786, %v4896, 0.0
        %v4934 = vadd.f32 %v4932, %v4933
        %v4935 = vsel %vm4786, %v4897, 0.0
        %v4936 = vadd.f32 %v4934, %v4935
        %v4937 = vsel %vm4786, %v4898, 0.0
        %v4938 = vadd.f32 %v4936, %v4937
        %v4939 = vsel %vm4786, %v4899, 0.0
        %v4940 = vadd.f32 %v4938, %v4939
        %v4941 = vsel %vm4786, %v4900, 0.0
        %v4942 = vadd.f32 %v4940, %v4941
        %v4943 = vsel %vm4786, %v4901, 0.0
        %v4944 = vadd.f32 %v4942, %v4943
        %v4945 = vsel %vm4786, %v4902, 0.0
        %v4946 = vadd.f32 %v4944, %v4945
        %v4947 = vsel %vm4786, %v4903, 0.0
        %v4948 = vadd.f32 %v4946, %v4947
        %v4949 = vsel %vm4786, %v4904, 0.0
        %v4950 = vadd.f32 %v4948, %v4949
        %v4951 = vsel %vm4786, %v4905, 0.0
        %v4952 = vadd.f32 %v4950, %v4951
        %v4953 = vsel %vm4786, %v4906, 0.0
        %v4954 = vadd.f32 %v4952, %v4953
        %v4955 = vsel %vm4786, %v4907, 0.0
        %v4956 = vadd.f32 %v4954, %v4955
        %v4957 = vsel %vm4786, %v4908, 0.0
        %v4958 = vadd.f32 %v4956, %v4957
        %v4959 = vsel %vm4786, %v4909, 0.0
        %v4960 = vadd.f32 %v4958, %v4959
        %v4961 = vsel %vm4786, %v4910, 0.0
        %v4962 = vadd.f32 %v4960, %v4961
        %v4963 = vsel %vm4786, %v4911, 0.0
        %v4964 = vadd.f32 %v4962, %v4963
        %v4965 = vsel %vm4786, %v4912, 0.0
        %v4966 = vadd.f32 %v4964, %v4965
        %v4967 = vsel %vm4786, %v4913, 0.0
        %v4968 = vadd.f32 %v4966, %v4967
        %v4969 = vsel %vm4786, %v4914, 0.0
        %v4970 = vadd.f32 %v4968, %v4969
        %v4971 = vsel %vm4786, %v4915, 0.0
        %v4972 = vadd.f32 %v4970, %v4971
        %v4973 = vsel %vm4786, %v4916, 0.0
        %v4974 = vadd.f32 %v4972, %v4973
        %v4975 = vsel %vm4786, %v4917, 0.0
        %v4976 = vadd.f32 %v4974, %v4975
        %v4977 = vsel %vm4786, %v4918, 0.0
        %v4978 = vadd.f32 %v4976, %v4977
        %v4979 = vsel %vm4786, %v4919, 0.0
        %v4980 = vadd.f32 %v4978, %v4979
        %v4981 = vsel %vm4786, %v4920, 0.0
        %v4982 = vadd.f32 %v4980, %v4981
        %v4983 = vsel %vm4786, %v4921, 0.0
        %v4984 = vadd.f32 %v4982, %v4983
        %v4985 = vrot.slane %v4984, 4
        %v4986 = vadd.f32 %v4984, %v4985
        %v4987 = vrot.slane %v4986, 2
        %v4988 = vadd.f32 %v4986, %v4987
        %v4989 = vrot.slane %v4988, 1
        %v4990 = vadd.f32 %v4988, %v4989
        %4991 = vst.msk [vmem:[%s240] sm:$0x1] %vm4888, %v4990
        %p4992 = scmp.lt.s32.totalorder %s27, 1
        %s4993 = scalar_select %p4992, %s27, 1
        %p4994 = scmp.lt.s32.totalorder %s26, 0
        %s4995 = scalar_select %p4994, %s26, 0
        %s4996 = smul.addr %s4993, 32
        %s4997 = sadd.s32 %s4995, %s4996
        %s4998 = smul.addr %s4997, 8
        %s4999 = scalar_lea.vmem %s2, %s4998
        %s5000 = sand.u32 %s124, 1
        %s5001 = scalar_lea.sflag [#allocation4], %s5000
        %s5002 = sand.u32 %s124, 1
        %s5003 = scalar_lea.vmem [#allocation3], %s5002
        %s5004 = sand.u32 %s152, 1
        %s5005 = scalar_lea.sflag [#allocation6], %s5004
        %s5006 = sand.u32 %s152, 1
        %s5007 = scalar_lea.vmem [#allocation5], %s5006
        // Predicated region
        $region29: #{tpu_custom_call.1} parent=27 // pred_check
          %p5008 = pneg %p106
        $region30: #{tpu_custom_call.1} parent=27 // pred_check_branch
          %5010 = sbr.rel (%p5008) target = $region32
        $region31: #{tpu_custom_call.1} parent=27 // pred_region
          _
        $region32: #{tpu_custom_call.1} parent=27 // pred_fallthru
          _
        // Predicated region
        $region33: #{tpu_custom_call.1} parent=27 // pred_check
          %p5011 = pneg %p134
        $region34: #{tpu_custom_call.1} parent=27 // pred_check_branch
          %5013 = sbr.rel (%p5011) target = $region36
        $region35: #{tpu_custom_call.1} parent=27 // pred_region
          %5015 = vsyncadd %s5001, 0
          %s5016 = sadd.s32 %s26, %s27
          %s5017 = scalar_lea.hbm %s3, %s5016
          %s5019 = sshll.u32 %s5003, 4
          %s5020 = int_to_ptr.vmem [resolvable:$true] %s5019
          %s5021 = sshll.u32 %s5017, 4
          %s5022 = int_to_ptr.hbm [resolvable:$true] %s5021
          %5024 = dma.vmem_to_hbm [thread:$0]  %s5020, 16, %s5022, %s5001
        $region36: #{tpu_custom_call.1} parent=27 // pred_fallthru
          _
        // Predicated region
        $region37: #{tpu_custom_call.1} parent=27 // pred_check
          %p5025 = pneg %p162
        $region38: #{tpu_custom_call.1} parent=27 // pred_check_branch
          %5027 = sbr.rel (%p5025) target = $region40
        $region39: #{tpu_custom_call.1} parent=27 // pred_region
          %5029 = vsyncadd %s5005, 0
          %s5030 = sadd.s32 %s26, %s27
          %s5031 = scalar_lea.hbm %s4, %s5030
          %s5033 = sshll.u32 %s5007, 4
          %s5034 = int_to_ptr.vmem [resolvable:$true] %s5033
          %s5035 = sshll.u32 %s5031, 4
          %s5036 = int_to_ptr.hbm [resolvable:$true] %s5035
          %5038 = dma.vmem_to_hbm [thread:$0]  %s5034, 16, %s5036, %s5005
        $region40: #{tpu_custom_call.1} parent=27 // pred_fallthru
          _
      $region28: #{tpu_custom_call.1} parent=5 // pred_fallthru
        _
      %p5039 = scmp.le.s32.totalorder 2, %s17
      // Predicated region
      $region41: #{tpu_custom_call.1} parent=5 // pred_check
        %p5040 = pneg %p5039
      $region42: #{tpu_custom_call.1} parent=5 // pred_check_branch
        %5042 = sbr.rel (%p5040) target = $region44
      $region43: #{tpu_custom_call.1} parent=5 // pred_region
        %s5043 = ssub.s32 %s17, 2
        // Predicated region
        $region45: #{tpu_custom_call.1} parent=43 // pred_check
          %p5044 = pneg %p112
        $region46: #{tpu_custom_call.1} parent=43 // pred_check_branch
          %5046 = sbr.rel (%p5044) target = $region48
        $region47: #{tpu_custom_call.1} parent=43 // pred_region
          %p5047 = scmp.lt.s32.totalorder %s29, 1
          %s5048 = scalar_select %p5047, %s29, 1
          %p5049 = scmp.lt.s32.totalorder %s28, 0
          %s5050 = scalar_select %p5049, %s28, 0
          %s5051 = smul.addr %s5048, 32
          %s5052 = sadd.s32 %s5050, %s5051
          %s5053 = smul.addr %s5052, 8
          %s5054 = scalar_lea.vmem %s2, %s5053
        $region48: #{tpu_custom_call.1} parent=43 // pred_fallthru
          _
        // Predicated region
        $region49: #{tpu_custom_call.1} parent=43 // pred_check
          %p5055 = pneg %p140
        $region50: #{tpu_custom_call.1} parent=43 // pred_check_branch
          %5057 = sbr.rel (%p5055) target = $region52
        $region51: #{tpu_custom_call.1} parent=43 // pred_region
          %s5058 = sand.u32 %s125, 1
          %s5059 = scalar_lea.sflag [#allocation4], %s5058
          %s5060 = sand.u32 %s125, 1
          %s5061 = scalar_lea.vmem [#allocation3], %s5060
          %5063 = dma.done %s5059, 16
        $region52: #{tpu_custom_call.1} parent=43 // pred_fallthru
          _
        // Predicated region
        $region53: #{tpu_custom_call.1} parent=43 // pred_check
          %p5064 = pneg %p168
        $region54: #{tpu_custom_call.1} parent=43 // pred_check_branch
          %5066 = sbr.rel (%p5064) target = $region56
        $region55: #{tpu_custom_call.1} parent=43 // pred_region
          %s5067 = sand.u32 %s153, 1
          %s5068 = scalar_lea.sflag [#allocation6], %s5067
          %s5069 = sand.u32 %s153, 1
          %s5070 = scalar_lea.vmem [#allocation5], %s5069
          %5072 = dma.done %s5068, 16
        $region56: #{tpu_custom_call.1} parent=43 // pred_fallthru
          _
      $region44: #{tpu_custom_call.1} parent=5 // pred_fallthru
        _
    $region6: #{tpu_custom_call.1} parent=1 // loop_footer
      %s21 = sadd.s32 1, %s17
    $region7: #{tpu_custom_call.1} parent=1 // loop_footer_branch
      %16 = sbr.rel target = $region3
    $region8: #{tpu_custom_call.1} parent=1 // loop_exit
      _
    %5073 = vsyncpa [#allocation4], 1
    %s5074 = scalar_lea.sflag [#allocation4], 1
    %5075 = vsyncpa %s5074, 1
    %5076 = vsyncpa [#allocation6], 1
    %s5077 = scalar_lea.sflag [#allocation6], 1
    %5078 = vsyncpa %s5077, 1

</llo_original>
